<compile_context>
chip_gen: v7x
topology: tpu7x:2x2x1
jax: 0.10.0
libtpu: 0.0.40
codegen_flags: <defaults>
</compile_context>

<pallas_src>
import functools

import jax
import jax.numpy as jnp
from jax.experimental import pallas as pl
from jax.experimental.pallas import tpu as pltpu

NEG_SLOPE = 0.01   # nn.LeakyReLU default
BN_EPS = 1e-5      # nn.BatchNorm2d default


def _conv3x3_vpu(x_full, masks, w_ref, b_ref, *, C, B, H, W):
    """3x3 'same' conv (PyTorch cross-correlation) on a lane-dense (C*B, H*W) slab.

    x_full : (C*B, H*W) f32 value, row index = c*B + b
    masks  : (9, H*W)   f32 value, 1.0 where tap (dh,dw) reads inside the image
    w_ref  : SMEM (9*C*C,) f32, layout [((kh*3+kw)*C + ci)*C + co]
    b_ref  : SMEM (C,) f32
    returns: list of C lane-dense (B, H*W) slabs (one per output channel)
    """
    HW = H * W
    acc = [jnp.zeros((B, HW), jnp.float32) for _ in range(C)]
    t = 0
    for dh in (-1, 0, 1):
        for dw in (-1, 0, 1):
            delta = dh * W + dw                      # flattened read offset for this tap
            shift = (-delta) % HW                    # rolled[p] = x[p + delta]
            rolled = x_full if shift == 0 else pltpu.roll(x_full, shift, 1)
            tap = rolled * masks[t:t + 1, :]         # zero reads from the padded border
            for ci in range(C):
                src = tap[ci * B:(ci + 1) * B, :]    # (B, H*W) lane-dense slab
                for co in range(C):
                    w = w_ref[(t * C + ci) * C + co]  # scalar weight from SMEM
                    acc[co] = acc[co] + w * src
            t += 1
    return [acc[co] + b_ref[co] for co in range(C)]


def _rsam_inception_kernel(x_ref, mask_ref, w1_ref, b1_ref, gamma_ref, beta_ref,
                           w2_ref, b2_ref, w3_ref, b3_ref, out_ref, z_ref,
                           *, C, B, H, W):
    HW = H * W
    x = x_ref[...]            # (C*B, HW)  -- fully dense vregs
    masks = mask_ref[...]     # (9, HW)

    # ---------------- conv1: 3x3, stride 1, pad 1 ----------------
    y1 = _conv3x3_vpu(x, masks, w1_ref, b1_ref, C=C, B=B, H=H, W=W)

    # ------- BatchNorm2d (batch statistics, biased variance) + LeakyReLU -------
    inv_n = 1.0 / float(B * HW)
    for c in range(C):
        s = y1[c]
        mean = jnp.sum(s) * inv_n
        var = jnp.sum((s - mean) ** 2) * inv_n
        zc = (s - mean) * (jax.lax.rsqrt(var + BN_EPS) * gamma_ref[c]) + beta_ref[c]
        zc = jnp.where(zc >= 0, zc, NEG_SLOPE * zc)          # LeakyReLU(0.01)
        z_ref[c * B:(c + 1) * B, :] = zc                     # ref-backed intermediate

    # ---------------- conv2: 3x3, stride 1, pad 1 ----------------
    y2 = _conv3x3_vpu(z_ref[...], masks, w2_ref, b2_ref, C=C, B=B, H=H, W=W)

    # ---- RSAM attention: 1x1 conv = channel reduction -> sigmoid -> broadcast ----
    att_logit = jnp.zeros((B, HW), jnp.float32) + b3_ref[0]
    for c in range(C):
        att_logit = att_logit + w3_ref[c] * y2[c]
    att = jax.nn.sigmoid(att_logit)                          # logistic on the EUP

    # ---------------- residual add; lane-dense stores ----------------
    for c in range(C):
        out_ref[c * B:(c + 1) * B, :] = x[c * B:(c + 1) * B, :] + y2[c] * att


def rsam_inception_pallas(x_nchw, params):
    B, C, H, W = x_nchw.shape
    HW = H * W

    # NCHW -> (C*B, H*W): channel-major rows, flattened spatial on the lane axis.
    x2d = jnp.transpose(x_nchw, (1, 0, 2, 3)).reshape(C * B, HW).astype(jnp.float32)

    # Per-tap validity masks (1.0 where the shifted read stays inside the image).
    hh, ww = jnp.meshgrid(jnp.arange(H), jnp.arange(W), indexing="ij")
    h_idx = hh.reshape(-1)
    w_idx = ww.reshape(-1)
    mask_rows = []
    for dh in (-1, 0, 1):
        for dw in (-1, 0, 1):
            valid = ((h_idx + dh >= 0) & (h_idx + dh < H) &
                     (w_idx + dw >= 0) & (w_idx + dw < W))
            mask_rows.append(valid.astype(jnp.float32))
    masks = jnp.stack(mask_rows, axis=0)                     # (9, HW)

    # Conv weights: OIHW -> (kh, kw, ci, co), flattened for SMEM scalar reads.
    w1 = jnp.transpose(params["w1"], (2, 3, 1, 0)).reshape(-1).astype(jnp.float32)
    w2 = jnp.transpose(params["w2"], (2, 3, 1, 0)).reshape(-1).astype(jnp.float32)
    w3 = params["w3"].reshape(C).astype(jnp.float32)         # (1,C,1,1) -> (C,)
    b1 = params["b1"].reshape(C).astype(jnp.float32)
    b2 = params["b2"].reshape(C).astype(jnp.float32)
    b3 = params["b3"].reshape(1).astype(jnp.float32)
    gamma = params["gamma"].reshape(C).astype(jnp.float32)
    beta = params["beta"].reshape(C).astype(jnp.float32)

    vmem = pl.BlockSpec(memory_space=pltpu.MemorySpace.VMEM)
    smem = pl.BlockSpec(memory_space=pltpu.MemorySpace.SMEM)

    kernel = functools.partial(_rsam_inception_kernel, C=C, B=B, H=H, W=W)
    out2d = pl.pallas_call(
        kernel,
        out_shape=jax.ShapeDtypeStruct((C * B, HW), jnp.float32),
        in_specs=[vmem, vmem] + [smem] * 8,
        out_specs=vmem,
        scratch_shapes=[pltpu.VMEM((C * B, HW), jnp.float32)],
    )(x2d, masks, w1, b1, gamma, beta, w2, b2, w3, b3)

    return jnp.transpose(out2d.reshape(C, B, H, W), (1, 0, 2, 3))   # -> NCHW


def rsam_inception_reference(x, params):
    """Pure-JAX reference (NCHW, mirrors the PyTorch forward)."""
    def conv3x3(inp, w, b):
        o = jax.lax.conv_general_dilated(
            inp, w, window_strides=(1, 1), padding=((1, 1), (1, 1)),
            dimension_numbers=("NCHW", "OIHW", "NCHW"))
        return o + b.reshape(1, -1, 1, 1)

    y = conv3x3(x, params["w1"], params["b1"])
    mean = jnp.mean(y, axis=(0, 2, 3), keepdims=True)
    var = jnp.mean((y - mean) ** 2, axis=(0, 2, 3), keepdims=True)
    y = (y - mean) / jnp.sqrt(var + BN_EPS) * params["gamma"].reshape(1, -1, 1, 1) \
        + params["beta"].reshape(1, -1, 1, 1)
    y = jnp.where(y >= 0, y, NEG_SLOPE * y)
    y2 = conv3x3(y, params["w2"], params["b2"])
    att_logit = jax.lax.conv_general_dilated(
        y2, params["w3"], (1, 1), ((0, 0), (0, 0)),
        dimension_numbers=("NCHW", "OIHW", "NCHW")) + params["b3"].reshape(1, 1, 1, 1)
    att = jax.nn.sigmoid(att_logit)
    return x + y2 * att


if __name__ == "__main__":
    B, C, H, W = 2, 4, 16, 16
    key = jax.random.PRNGKey(0)
    ks = jax.random.split(key, 9)

    params = {
        "w1":    0.2 * jax.random.normal(ks[0], (C, C, 3, 3), jnp.float32),
        "b1":    0.1 * jax.random.normal(ks[1], (C,), jnp.float32),
        "gamma": 1.0 + 0.1 * jax.random.normal(ks[2], (C,), jnp.float32),
        "beta":  0.1 * jax.random.normal(ks[3], (C,), jnp.float32),
        "w2":    0.2 * jax.random.normal(ks[4], (C, C, 3, 3), jnp.float32),
        "b2":    0.1 * jax.random.normal(ks[5], (C,), jnp.float32),
        "w3":    0.2 * jax.random.normal(ks[6], (1, C, 1, 1), jnp.float32),
        "b3":    0.1 * jax.random.normal(ks[7], (1,), jnp.float32),
    }
    x = jax.random.normal(ks[8], (B, C, H, W), jnp.float32)

    out = jax.block_until_ready(rsam_inception_pallas(x, params))
    ref = jax.block_until_ready(rsam_inception_reference(x, params))

    assert out.shape == (B, C, H, W)
    assert bool(jnp.all(jnp.isfinite(out)))
    assert bool(jnp.allclose(out, ref, rtol=2e-4, atol=2e-4)), \
        f"max abs err = {float(jnp.max(jnp.abs(out - ref)))}"

    print("KERNEL_OK")
</pallas_src>

<mosaic_0001>
module attributes {stable_mosaic.version = 11 : i64} {
  func.func @_rsam_inception_kernel(%arg0: memref<8x256xf32, #tpu.memory_space<vmem>>, %arg1: memref<9x256xf32, #tpu.memory_space<vmem>>, %arg2: memref<144xf32, #tpu.memory_space<smem>>, %arg3: memref<4xf32, #tpu.memory_space<smem>>, %arg4: memref<4xf32, #tpu.memory_space<smem>>, %arg5: memref<4xf32, #tpu.memory_space<smem>>, %arg6: memref<144xf32, #tpu.memory_space<smem>>, %arg7: memref<4xf32, #tpu.memory_space<smem>>, %arg8: memref<4xf32, #tpu.memory_space<smem>>, %arg9: memref<1xf32, #tpu.memory_space<smem>>, %arg10: memref<8x256xf32, #tpu.memory_space<vmem>>, %arg11: memref<8x256xf32, #tpu.memory_space<vmem>>) attributes {dimension_semantics = [], scalar_prefetch = 0 : i64, scratch_operands = 1 : i64, tpu.core_type = #tpu.core_type<tc>} {
    %c0 = arith.constant 0 : index
    %c0_0 = arith.constant 0 : index
    %0 = vector.load %arg0[%c0, %c0_0] : memref<8x256xf32, #tpu.memory_space<vmem>>, vector<8x256xf32>
    %c0_1 = arith.constant 0 : index
    %c0_2 = arith.constant 0 : index
    %1 = vector.load %arg1[%c0_1, %c0_2] : memref<9x256xf32, #tpu.memory_space<vmem>>, vector<9x256xf32>
    %cst = arith.constant 0.000000e+00 : f32
    %2 = vector.broadcast %cst : f32 to vector<2x256xf32>
    %cst_3 = arith.constant 0.000000e+00 : f32
    %3 = vector.broadcast %cst_3 : f32 to vector<2x256xf32>
    %cst_4 = arith.constant 0.000000e+00 : f32
    %4 = vector.broadcast %cst_4 : f32 to vector<2x256xf32>
    %cst_5 = arith.constant 0.000000e+00 : f32
    %5 = vector.broadcast %cst_5 : f32 to vector<2x256xf32>
    %c17_i32 = arith.constant 17 : i32
    %6 = tpu.dynamic_rotate %0 by %c17_i32 dim 1 : vector<8x256xf32>, i32 -> vector<8x256xf32>
    %7 = vector.extract_strided_slice %1 {offsets = [0, 0], sizes = [1, 256], strides = [1, 1]} : vector<9x256xf32> to vector<1x256xf32>
    %8 = vector.broadcast %7 : vector<1x256xf32> to vector<8x256xf32>
    %9 = arith.mulf %6, %8 : vector<8x256xf32>
    %10 = vector.extract_strided_slice %9 {offsets = [0, 0], sizes = [2, 256], strides = [1, 1]} : vector<8x256xf32> to vector<2x256xf32>
    %c0_6 = arith.constant 0 : index
    %11 = memref.load %arg2[%c0_6] : memref<144xf32, #tpu.memory_space<smem>>
    %12 = vector.broadcast %11 : f32 to vector<2x256xf32>
    %13 = arith.mulf %12, %10 : vector<2x256xf32>
    %14 = arith.addf %2, %13 : vector<2x256xf32>
    %c1 = arith.constant 1 : index
    %15 = memref.load %arg2[%c1] : memref<144xf32, #tpu.memory_space<smem>>
    %16 = vector.broadcast %15 : f32 to vector<2x256xf32>
    %17 = arith.mulf %16, %10 : vector<2x256xf32>
    %18 = arith.addf %3, %17 : vector<2x256xf32>
    %c2 = arith.constant 2 : index
    %19 = memref.load %arg2[%c2] : memref<144xf32, #tpu.memory_space<smem>>
    %20 = vector.broadcast %19 : f32 to vector<2x256xf32>
    %21 = arith.mulf %20, %10 : vector<2x256xf32>
    %22 = arith.addf %4, %21 : vector<2x256xf32>
    %c3 = arith.constant 3 : index
    %23 = memref.load %arg2[%c3] : memref<144xf32, #tpu.memory_space<smem>>
    %24 = vector.broadcast %23 : f32 to vector<2x256xf32>
    %25 = arith.mulf %24, %10 : vector<2x256xf32>
    %26 = arith.addf %5, %25 : vector<2x256xf32>
    %27 = vector.extract_strided_slice %9 {offsets = [2, 0], sizes = [2, 256], strides = [1, 1]} : vector<8x256xf32> to vector<2x256xf32>
    %c4 = arith.constant 4 : index
    %28 = memref.load %arg2[%c4] : memref<144xf32, #tpu.memory_space<smem>>
    %29 = vector.broadcast %28 : f32 to vector<2x256xf32>
    %30 = arith.mulf %29, %27 : vector<2x256xf32>
    %31 = arith.addf %14, %30 : vector<2x256xf32>
    %c5 = arith.constant 5 : index
    %32 = memref.load %arg2[%c5] : memref<144xf32, #tpu.memory_space<smem>>
    %33 = vector.broadcast %32 : f32 to vector<2x256xf32>
    %34 = arith.mulf %33, %27 : vector<2x256xf32>
    %35 = arith.addf %18, %34 : vector<2x256xf32>
    %c6 = arith.constant 6 : index
    %36 = memref.load %arg2[%c6] : memref<144xf32, #tpu.memory_space<smem>>
    %37 = vector.broadcast %36 : f32 to vector<2x256xf32>
    %38 = arith.mulf %37, %27 : vector<2x256xf32>
    %39 = arith.addf %22, %38 : vector<2x256xf32>
    %c7 = arith.constant 7 : index
    %40 = memref.load %arg2[%c7] : memref<144xf32, #tpu.memory_space<smem>>
    %41 = vector.broadcast %40 : f32 to vector<2x256xf32>
    %42 = arith.mulf %41, %27 : vector<2x256xf32>
    %43 = arith.addf %26, %42 : vector<2x256xf32>
    %44 = vector.extract_strided_slice %9 {offsets = [4, 0], sizes = [2, 256], strides = [1, 1]} : vector<8x256xf32> to vector<2x256xf32>
    %c8 = arith.constant 8 : index
    %45 = memref.load %arg2[%c8] : memref<144xf32, #tpu.memory_space<smem>>
    %46 = vector.broadcast %45 : f32 to vector<2x256xf32>
    %47 = arith.mulf %46, %44 : vector<2x256xf32>
    %48 = arith.addf %31, %47 : vector<2x256xf32>
    %c9 = arith.constant 9 : index
    %49 = memref.load %arg2[%c9] : memref<144xf32, #tpu.memory_space<smem>>
    %50 = vector.broadcast %49 : f32 to vector<2x256xf32>
    %51 = arith.mulf %50, %44 : vector<2x256xf32>
    %52 = arith.addf %35, %51 : vector<2x256xf32>
    %c10 = arith.constant 10 : index
    %53 = memref.load %arg2[%c10] : memref<144xf32, #tpu.memory_space<smem>>
    %54 = vector.broadcast %53 : f32 to vector<2x256xf32>
    %55 = arith.mulf %54, %44 : vector<2x256xf32>
    %56 = arith.addf %39, %55 : vector<2x256xf32>
    %c11 = arith.constant 11 : index
    %57 = memref.load %arg2[%c11] : memref<144xf32, #tpu.memory_space<smem>>
    %58 = vector.broadcast %57 : f32 to vector<2x256xf32>
    %59 = arith.mulf %58, %44 : vector<2x256xf32>
    %60 = arith.addf %43, %59 : vector<2x256xf32>
    %61 = vector.extract_strided_slice %9 {offsets = [6, 0], sizes = [2, 256], strides = [1, 1]} : vector<8x256xf32> to vector<2x256xf32>
    %c12 = arith.constant 12 : index
    %62 = memref.load %arg2[%c12] : memref<144xf32, #tpu.memory_space<smem>>
    %63 = vector.broadcast %62 : f32 to vector<2x256xf32>
    %64 = arith.mulf %63, %61 : vector<2x256xf32>
    %65 = arith.addf %48, %64 : vector<2x256xf32>
    %c13 = arith.constant 13 : index
    %66 = memref.load %arg2[%c13] : memref<144xf32, #tpu.memory_space<smem>>
    %67 = vector.broadcast %66 : f32 to vector<2x256xf32>
    %68 = arith.mulf %67, %61 : vector<2x256xf32>
    %69 = arith.addf %52, %68 : vector<2x256xf32>
    %c14 = arith.constant 14 : index
    %70 = memref.load %arg2[%c14] : memref<144xf32, #tpu.memory_space<smem>>
    %71 = vector.broadcast %70 : f32 to vector<2x256xf32>
    %72 = arith.mulf %71, %61 : vector<2x256xf32>
    %73 = arith.addf %56, %72 : vector<2x256xf32>
    %c15 = arith.constant 15 : index
    %74 = memref.load %arg2[%c15] : memref<144xf32, #tpu.memory_space<smem>>
    %75 = vector.broadcast %74 : f32 to vector<2x256xf32>
    %76 = arith.mulf %75, %61 : vector<2x256xf32>
    %77 = arith.addf %60, %76 : vector<2x256xf32>
    %c16_i32 = arith.constant 16 : i32
    %78 = tpu.dynamic_rotate %0 by %c16_i32 dim 1 : vector<8x256xf32>, i32 -> vector<8x256xf32>
    %79 = vector.extract_strided_slice %1 {offsets = [1, 0], sizes = [1, 256], strides = [1, 1]} : vector<9x256xf32> to vector<1x256xf32>
    %80 = vector.broadcast %79 : vector<1x256xf32> to vector<8x256xf32>
    %81 = arith.mulf %78, %80 : vector<8x256xf32>
    %82 = vector.extract_strided_slice %81 {offsets = [0, 0], sizes = [2, 256], strides = [1, 1]} : vector<8x256xf32> to vector<2x256xf32>
    %c16 = arith.constant 16 : index
    %83 = memref.load %arg2[%c16] : memref<144xf32, #tpu.memory_space<smem>>
    %84 = vector.broadcast %83 : f32 to vector<2x256xf32>
    %85 = arith.mulf %84, %82 : vector<2x256xf32>
    %86 = arith.addf %65, %85 : vector<2x256xf32>
    %c17 = arith.constant 17 : index
    %87 = memref.load %arg2[%c17] : memref<144xf32, #tpu.memory_space<smem>>
    %88 = vector.broadcast %87 : f32 to vector<2x256xf32>
    %89 = arith.mulf %88, %82 : vector<2x256xf32>
    %90 = arith.addf %69, %89 : vector<2x256xf32>
    %c18 = arith.constant 18 : index
    %91 = memref.load %arg2[%c18] : memref<144xf32, #tpu.memory_space<smem>>
    %92 = vector.broadcast %91 : f32 to vector<2x256xf32>
    %93 = arith.mulf %92, %82 : vector<2x256xf32>
    %94 = arith.addf %73, %93 : vector<2x256xf32>
    %c19 = arith.constant 19 : index
    %95 = memref.load %arg2[%c19] : memref<144xf32, #tpu.memory_space<smem>>
    %96 = vector.broadcast %95 : f32 to vector<2x256xf32>
    %97 = arith.mulf %96, %82 : vector<2x256xf32>
    %98 = arith.addf %77, %97 : vector<2x256xf32>
    %99 = vector.extract_strided_slice %81 {offsets = [2, 0], sizes = [2, 256], strides = [1, 1]} : vector<8x256xf32> to vector<2x256xf32>
    %c20 = arith.constant 20 : index
    %100 = memref.load %arg2[%c20] : memref<144xf32, #tpu.memory_space<smem>>
    %101 = vector.broadcast %100 : f32 to vector<2x256xf32>
    %102 = arith.mulf %101, %99 : vector<2x256xf32>
    %103 = arith.addf %86, %102 : vector<2x256xf32>
    %c21 = arith.constant 21 : index
    %104 = memref.load %arg2[%c21] : memref<144xf32, #tpu.memory_space<smem>>
    %105 = vector.broadcast %104 : f32 to vector<2x256xf32>
    %106 = arith.mulf %105, %99 : vector<2x256xf32>
    %107 = arith.addf %90, %106 : vector<2x256xf32>
    %c22 = arith.constant 22 : index
    %108 = memref.load %arg2[%c22] : memref<144xf32, #tpu.memory_space<smem>>
    %109 = vector.broadcast %108 : f32 to vector<2x256xf32>
    %110 = arith.mulf %109, %99 : vector<2x256xf32>
    %111 = arith.addf %94, %110 : vector<2x256xf32>
    %c23 = arith.constant 23 : index
    %112 = memref.load %arg2[%c23] : memref<144xf32, #tpu.memory_space<smem>>
    %113 = vector.broadcast %112 : f32 to vector<2x256xf32>
    %114 = arith.mulf %113, %99 : vector<2x256xf32>
    %115 = arith.addf %98, %114 : vector<2x256xf32>
    %116 = vector.extract_strided_slice %81 {offsets = [4, 0], sizes = [2, 256], strides = [1, 1]} : vector<8x256xf32> to vector<2x256xf32>
    %c24 = arith.constant 24 : index
    %117 = memref.load %arg2[%c24] : memref<144xf32, #tpu.memory_space<smem>>
    %118 = vector.broadcast %117 : f32 to vector<2x256xf32>
    %119 = arith.mulf %118, %116 : vector<2x256xf32>
    %120 = arith.addf %103, %119 : vector<2x256xf32>
    %c25 = arith.constant 25 : index
    %121 = memref.load %arg2[%c25] : memref<144xf32, #tpu.memory_space<smem>>
    %122 = vector.broadcast %121 : f32 to vector<2x256xf32>
    %123 = arith.mulf %122, %116 : vector<2x256xf32>
    %124 = arith.addf %107, %123 : vector<2x256xf32>
    %c26 = arith.constant 26 : index
    %125 = memref.load %arg2[%c26] : memref<144xf32, #tpu.memory_space<smem>>
    %126 = vector.broadcast %125 : f32 to vector<2x256xf32>
    %127 = arith.mulf %126, %116 : vector<2x256xf32>
    %128 = arith.addf %111, %127 : vector<2x256xf32>
    %c27 = arith.constant 27 : index
    %129 = memref.load %arg2[%c27] : memref<144xf32, #tpu.memory_space<smem>>
    %130 = vector.broadcast %129 : f32 to vector<2x256xf32>
    %131 = arith.mulf %130, %116 : vector<2x256xf32>
    %132 = arith.addf %115, %131 : vector<2x256xf32>
    %133 = vector.extract_strided_slice %81 {offsets = [6, 0], sizes = [2, 256], strides = [1, 1]} : vector<8x256xf32> to vector<2x256xf32>
    %c28 = arith.constant 28 : index
    %134 = memref.load %arg2[%c28] : memref<144xf32, #tpu.memory_space<smem>>
    %135 = vector.broadcast %134 : f32 to vector<2x256xf32>
    %136 = arith.mulf %135, %133 : vector<2x256xf32>
    %137 = arith.addf %120, %136 : vector<2x256xf32>
    %c29 = arith.constant 29 : index
    %138 = memref.load %arg2[%c29] : memref<144xf32, #tpu.memory_space<smem>>
    %139 = vector.broadcast %138 : f32 to vector<2x256xf32>
    %140 = arith.mulf %139, %133 : vector<2x256xf32>
    %141 = arith.addf %124, %140 : vector<2x256xf32>
    %c30 = arith.constant 30 : index
    %142 = memref.load %arg2[%c30] : memref<144xf32, #tpu.memory_space<smem>>
    %143 = vector.broadcast %142 : f32 to vector<2x256xf32>
    %144 = arith.mulf %143, %133 : vector<2x256xf32>
    %145 = arith.addf %128, %144 : vector<2x256xf32>
    %c31 = arith.constant 31 : index
    %146 = memref.load %arg2[%c31] : memref<144xf32, #tpu.memory_space<smem>>
    %147 = vector.broadcast %146 : f32 to vector<2x256xf32>
    %148 = arith.mulf %147, %133 : vector<2x256xf32>
    %149 = arith.addf %132, %148 : vector<2x256xf32>
    %c15_i32 = arith.constant 15 : i32
    %150 = tpu.dynamic_rotate %0 by %c15_i32 dim 1 : vector<8x256xf32>, i32 -> vector<8x256xf32>
    %151 = vector.extract_strided_slice %1 {offsets = [2, 0], sizes = [1, 256], strides = [1, 1]} : vector<9x256xf32> to vector<1x256xf32>
    %152 = vector.broadcast %151 : vector<1x256xf32> to vector<8x256xf32>
    %153 = arith.mulf %150, %152 : vector<8x256xf32>
    %154 = vector.extract_strided_slice %153 {offsets = [0, 0], sizes = [2, 256], strides = [1, 1]} : vector<8x256xf32> to vector<2x256xf32>
    %c32 = arith.constant 32 : index
    %155 = memref.load %arg2[%c32] : memref<144xf32, #tpu.memory_space<smem>>
    %156 = vector.broadcast %155 : f32 to vector<2x256xf32>
    %157 = arith.mulf %156, %154 : vector<2x256xf32>
    %158 = arith.addf %137, %157 : vector<2x256xf32>
    %c33 = arith.constant 33 : index
    %159 = memref.load %arg2[%c33] : memref<144xf32, #tpu.memory_space<smem>>
    %160 = vector.broadcast %159 : f32 to vector<2x256xf32>
    %161 = arith.mulf %160, %154 : vector<2x256xf32>
    %162 = arith.addf %141, %161 : vector<2x256xf32>
    %c34 = arith.constant 34 : index
    %163 = memref.load %arg2[%c34] : memref<144xf32, #tpu.memory_space<smem>>
    %164 = vector.broadcast %163 : f32 to vector<2x256xf32>
    %165 = arith.mulf %164, %154 : vector<2x256xf32>
    %166 = arith.addf %145, %165 : vector<2x256xf32>
    %c35 = arith.constant 35 : index
    %167 = memref.load %arg2[%c35] : memref<144xf32, #tpu.memory_space<smem>>
    %168 = vector.broadcast %167 : f32 to vector<2x256xf32>
    %169 = arith.mulf %168, %154 : vector<2x256xf32>
    %170 = arith.addf %149, %169 : vector<2x256xf32>
    %171 = vector.extract_strided_slice %153 {offsets = [2, 0], sizes = [2, 256], strides = [1, 1]} : vector<8x256xf32> to vector<2x256xf32>
    %c36 = arith.constant 36 : index
    %172 = memref.load %arg2[%c36] : memref<144xf32, #tpu.memory_space<smem>>
    %173 = vector.broadcast %172 : f32 to vector<2x256xf32>
    %174 = arith.mulf %173, %171 : vector<2x256xf32>
    %175 = arith.addf %158, %174 : vector<2x256xf32>
    %c37 = arith.constant 37 : index
    %176 = memref.load %arg2[%c37] : memref<144xf32, #tpu.memory_space<smem>>
    %177 = vector.broadcast %176 : f32 to vector<2x256xf32>
    %178 = arith.mulf %177, %171 : vector<2x256xf32>
    %179 = arith.addf %162, %178 : vector<2x256xf32>
    %c38 = arith.constant 38 : index
    %180 = memref.load %arg2[%c38] : memref<144xf32, #tpu.memory_space<smem>>
    %181 = vector.broadcast %180 : f32 to vector<2x256xf32>
    %182 = arith.mulf %181, %171 : vector<2x256xf32>
    %183 = arith.addf %166, %182 : vector<2x256xf32>
    %c39 = arith.constant 39 : index
    %184 = memref.load %arg2[%c39] : memref<144xf32, #tpu.memory_space<smem>>
    %185 = vector.broadcast %184 : f32 to vector<2x256xf32>
    %186 = arith.mulf %185, %171 : vector<2x256xf32>
    %187 = arith.addf %170, %186 : vector<2x256xf32>
    %188 = vector.extract_strided_slice %153 {offsets = [4, 0], sizes = [2, 256], strides = [1, 1]} : vector<8x256xf32> to vector<2x256xf32>
    %c40 = arith.constant 40 : index
    %189 = memref.load %arg2[%c40] : memref<144xf32, #tpu.memory_space<smem>>
    %190 = vector.broadcast %189 : f32 to vector<2x256xf32>
    %191 = arith.mulf %190, %188 : vector<2x256xf32>
    %192 = arith.addf %175, %191 : vector<2x256xf32>
    %c41 = arith.constant 41 : index
    %193 = memref.load %arg2[%c41] : memref<144xf32, #tpu.memory_space<smem>>
    %194 = vector.broadcast %193 : f32 to vector<2x256xf32>
    %195 = arith.mulf %194, %188 : vector<2x256xf32>
    %196 = arith.addf %179, %195 : vector<2x256xf32>
    %c42 = arith.constant 42 : index
    %197 = memref.load %arg2[%c42] : memref<144xf32, #tpu.memory_space<smem>>
    %198 = vector.broadcast %197 : f32 to vector<2x256xf32>
    %199 = arith.mulf %198, %188 : vector<2x256xf32>
    %200 = arith.addf %183, %199 : vector<2x256xf32>
    %c43 = arith.constant 43 : index
    %201 = memref.load %arg2[%c43] : memref<144xf32, #tpu.memory_space<smem>>
    %202 = vector.broadcast %201 : f32 to vector<2x256xf32>
    %203 = arith.mulf %202, %188 : vector<2x256xf32>
    %204 = arith.addf %187, %203 : vector<2x256xf32>
    %205 = vector.extract_strided_slice %153 {offsets = [6, 0], sizes = [2, 256], strides = [1, 1]} : vector<8x256xf32> to vector<2x256xf32>
    %c44 = arith.constant 44 : index
    %206 = memref.load %arg2[%c44] : memref<144xf32, #tpu.memory_space<smem>>
    %207 = vector.broadcast %206 : f32 to vector<2x256xf32>
    %208 = arith.mulf %207, %205 : vector<2x256xf32>
    %209 = arith.addf %192, %208 : vector<2x256xf32>
    %c45 = arith.constant 45 : index
    %210 = memref.load %arg2[%c45] : memref<144xf32, #tpu.memory_space<smem>>
    %211 = vector.broadcast %210 : f32 to vector<2x256xf32>
    %212 = arith.mulf %211, %205 : vector<2x256xf32>
    %213 = arith.addf %196, %212 : vector<2x256xf32>
    %c46 = arith.constant 46 : index
    %214 = memref.load %arg2[%c46] : memref<144xf32, #tpu.memory_space<smem>>
    %215 = vector.broadcast %214 : f32 to vector<2x256xf32>
    %216 = arith.mulf %215, %205 : vector<2x256xf32>
    %217 = arith.addf %200, %216 : vector<2x256xf32>
    %c47 = arith.constant 47 : index
    %218 = memref.load %arg2[%c47] : memref<144xf32, #tpu.memory_space<smem>>
    %219 = vector.broadcast %218 : f32 to vector<2x256xf32>
    %220 = arith.mulf %219, %205 : vector<2x256xf32>
    %221 = arith.addf %204, %220 : vector<2x256xf32>
    %c1_i32 = arith.constant 1 : i32
    %222 = tpu.dynamic_rotate %0 by %c1_i32 dim 1 : vector<8x256xf32>, i32 -> vector<8x256xf32>
    %223 = vector.extract_strided_slice %1 {offsets = [3, 0], sizes = [1, 256], strides = [1, 1]} : vector<9x256xf32> to vector<1x256xf32>
    %224 = vector.broadcast %223 : vector<1x256xf32> to vector<8x256xf32>
    %225 = arith.mulf %222, %224 : vector<8x256xf32>
    %226 = vector.extract_strided_slice %225 {offsets = [0, 0], sizes = [2, 256], strides = [1, 1]} : vector<8x256xf32> to vector<2x256xf32>
    %c48 = arith.constant 48 : index
    %227 = memref.load %arg2[%c48] : memref<144xf32, #tpu.memory_space<smem>>
    %228 = vector.broadcast %227 : f32 to vector<2x256xf32>
    %229 = arith.mulf %228, %226 : vector<2x256xf32>
    %230 = arith.addf %209, %229 : vector<2x256xf32>
    %c49 = arith.constant 49 : index
    %231 = memref.load %arg2[%c49] : memref<144xf32, #tpu.memory_space<smem>>
    %232 = vector.broadcast %231 : f32 to vector<2x256xf32>
    %233 = arith.mulf %232, %226 : vector<2x256xf32>
    %234 = arith.addf %213, %233 : vector<2x256xf32>
    %c50 = arith.constant 50 : index
    %235 = memref.load %arg2[%c50] : memref<144xf32, #tpu.memory_space<smem>>
    %236 = vector.broadcast %235 : f32 to vector<2x256xf32>
    %237 = arith.mulf %236, %226 : vector<2x256xf32>
    %238 = arith.addf %217, %237 : vector<2x256xf32>
    %c51 = arith.constant 51 : index
    %239 = memref.load %arg2[%c51] : memref<144xf32, #tpu.memory_space<smem>>
    %240 = vector.broadcast %239 : f32 to vector<2x256xf32>
    %241 = arith.mulf %240, %226 : vector<2x256xf32>
    %242 = arith.addf %221, %241 : vector<2x256xf32>
    %243 = vector.extract_strided_slice %225 {offsets = [2, 0], sizes = [2, 256], strides = [1, 1]} : vector<8x256xf32> to vector<2x256xf32>
    %c52 = arith.constant 52 : index
    %244 = memref.load %arg2[%c52] : memref<144xf32, #tpu.memory_space<smem>>
    %245 = vector.broadcast %244 : f32 to vector<2x256xf32>
    %246 = arith.mulf %245, %243 : vector<2x256xf32>
    %247 = arith.addf %230, %246 : vector<2x256xf32>
    %c53 = arith.constant 53 : index
    %248 = memref.load %arg2[%c53] : memref<144xf32, #tpu.memory_space<smem>>
    %249 = vector.broadcast %248 : f32 to vector<2x256xf32>
    %250 = arith.mulf %249, %243 : vector<2x256xf32>
    %251 = arith.addf %234, %250 : vector<2x256xf32>
    %c54 = arith.constant 54 : index
    %252 = memref.load %arg2[%c54] : memref<144xf32, #tpu.memory_space<smem>>
    %253 = vector.broadcast %252 : f32 to vector<2x256xf32>
    %254 = arith.mulf %253, %243 : vector<2x256xf32>
    %255 = arith.addf %238, %254 : vector<2x256xf32>
    %c55 = arith.constant 55 : index
    %256 = memref.load %arg2[%c55] : memref<144xf32, #tpu.memory_space<smem>>
    %257 = vector.broadcast %256 : f32 to vector<2x256xf32>
    %258 = arith.mulf %257, %243 : vector<2x256xf32>
    %259 = arith.addf %242, %258 : vector<2x256xf32>
    %260 = vector.extract_strided_slice %225 {offsets = [4, 0], sizes = [2, 256], strides = [1, 1]} : vector<8x256xf32> to vector<2x256xf32>
    %c56 = arith.constant 56 : index
    %261 = memref.load %arg2[%c56] : memref<144xf32, #tpu.memory_space<smem>>
    %262 = vector.broadcast %261 : f32 to vector<2x256xf32>
    %263 = arith.mulf %262, %260 : vector<2x256xf32>
    %264 = arith.addf %247, %263 : vector<2x256xf32>
    %c57 = arith.constant 57 : index
    %265 = memref.load %arg2[%c57] : memref<144xf32, #tpu.memory_space<smem>>
    %266 = vector.broadcast %265 : f32 to vector<2x256xf32>
    %267 = arith.mulf %266, %260 : vector<2x256xf32>
    %268 = arith.addf %251, %267 : vector<2x256xf32>
    %c58 = arith.constant 58 : index
    %269 = memref.load %arg2[%c58] : memref<144xf32, #tpu.memory_space<smem>>
    %270 = vector.broadcast %269 : f32 to vector<2x256xf32>
    %271 = arith.mulf %270, %260 : vector<2x256xf32>
    %272 = arith.addf %255, %271 : vector<2x256xf32>
    %c59 = arith.constant 59 : index
    %273 = memref.load %arg2[%c59] : memref<144xf32, #tpu.memory_space<smem>>
    %274 = vector.broadcast %273 : f32 to vector<2x256xf32>
    %275 = arith.mulf %274, %260 : vector<2x256xf32>
    %276 = arith.addf %259, %275 : vector<2x256xf32>
    %277 = vector.extract_strided_slice %225 {offsets = [6, 0], sizes = [2, 256], strides = [1, 1]} : vector<8x256xf32> to vector<2x256xf32>
    %c60 = arith.constant 60 : index
    %278 = memref.load %arg2[%c60] : memref<144xf32, #tpu.memory_space<smem>>
    %279 = vector.broadcast %278 : f32 to vector<2x256xf32>
    %280 = arith.mulf %279, %277 : vector<2x256xf32>
    %281 = arith.addf %264, %280 : vector<2x256xf32>
    %c61 = arith.constant 61 : index
    %282 = memref.load %arg2[%c61] : memref<144xf32, #tpu.memory_space<smem>>
    %283 = vector.broadcast %282 : f32 to vector<2x256xf32>
    %284 = arith.mulf %283, %277 : vector<2x256xf32>
    %285 = arith.addf %268, %284 : vector<2x256xf32>
    %c62 = arith.constant 62 : index
    %286 = memref.load %arg2[%c62] : memref<144xf32, #tpu.memory_space<smem>>
    %287 = vector.broadcast %286 : f32 to vector<2x256xf32>
    %288 = arith.mulf %287, %277 : vector<2x256xf32>
    %289 = arith.addf %272, %288 : vector<2x256xf32>
    %c63 = arith.constant 63 : index
    %290 = memref.load %arg2[%c63] : memref<144xf32, #tpu.memory_space<smem>>
    %291 = vector.broadcast %290 : f32 to vector<2x256xf32>
    %292 = arith.mulf %291, %277 : vector<2x256xf32>
    %293 = arith.addf %276, %292 : vector<2x256xf32>
    %294 = vector.extract_strided_slice %1 {offsets = [4, 0], sizes = [1, 256], strides = [1, 1]} : vector<9x256xf32> to vector<1x256xf32>
    %295 = vector.broadcast %294 : vector<1x256xf32> to vector<8x256xf32>
    %296 = arith.mulf %0, %295 : vector<8x256xf32>
    %297 = vector.extract_strided_slice %296 {offsets = [0, 0], sizes = [2, 256], strides = [1, 1]} : vector<8x256xf32> to vector<2x256xf32>
    %c64 = arith.constant 64 : index
    %298 = memref.load %arg2[%c64] : memref<144xf32, #tpu.memory_space<smem>>
    %299 = vector.broadcast %298 : f32 to vector<2x256xf32>
    %300 = arith.mulf %299, %297 : vector<2x256xf32>
    %301 = arith.addf %281, %300 : vector<2x256xf32>
    %c65 = arith.constant 65 : index
    %302 = memref.load %arg2[%c65] : memref<144xf32, #tpu.memory_space<smem>>
    %303 = vector.broadcast %302 : f32 to vector<2x256xf32>
    %304 = arith.mulf %303, %297 : vector<2x256xf32>
    %305 = arith.addf %285, %304 : vector<2x256xf32>
    %c66 = arith.constant 66 : index
    %306 = memref.load %arg2[%c66] : memref<144xf32, #tpu.memory_space<smem>>
    %307 = vector.broadcast %306 : f32 to vector<2x256xf32>
    %308 = arith.mulf %307, %297 : vector<2x256xf32>
    %309 = arith.addf %289, %308 : vector<2x256xf32>
    %c67 = arith.constant 67 : index
    %310 = memref.load %arg2[%c67] : memref<144xf32, #tpu.memory_space<smem>>
    %311 = vector.broadcast %310 : f32 to vector<2x256xf32>
    %312 = arith.mulf %311, %297 : vector<2x256xf32>
    %313 = arith.addf %293, %312 : vector<2x256xf32>
    %314 = vector.extract_strided_slice %296 {offsets = [2, 0], sizes = [2, 256], strides = [1, 1]} : vector<8x256xf32> to vector<2x256xf32>
    %c68 = arith.constant 68 : index
    %315 = memref.load %arg2[%c68] : memref<144xf32, #tpu.memory_space<smem>>
    %316 = vector.broadcast %315 : f32 to vector<2x256xf32>
    %317 = arith.mulf %316, %314 : vector<2x256xf32>
    %318 = arith.addf %301, %317 : vector<2x256xf32>
    %c69 = arith.constant 69 : index
    %319 = memref.load %arg2[%c69] : memref<144xf32, #tpu.memory_space<smem>>
    %320 = vector.broadcast %319 : f32 to vector<2x256xf32>
    %321 = arith.mulf %320, %314 : vector<2x256xf32>
    %322 = arith.addf %305, %321 : vector<2x256xf32>
    %c70 = arith.constant 70 : index
    %323 = memref.load %arg2[%c70] : memref<144xf32, #tpu.memory_space<smem>>
    %324 = vector.broadcast %323 : f32 to vector<2x256xf32>
    %325 = arith.mulf %324, %314 : vector<2x256xf32>
    %326 = arith.addf %309, %325 : vector<2x256xf32>
    %c71 = arith.constant 71 : index
    %327 = memref.load %arg2[%c71] : memref<144xf32, #tpu.memory_space<smem>>
    %328 = vector.broadcast %327 : f32 to vector<2x256xf32>
    %329 = arith.mulf %328, %314 : vector<2x256xf32>
    %330 = arith.addf %313, %329 : vector<2x256xf32>
    %331 = vector.extract_strided_slice %296 {offsets = [4, 0], sizes = [2, 256], strides = [1, 1]} : vector<8x256xf32> to vector<2x256xf32>
    %c72 = arith.constant 72 : index
    %332 = memref.load %arg2[%c72] : memref<144xf32, #tpu.memory_space<smem>>
    %333 = vector.broadcast %332 : f32 to vector<2x256xf32>
    %334 = arith.mulf %333, %331 : vector<2x256xf32>
    %335 = arith.addf %318, %334 : vector<2x256xf32>
    %c73 = arith.constant 73 : index
    %336 = memref.load %arg2[%c73] : memref<144xf32, #tpu.memory_space<smem>>
    %337 = vector.broadcast %336 : f32 to vector<2x256xf32>
    %338 = arith.mulf %337, %331 : vector<2x256xf32>
    %339 = arith.addf %322, %338 : vector<2x256xf32>
    %c74 = arith.constant 74 : index
    %340 = memref.load %arg2[%c74] : memref<144xf32, #tpu.memory_space<smem>>
    %341 = vector.broadcast %340 : f32 to vector<2x256xf32>
    %342 = arith.mulf %341, %331 : vector<2x256xf32>
    %343 = arith.addf %326, %342 : vector<2x256xf32>
    %c75 = arith.constant 75 : index
    %344 = memref.load %arg2[%c75] : memref<144xf32, #tpu.memory_space<smem>>
    %345 = vector.broadcast %344 : f32 to vector<2x256xf32>
    %346 = arith.mulf %345, %331 : vector<2x256xf32>
    %347 = arith.addf %330, %346 : vector<2x256xf32>
    %348 = vector.extract_strided_slice %296 {offsets = [6, 0], sizes = [2, 256], strides = [1, 1]} : vector<8x256xf32> to vector<2x256xf32>
    %c76 = arith.constant 76 : index
    %349 = memref.load %arg2[%c76] : memref<144xf32, #tpu.memory_space<smem>>
    %350 = vector.broadcast %349 : f32 to vector<2x256xf32>
    %351 = arith.mulf %350, %348 : vector<2x256xf32>
    %352 = arith.addf %335, %351 : vector<2x256xf32>
    %c77 = arith.constant 77 : index
    %353 = memref.load %arg2[%c77] : memref<144xf32, #tpu.memory_space<smem>>
    %354 = vector.broadcast %353 : f32 to vector<2x256xf32>
    %355 = arith.mulf %354, %348 : vector<2x256xf32>
    %356 = arith.addf %339, %355 : vector<2x256xf32>
    %c78 = arith.constant 78 : index
    %357 = memref.load %arg2[%c78] : memref<144xf32, #tpu.memory_space<smem>>
    %358 = vector.broadcast %357 : f32 to vector<2x256xf32>
    %359 = arith.mulf %358, %348 : vector<2x256xf32>
    %360 = arith.addf %343, %359 : vector<2x256xf32>
    %c79 = arith.constant 79 : index
    %361 = memref.load %arg2[%c79] : memref<144xf32, #tpu.memory_space<smem>>
    %362 = vector.broadcast %361 : f32 to vector<2x256xf32>
    %363 = arith.mulf %362, %348 : vector<2x256xf32>
    %364 = arith.addf %347, %363 : vector<2x256xf32>
    %c255_i32 = arith.constant 255 : i32
    %365 = tpu.dynamic_rotate %0 by %c255_i32 dim 1 : vector<8x256xf32>, i32 -> vector<8x256xf32>
    %366 = vector.extract_strided_slice %1 {offsets = [5, 0], sizes = [1, 256], strides = [1, 1]} : vector<9x256xf32> to vector<1x256xf32>
    %367 = vector.broadcast %366 : vector<1x256xf32> to vector<8x256xf32>
    %368 = arith.mulf %365, %367 : vector<8x256xf32>
    %369 = vector.extract_strided_slice %368 {offsets = [0, 0], sizes = [2, 256], strides = [1, 1]} : vector<8x256xf32> to vector<2x256xf32>
    %c80 = arith.constant 80 : index
    %370 = memref.load %arg2[%c80] : memref<144xf32, #tpu.memory_space<smem>>
    %371 = vector.broadcast %370 : f32 to vector<2x256xf32>
    %372 = arith.mulf %371, %369 : vector<2x256xf32>
    %373 = arith.addf %352, %372 : vector<2x256xf32>
    %c81 = arith.constant 81 : index
    %374 = memref.load %arg2[%c81] : memref<144xf32, #tpu.memory_space<smem>>
    %375 = vector.broadcast %374 : f32 to vector<2x256xf32>
    %376 = arith.mulf %375, %369 : vector<2x256xf32>
    %377 = arith.addf %356, %376 : vector<2x256xf32>
    %c82 = arith.constant 82 : index
    %378 = memref.load %arg2[%c82] : memref<144xf32, #tpu.memory_space<smem>>
    %379 = vector.broadcast %378 : f32 to vector<2x256xf32>
    %380 = arith.mulf %379, %369 : vector<2x256xf32>
    %381 = arith.addf %360, %380 : vector<2x256xf32>
    %c83 = arith.constant 83 : index
    %382 = memref.load %arg2[%c83] : memref<144xf32, #tpu.memory_space<smem>>
    %383 = vector.broadcast %382 : f32 to vector<2x256xf32>
    %384 = arith.mulf %383, %369 : vector<2x256xf32>
    %385 = arith.addf %364, %384 : vector<2x256xf32>
    %386 = vector.extract_strided_slice %368 {offsets = [2, 0], sizes = [2, 256], strides = [1, 1]} : vector<8x256xf32> to vector<2x256xf32>
    %c84 = arith.constant 84 : index
    %387 = memref.load %arg2[%c84] : memref<144xf32, #tpu.memory_space<smem>>
    %388 = vector.broadcast %387 : f32 to vector<2x256xf32>
    %389 = arith.mulf %388, %386 : vector<2x256xf32>
    %390 = arith.addf %373, %389 : vector<2x256xf32>
    %c85 = arith.constant 85 : index
    %391 = memref.load %arg2[%c85] : memref<144xf32, #tpu.memory_space<smem>>
    %392 = vector.broadcast %391 : f32 to vector<2x256xf32>
    %393 = arith.mulf %392, %386 : vector<2x256xf32>
    %394 = arith.addf %377, %393 : vector<2x256xf32>
    %c86 = arith.constant 86 : index
    %395 = memref.load %arg2[%c86] : memref<144xf32, #tpu.memory_space<smem>>
    %396 = vector.broadcast %395 : f32 to vector<2x256xf32>
    %397 = arith.mulf %396, %386 : vector<2x256xf32>
    %398 = arith.addf %381, %397 : vector<2x256xf32>
    %c87 = arith.constant 87 : index
    %399 = memref.load %arg2[%c87] : memref<144xf32, #tpu.memory_space<smem>>
    %400 = vector.broadcast %399 : f32 to vector<2x256xf32>
    %401 = arith.mulf %400, %386 : vector<2x256xf32>
    %402 = arith.addf %385, %401 : vector<2x256xf32>
    %403 = vector.extract_strided_slice %368 {offsets = [4, 0], sizes = [2, 256], strides = [1, 1]} : vector<8x256xf32> to vector<2x256xf32>
    %c88 = arith.constant 88 : index
    %404 = memref.load %arg2[%c88] : memref<144xf32, #tpu.memory_space<smem>>
    %405 = vector.broadcast %404 : f32 to vector<2x256xf32>
    %406 = arith.mulf %405, %403 : vector<2x256xf32>
    %407 = arith.addf %390, %406 : vector<2x256xf32>
    %c89 = arith.constant 89 : index
    %408 = memref.load %arg2[%c89] : memref<144xf32, #tpu.memory_space<smem>>
    %409 = vector.broadcast %408 : f32 to vector<2x256xf32>
    %410 = arith.mulf %409, %403 : vector<2x256xf32>
    %411 = arith.addf %394, %410 : vector<2x256xf32>
    %c90 = arith.constant 90 : index
    %412 = memref.load %arg2[%c90] : memref<144xf32, #tpu.memory_space<smem>>
    %413 = vector.broadcast %412 : f32 to vector<2x256xf32>
    %414 = arith.mulf %413, %403 : vector<2x256xf32>
    %415 = arith.addf %398, %414 : vector<2x256xf32>
    %c91 = arith.constant 91 : index
    %416 = memref.load %arg2[%c91] : memref<144xf32, #tpu.memory_space<smem>>
    %417 = vector.broadcast %416 : f32 to vector<2x256xf32>
    %418 = arith.mulf %417, %403 : vector<2x256xf32>
    %419 = arith.addf %402, %418 : vector<2x256xf32>
    %420 = vector.extract_strided_slice %368 {offsets = [6, 0], sizes = [2, 256], strides = [1, 1]} : vector<8x256xf32> to vector<2x256xf32>
    %c92 = arith.constant 92 : index
    %421 = memref.load %arg2[%c92] : memref<144xf32, #tpu.memory_space<smem>>
    %422 = vector.broadcast %421 : f32 to vector<2x256xf32>
    %423 = arith.mulf %422, %420 : vector<2x256xf32>
    %424 = arith.addf %407, %423 : vector<2x256xf32>
    %c93 = arith.constant 93 : index
    %425 = memref.load %arg2[%c93] : memref<144xf32, #tpu.memory_space<smem>>
    %426 = vector.broadcast %425 : f32 to vector<2x256xf32>
    %427 = arith.mulf %426, %420 : vector<2x256xf32>
    %428 = arith.addf %411, %427 : vector<2x256xf32>
    %c94 = arith.constant 94 : index
    %429 = memref.load %arg2[%c94] : memref<144xf32, #tpu.memory_space<smem>>
    %430 = vector.broadcast %429 : f32 to vector<2x256xf32>
    %431 = arith.mulf %430, %420 : vector<2x256xf32>
    %432 = arith.addf %415, %431 : vector<2x256xf32>
    %c95 = arith.constant 95 : index
    %433 = memref.load %arg2[%c95] : memref<144xf32, #tpu.memory_space<smem>>
    %434 = vector.broadcast %433 : f32 to vector<2x256xf32>
    %435 = arith.mulf %434, %420 : vector<2x256xf32>
    %436 = arith.addf %419, %435 : vector<2x256xf32>
    %c241_i32 = arith.constant 241 : i32
    %437 = tpu.dynamic_rotate %0 by %c241_i32 dim 1 : vector<8x256xf32>, i32 -> vector<8x256xf32>
    %438 = vector.extract_strided_slice %1 {offsets = [6, 0], sizes = [1, 256], strides = [1, 1]} : vector<9x256xf32> to vector<1x256xf32>
    %439 = vector.broadcast %438 : vector<1x256xf32> to vector<8x256xf32>
    %440 = arith.mulf %437, %439 : vector<8x256xf32>
    %441 = vector.extract_strided_slice %440 {offsets = [0, 0], sizes = [2, 256], strides = [1, 1]} : vector<8x256xf32> to vector<2x256xf32>
    %c96 = arith.constant 96 : index
    %442 = memref.load %arg2[%c96] : memref<144xf32, #tpu.memory_space<smem>>
    %443 = vector.broadcast %442 : f32 to vector<2x256xf32>
    %444 = arith.mulf %443, %441 : vector<2x256xf32>
    %445 = arith.addf %424, %444 : vector<2x256xf32>
    %c97 = arith.constant 97 : index
    %446 = memref.load %arg2[%c97] : memref<144xf32, #tpu.memory_space<smem>>
    %447 = vector.broadcast %446 : f32 to vector<2x256xf32>
    %448 = arith.mulf %447, %441 : vector<2x256xf32>
    %449 = arith.addf %428, %448 : vector<2x256xf32>
    %c98 = arith.constant 98 : index
    %450 = memref.load %arg2[%c98] : memref<144xf32, #tpu.memory_space<smem>>
    %451 = vector.broadcast %450 : f32 to vector<2x256xf32>
    %452 = arith.mulf %451, %441 : vector<2x256xf32>
    %453 = arith.addf %432, %452 : vector<2x256xf32>
    %c99 = arith.constant 99 : index
    %454 = memref.load %arg2[%c99] : memref<144xf32, #tpu.memory_space<smem>>
    %455 = vector.broadcast %454 : f32 to vector<2x256xf32>
    %456 = arith.mulf %455, %441 : vector<2x256xf32>
    %457 = arith.addf %436, %456 : vector<2x256xf32>
    %458 = vector.extract_strided_slice %440 {offsets = [2, 0], sizes = [2, 256], strides = [1, 1]} : vector<8x256xf32> to vector<2x256xf32>
    %c100 = arith.constant 100 : index
    %459 = memref.load %arg2[%c100] : memref<144xf32, #tpu.memory_space<smem>>
    %460 = vector.broadcast %459 : f32 to vector<2x256xf32>
    %461 = arith.mulf %460, %458 : vector<2x256xf32>
    %462 = arith.addf %445, %461 : vector<2x256xf32>
    %c101 = arith.constant 101 : index
    %463 = memref.load %arg2[%c101] : memref<144xf32, #tpu.memory_space<smem>>
    %464 = vector.broadcast %463 : f32 to vector<2x256xf32>
    %465 = arith.mulf %464, %458 : vector<2x256xf32>
    %466 = arith.addf %449, %465 : vector<2x256xf32>
    %c102 = arith.constant 102 : index
    %467 = memref.load %arg2[%c102] : memref<144xf32, #tpu.memory_space<smem>>
    %468 = vector.broadcast %467 : f32 to vector<2x256xf32>
    %469 = arith.mulf %468, %458 : vector<2x256xf32>
    %470 = arith.addf %453, %469 : vector<2x256xf32>
    %c103 = arith.constant 103 : index
    %471 = memref.load %arg2[%c103] : memref<144xf32, #tpu.memory_space<smem>>
    %472 = vector.broadcast %471 : f32 to vector<2x256xf32>
    %473 = arith.mulf %472, %458 : vector<2x256xf32>
    %474 = arith.addf %457, %473 : vector<2x256xf32>
    %475 = vector.extract_strided_slice %440 {offsets = [4, 0], sizes = [2, 256], strides = [1, 1]} : vector<8x256xf32> to vector<2x256xf32>
    %c104 = arith.constant 104 : index
    %476 = memref.load %arg2[%c104] : memref<144xf32, #tpu.memory_space<smem>>
    %477 = vector.broadcast %476 : f32 to vector<2x256xf32>
    %478 = arith.mulf %477, %475 : vector<2x256xf32>
    %479 = arith.addf %462, %478 : vector<2x256xf32>
    %c105 = arith.constant 105 : index
    %480 = memref.load %arg2[%c105] : memref<144xf32, #tpu.memory_space<smem>>
    %481 = vector.broadcast %480 : f32 to vector<2x256xf32>
    %482 = arith.mulf %481, %475 : vector<2x256xf32>
    %483 = arith.addf %466, %482 : vector<2x256xf32>
    %c106 = arith.constant 106 : index
    %484 = memref.load %arg2[%c106] : memref<144xf32, #tpu.memory_space<smem>>
    %485 = vector.broadcast %484 : f32 to vector<2x256xf32>
    %486 = arith.mulf %485, %475 : vector<2x256xf32>
    %487 = arith.addf %470, %486 : vector<2x256xf32>
    %c107 = arith.constant 107 : index
    %488 = memref.load %arg2[%c107] : memref<144xf32, #tpu.memory_space<smem>>
    %489 = vector.broadcast %488 : f32 to vector<2x256xf32>
    %490 = arith.mulf %489, %475 : vector<2x256xf32>
    %491 = arith.addf %474, %490 : vector<2x256xf32>
    %492 = vector.extract_strided_slice %440 {offsets = [6, 0], sizes = [2, 256], strides = [1, 1]} : vector<8x256xf32> to vector<2x256xf32>
    %c108 = arith.constant 108 : index
    %493 = memref.load %arg2[%c108] : memref<144xf32, #tpu.memory_space<smem>>
    %494 = vector.broadcast %493 : f32 to vector<2x256xf32>
    %495 = arith.mulf %494, %492 : vector<2x256xf32>
    %496 = arith.addf %479, %495 : vector<2x256xf32>
    %c109 = arith.constant 109 : index
    %497 = memref.load %arg2[%c109] : memref<144xf32, #tpu.memory_space<smem>>
    %498 = vector.broadcast %497 : f32 to vector<2x256xf32>
    %499 = arith.mulf %498, %492 : vector<2x256xf32>
    %500 = arith.addf %483, %499 : vector<2x256xf32>
    %c110 = arith.constant 110 : index
    %501 = memref.load %arg2[%c110] : memref<144xf32, #tpu.memory_space<smem>>
    %502 = vector.broadcast %501 : f32 to vector<2x256xf32>
    %503 = arith.mulf %502, %492 : vector<2x256xf32>
    %504 = arith.addf %487, %503 : vector<2x256xf32>
    %c111 = arith.constant 111 : index
    %505 = memref.load %arg2[%c111] : memref<144xf32, #tpu.memory_space<smem>>
    %506 = vector.broadcast %505 : f32 to vector<2x256xf32>
    %507 = arith.mulf %506, %492 : vector<2x256xf32>
    %508 = arith.addf %491, %507 : vector<2x256xf32>
    %c240_i32 = arith.constant 240 : i32
    %509 = tpu.dynamic_rotate %0 by %c240_i32 dim 1 : vector<8x256xf32>, i32 -> vector<8x256xf32>
    %510 = vector.extract_strided_slice %1 {offsets = [7, 0], sizes = [1, 256], strides = [1, 1]} : vector<9x256xf32> to vector<1x256xf32>
    %511 = vector.broadcast %510 : vector<1x256xf32> to vector<8x256xf32>
    %512 = arith.mulf %509, %511 : vector<8x256xf32>
    %513 = vector.extract_strided_slice %512 {offsets = [0, 0], sizes = [2, 256], strides = [1, 1]} : vector<8x256xf32> to vector<2x256xf32>
    %c112 = arith.constant 112 : index
    %514 = memref.load %arg2[%c112] : memref<144xf32, #tpu.memory_space<smem>>
    %515 = vector.broadcast %514 : f32 to vector<2x256xf32>
    %516 = arith.mulf %515, %513 : vector<2x256xf32>
    %517 = arith.addf %496, %516 : vector<2x256xf32>
    %c113 = arith.constant 113 : index
    %518 = memref.load %arg2[%c113] : memref<144xf32, #tpu.memory_space<smem>>
    %519 = vector.broadcast %518 : f32 to vector<2x256xf32>
    %520 = arith.mulf %519, %513 : vector<2x256xf32>
    %521 = arith.addf %500, %520 : vector<2x256xf32>
    %c114 = arith.constant 114 : index
    %522 = memref.load %arg2[%c114] : memref<144xf32, #tpu.memory_space<smem>>
    %523 = vector.broadcast %522 : f32 to vector<2x256xf32>
    %524 = arith.mulf %523, %513 : vector<2x256xf32>
    %525 = arith.addf %504, %524 : vector<2x256xf32>
    %c115 = arith.constant 115 : index
    %526 = memref.load %arg2[%c115] : memref<144xf32, #tpu.memory_space<smem>>
    %527 = vector.broadcast %526 : f32 to vector<2x256xf32>
    %528 = arith.mulf %527, %513 : vector<2x256xf32>
    %529 = arith.addf %508, %528 : vector<2x256xf32>
    %530 = vector.extract_strided_slice %512 {offsets = [2, 0], sizes = [2, 256], strides = [1, 1]} : vector<8x256xf32> to vector<2x256xf32>
    %c116 = arith.constant 116 : index
    %531 = memref.load %arg2[%c116] : memref<144xf32, #tpu.memory_space<smem>>
    %532 = vector.broadcast %531 : f32 to vector<2x256xf32>
    %533 = arith.mulf %532, %530 : vector<2x256xf32>
    %534 = arith.addf %517, %533 : vector<2x256xf32>
    %c117 = arith.constant 117 : index
    %535 = memref.load %arg2[%c117] : memref<144xf32, #tpu.memory_space<smem>>
    %536 = vector.broadcast %535 : f32 to vector<2x256xf32>
    %537 = arith.mulf %536, %530 : vector<2x256xf32>
    %538 = arith.addf %521, %537 : vector<2x256xf32>
    %c118 = arith.constant 118 : index
    %539 = memref.load %arg2[%c118] : memref<144xf32, #tpu.memory_space<smem>>
    %540 = vector.broadcast %539 : f32 to vector<2x256xf32>
    %541 = arith.mulf %540, %530 : vector<2x256xf32>
    %542 = arith.addf %525, %541 : vector<2x256xf32>
    %c119 = arith.constant 119 : index
    %543 = memref.load %arg2[%c119] : memref<144xf32, #tpu.memory_space<smem>>
    %544 = vector.broadcast %543 : f32 to vector<2x256xf32>
    %545 = arith.mulf %544, %530 : vector<2x256xf32>
    %546 = arith.addf %529, %545 : vector<2x256xf32>
    %547 = vector.extract_strided_slice %512 {offsets = [4, 0], sizes = [2, 256], strides = [1, 1]} : vector<8x256xf32> to vector<2x256xf32>
    %c120 = arith.constant 120 : index
    %548 = memref.load %arg2[%c120] : memref<144xf32, #tpu.memory_space<smem>>
    %549 = vector.broadcast %548 : f32 to vector<2x256xf32>
    %550 = arith.mulf %549, %547 : vector<2x256xf32>
    %551 = arith.addf %534, %550 : vector<2x256xf32>
    %c121 = arith.constant 121 : index
    %552 = memref.load %arg2[%c121] : memref<144xf32, #tpu.memory_space<smem>>
    %553 = vector.broadcast %552 : f32 to vector<2x256xf32>
    %554 = arith.mulf %553, %547 : vector<2x256xf32>
    %555 = arith.addf %538, %554 : vector<2x256xf32>
    %c122 = arith.constant 122 : index
    %556 = memref.load %arg2[%c122] : memref<144xf32, #tpu.memory_space<smem>>
    %557 = vector.broadcast %556 : f32 to vector<2x256xf32>
    %558 = arith.mulf %557, %547 : vector<2x256xf32>
    %559 = arith.addf %542, %558 : vector<2x256xf32>
    %c123 = arith.constant 123 : index
    %560 = memref.load %arg2[%c123] : memref<144xf32, #tpu.memory_space<smem>>
    %561 = vector.broadcast %560 : f32 to vector<2x256xf32>
    %562 = arith.mulf %561, %547 : vector<2x256xf32>
    %563 = arith.addf %546, %562 : vector<2x256xf32>
    %564 = vector.extract_strided_slice %512 {offsets = [6, 0], sizes = [2, 256], strides = [1, 1]} : vector<8x256xf32> to vector<2x256xf32>
    %c124 = arith.constant 124 : index
    %565 = memref.load %arg2[%c124] : memref<144xf32, #tpu.memory_space<smem>>
    %566 = vector.broadcast %565 : f32 to vector<2x256xf32>
    %567 = arith.mulf %566, %564 : vector<2x256xf32>
    %568 = arith.addf %551, %567 : vector<2x256xf32>
    %c125 = arith.constant 125 : index
    %569 = memref.load %arg2[%c125] : memref<144xf32, #tpu.memory_space<smem>>
    %570 = vector.broadcast %569 : f32 to vector<2x256xf32>
    %571 = arith.mulf %570, %564 : vector<2x256xf32>
    %572 = arith.addf %555, %571 : vector<2x256xf32>
    %c126 = arith.constant 126 : index
    %573 = memref.load %arg2[%c126] : memref<144xf32, #tpu.memory_space<smem>>
    %574 = vector.broadcast %573 : f32 to vector<2x256xf32>
    %575 = arith.mulf %574, %564 : vector<2x256xf32>
    %576 = arith.addf %559, %575 : vector<2x256xf32>
    %c127 = arith.constant 127 : index
    %577 = memref.load %arg2[%c127] : memref<144xf32, #tpu.memory_space<smem>>
    %578 = vector.broadcast %577 : f32 to vector<2x256xf32>
    %579 = arith.mulf %578, %564 : vector<2x256xf32>
    %580 = arith.addf %563, %579 : vector<2x256xf32>
    %c239_i32 = arith.constant 239 : i32
    %581 = tpu.dynamic_rotate %0 by %c239_i32 dim 1 : vector<8x256xf32>, i32 -> vector<8x256xf32>
    %582 = vector.extract_strided_slice %1 {offsets = [8, 0], sizes = [1, 256], strides = [1, 1]} : vector<9x256xf32> to vector<1x256xf32>
    %583 = vector.broadcast %582 : vector<1x256xf32> to vector<8x256xf32>
    %584 = arith.mulf %581, %583 : vector<8x256xf32>
    %585 = vector.extract_strided_slice %584 {offsets = [0, 0], sizes = [2, 256], strides = [1, 1]} : vector<8x256xf32> to vector<2x256xf32>
    %c128 = arith.constant 128 : index
    %586 = memref.load %arg2[%c128] : memref<144xf32, #tpu.memory_space<smem>>
    %587 = vector.broadcast %586 : f32 to vector<2x256xf32>
    %588 = arith.mulf %587, %585 : vector<2x256xf32>
    %589 = arith.addf %568, %588 : vector<2x256xf32>
    %c129 = arith.constant 129 : index
    %590 = memref.load %arg2[%c129] : memref<144xf32, #tpu.memory_space<smem>>
    %591 = vector.broadcast %590 : f32 to vector<2x256xf32>
    %592 = arith.mulf %591, %585 : vector<2x256xf32>
    %593 = arith.addf %572, %592 : vector<2x256xf32>
    %c130 = arith.constant 130 : index
    %594 = memref.load %arg2[%c130] : memref<144xf32, #tpu.memory_space<smem>>
    %595 = vector.broadcast %594 : f32 to vector<2x256xf32>
    %596 = arith.mulf %595, %585 : vector<2x256xf32>
    %597 = arith.addf %576, %596 : vector<2x256xf32>
    %c131 = arith.constant 131 : index
    %598 = memref.load %arg2[%c131] : memref<144xf32, #tpu.memory_space<smem>>
    %599 = vector.broadcast %598 : f32 to vector<2x256xf32>
    %600 = arith.mulf %599, %585 : vector<2x256xf32>
    %601 = arith.addf %580, %600 : vector<2x256xf32>
    %602 = vector.extract_strided_slice %584 {offsets = [2, 0], sizes = [2, 256], strides = [1, 1]} : vector<8x256xf32> to vector<2x256xf32>
    %c132 = arith.constant 132 : index
    %603 = memref.load %arg2[%c132] : memref<144xf32, #tpu.memory_space<smem>>
    %604 = vector.broadcast %603 : f32 to vector<2x256xf32>
    %605 = arith.mulf %604, %602 : vector<2x256xf32>
    %606 = arith.addf %589, %605 : vector<2x256xf32>
    %c133 = arith.constant 133 : index
    %607 = memref.load %arg2[%c133] : memref<144xf32, #tpu.memory_space<smem>>
    %608 = vector.broadcast %607 : f32 to vector<2x256xf32>
    %609 = arith.mulf %608, %602 : vector<2x256xf32>
    %610 = arith.addf %593, %609 : vector<2x256xf32>
    %c134 = arith.constant 134 : index
    %611 = memref.load %arg2[%c134] : memref<144xf32, #tpu.memory_space<smem>>
    %612 = vector.broadcast %611 : f32 to vector<2x256xf32>
    %613 = arith.mulf %612, %602 : vector<2x256xf32>
    %614 = arith.addf %597, %613 : vector<2x256xf32>
    %c135 = arith.constant 135 : index
    %615 = memref.load %arg2[%c135] : memref<144xf32, #tpu.memory_space<smem>>
    %616 = vector.broadcast %615 : f32 to vector<2x256xf32>
    %617 = arith.mulf %616, %602 : vector<2x256xf32>
    %618 = arith.addf %601, %617 : vector<2x256xf32>
    %619 = vector.extract_strided_slice %584 {offsets = [4, 0], sizes = [2, 256], strides = [1, 1]} : vector<8x256xf32> to vector<2x256xf32>
    %c136 = arith.constant 136 : index
    %620 = memref.load %arg2[%c136] : memref<144xf32, #tpu.memory_space<smem>>
    %621 = vector.broadcast %620 : f32 to vector<2x256xf32>
    %622 = arith.mulf %621, %619 : vector<2x256xf32>
    %623 = arith.addf %606, %622 : vector<2x256xf32>
    %c137 = arith.constant 137 : index
    %624 = memref.load %arg2[%c137] : memref<144xf32, #tpu.memory_space<smem>>
    %625 = vector.broadcast %624 : f32 to vector<2x256xf32>
    %626 = arith.mulf %625, %619 : vector<2x256xf32>
    %627 = arith.addf %610, %626 : vector<2x256xf32>
    %c138 = arith.constant 138 : index
    %628 = memref.load %arg2[%c138] : memref<144xf32, #tpu.memory_space<smem>>
    %629 = vector.broadcast %628 : f32 to vector<2x256xf32>
    %630 = arith.mulf %629, %619 : vector<2x256xf32>
    %631 = arith.addf %614, %630 : vector<2x256xf32>
    %c139 = arith.constant 139 : index
    %632 = memref.load %arg2[%c139] : memref<144xf32, #tpu.memory_space<smem>>
    %633 = vector.broadcast %632 : f32 to vector<2x256xf32>
    %634 = arith.mulf %633, %619 : vector<2x256xf32>
    %635 = arith.addf %618, %634 : vector<2x256xf32>
    %636 = vector.extract_strided_slice %584 {offsets = [6, 0], sizes = [2, 256], strides = [1, 1]} : vector<8x256xf32> to vector<2x256xf32>
    %c140 = arith.constant 140 : index
    %637 = memref.load %arg2[%c140] : memref<144xf32, #tpu.memory_space<smem>>
    %638 = vector.broadcast %637 : f32 to vector<2x256xf32>
    %639 = arith.mulf %638, %636 : vector<2x256xf32>
    %640 = arith.addf %623, %639 : vector<2x256xf32>
    %c141 = arith.constant 141 : index
    %641 = memref.load %arg2[%c141] : memref<144xf32, #tpu.memory_space<smem>>
    %642 = vector.broadcast %641 : f32 to vector<2x256xf32>
    %643 = arith.mulf %642, %636 : vector<2x256xf32>
    %644 = arith.addf %627, %643 : vector<2x256xf32>
    %c142 = arith.constant 142 : index
    %645 = memref.load %arg2[%c142] : memref<144xf32, #tpu.memory_space<smem>>
    %646 = vector.broadcast %645 : f32 to vector<2x256xf32>
    %647 = arith.mulf %646, %636 : vector<2x256xf32>
    %648 = arith.addf %631, %647 : vector<2x256xf32>
    %c143 = arith.constant 143 : index
    %649 = memref.load %arg2[%c143] : memref<144xf32, #tpu.memory_space<smem>>
    %650 = vector.broadcast %649 : f32 to vector<2x256xf32>
    %651 = arith.mulf %650, %636 : vector<2x256xf32>
    %652 = arith.addf %635, %651 : vector<2x256xf32>
    %c0_7 = arith.constant 0 : index
    %653 = memref.load %arg3[%c0_7] : memref<4xf32, #tpu.memory_space<smem>>
    %654 = vector.broadcast %653 : f32 to vector<2x256xf32>
    %655 = arith.addf %640, %654 : vector<2x256xf32>
    %c1_8 = arith.constant 1 : index
    %656 = memref.load %arg3[%c1_8] : memref<4xf32, #tpu.memory_space<smem>>
    %657 = vector.broadcast %656 : f32 to vector<2x256xf32>
    %658 = arith.addf %644, %657 : vector<2x256xf32>
    %c2_9 = arith.constant 2 : index
    %659 = memref.load %arg3[%c2_9] : memref<4xf32, #tpu.memory_space<smem>>
    %660 = vector.broadcast %659 : f32 to vector<2x256xf32>
    %661 = arith.addf %648, %660 : vector<2x256xf32>
    %c3_10 = arith.constant 3 : index
    %662 = memref.load %arg3[%c3_10] : memref<4xf32, #tpu.memory_space<smem>>
    %663 = vector.broadcast %662 : f32 to vector<2x256xf32>
    %664 = arith.addf %652, %663 : vector<2x256xf32>
    %665 = vector.shape_cast %655 : vector<2x256xf32> to vector<1x2x256xf32>
    %cst_11 = arith.constant dense<0.000000e+00> : vector<1xf32>
    %666 = vector.multi_reduction <add>, %665, %cst_11 [1, 2] : vector<1x2x256xf32> to vector<1xf32>
    %667 = vector.shape_cast %666 : vector<1xf32> to vector<1x1x1xf32>
    %668 = vector.extract %667[0, 0, 0] : f32 from vector<1x1x1xf32>
    %cst_12 = arith.constant 0.001953125 : f32
    %669 = arith.mulf %668, %cst_12 : f32
    %670 = vector.broadcast %669 : f32 to vector<2x256xf32>
    %671 = arith.subf %655, %670 : vector<2x256xf32>
    %672 = arith.mulf %671, %671 : vector<2x256xf32>
    %673 = vector.shape_cast %672 : vector<2x256xf32> to vector<1x2x256xf32>
    %cst_13 = arith.constant dense<0.000000e+00> : vector<1xf32>
    %674 = vector.multi_reduction <add>, %673, %cst_13 [1, 2] : vector<1x2x256xf32> to vector<1xf32>
    %675 = vector.shape_cast %674 : vector<1xf32> to vector<1x1x1xf32>
    %676 = vector.extract %675[0, 0, 0] : f32 from vector<1x1x1xf32>
    %cst_14 = arith.constant 0.001953125 : f32
    %677 = arith.mulf %676, %cst_14 : f32
    %678 = vector.broadcast %669 : f32 to vector<2x256xf32>
    %679 = arith.subf %655, %678 : vector<2x256xf32>
    %cst_15 = arith.constant 9.99999974E-6 : f32
    %680 = arith.addf %677, %cst_15 : f32
    %681 = math.rsqrt %680 : f32
    %c0_16 = arith.constant 0 : index
    %682 = memref.load %arg4[%c0_16] : memref<4xf32, #tpu.memory_space<smem>>
    %683 = arith.mulf %681, %682 : f32
    %684 = vector.broadcast %683 : f32 to vector<2x256xf32>
    %685 = arith.mulf %679, %684 : vector<2x256xf32>
    %c0_17 = arith.constant 0 : index
    %686 = memref.load %arg5[%c0_17] : memref<4xf32, #tpu.memory_space<smem>>
    %687 = vector.broadcast %686 : f32 to vector<2x256xf32>
    %688 = arith.addf %685, %687 : vector<2x256xf32>
    %cst_18 = arith.constant 0.000000e+00 : f32
    %689 = vector.broadcast %cst_18 : f32 to vector<2x256xf32>
    %690 = arith.cmpf oge, %688, %689 : vector<2x256xf32>
    %cst_19 = arith.constant 0.00999999977 : f32
    %691 = vector.broadcast %cst_19 : f32 to vector<2x256xf32>
    %692 = arith.mulf %691, %688 : vector<2x256xf32>
    %693 = arith.select %690, %688, %692 : vector<2x256xi1>, vector<2x256xf32>
    %c0_20 = arith.constant 0 : index
    %c0_21 = arith.constant 0 : index
    %694 = vector.load %arg11[%c0_20, %c0_21] : memref<8x256xf32, #tpu.memory_space<vmem>>, vector<2x256xf32>
    tpu.vector_store %arg11[%c0_20, %c0_21], %693 {strides = array<i32>} : memref<8x256xf32, #tpu.memory_space<vmem>>, vector<2x256xf32>,
    %695 = vector.shape_cast %658 : vector<2x256xf32> to vector<1x2x256xf32>
    %cst_22 = arith.constant dense<0.000000e+00> : vector<1xf32>
    %696 = vector.multi_reduction <add>, %695, %cst_22 [1, 2] : vector<1x2x256xf32> to vector<1xf32>
    %697 = vector.shape_cast %696 : vector<1xf32> to vector<1x1x1xf32>
    %698 = vector.extract %697[0, 0, 0] : f32 from vector<1x1x1xf32>
    %cst_23 = arith.constant 0.001953125 : f32
    %699 = arith.mulf %698, %cst_23 : f32
    %700 = vector.broadcast %699 : f32 to vector<2x256xf32>
    %701 = arith.subf %658, %700 : vector<2x256xf32>
    %702 = arith.mulf %701, %701 : vector<2x256xf32>
    %703 = vector.shape_cast %702 : vector<2x256xf32> to vector<1x2x256xf32>
    %cst_24 = arith.constant dense<0.000000e+00> : vector<1xf32>
    %704 = vector.multi_reduction <add>, %703, %cst_24 [1, 2] : vector<1x2x256xf32> to vector<1xf32>
    %705 = vector.shape_cast %704 : vector<1xf32> to vector<1x1x1xf32>
    %706 = vector.extract %705[0, 0, 0] : f32 from vector<1x1x1xf32>
    %cst_25 = arith.constant 0.001953125 : f32
    %707 = arith.mulf %706, %cst_25 : f32
    %708 = vector.broadcast %699 : f32 to vector<2x256xf32>
    %709 = arith.subf %658, %708 : vector<2x256xf32>
    %cst_26 = arith.constant 9.99999974E-6 : f32
    %710 = arith.addf %707, %cst_26 : f32
    %711 = math.rsqrt %710 : f32
    %c1_27 = arith.constant 1 : index
    %712 = memref.load %arg4[%c1_27] : memref<4xf32, #tpu.memory_space<smem>>
    %713 = arith.mulf %711, %712 : f32
    %714 = vector.broadcast %713 : f32 to vector<2x256xf32>
    %715 = arith.mulf %709, %714 : vector<2x256xf32>
    %c1_28 = arith.constant 1 : index
    %716 = memref.load %arg5[%c1_28] : memref<4xf32, #tpu.memory_space<smem>>
    %717 = vector.broadcast %716 : f32 to vector<2x256xf32>
    %718 = arith.addf %715, %717 : vector<2x256xf32>
    %cst_29 = arith.constant 0.000000e+00 : f32
    %719 = vector.broadcast %cst_29 : f32 to vector<2x256xf32>
    %720 = arith.cmpf oge, %718, %719 : vector<2x256xf32>
    %cst_30 = arith.constant 0.00999999977 : f32
    %721 = vector.broadcast %cst_30 : f32 to vector<2x256xf32>
    %722 = arith.mulf %721, %718 : vector<2x256xf32>
    %723 = arith.select %720, %718, %722 : vector<2x256xi1>, vector<2x256xf32>
    %c2_31 = arith.constant 2 : index
    %c0_32 = arith.constant 0 : index
    %724 = vector.load %arg11[%c2_31, %c0_32] : memref<8x256xf32, #tpu.memory_space<vmem>>, vector<2x256xf32>
    tpu.vector_store %arg11[%c2_31, %c0_32], %723 {strides = array<i32>} : memref<8x256xf32, #tpu.memory_space<vmem>>, vector<2x256xf32>,
    %725 = vector.shape_cast %661 : vector<2x256xf32> to vector<1x2x256xf32>
    %cst_33 = arith.constant dense<0.000000e+00> : vector<1xf32>
    %726 = vector.multi_reduction <add>, %725, %cst_33 [1, 2] : vector<1x2x256xf32> to vector<1xf32>
    %727 = vector.shape_cast %726 : vector<1xf32> to vector<1x1x1xf32>
    %728 = vector.extract %727[0, 0, 0] : f32 from vector<1x1x1xf32>
    %cst_34 = arith.constant 0.001953125 : f32
    %729 = arith.mulf %728, %cst_34 : f32
    %730 = vector.broadcast %729 : f32 to vector<2x256xf32>
    %731 = arith.subf %661, %730 : vector<2x256xf32>
    %732 = arith.mulf %731, %731 : vector<2x256xf32>
    %733 = vector.shape_cast %732 : vector<2x256xf32> to vector<1x2x256xf32>
    %cst_35 = arith.constant dense<0.000000e+00> : vector<1xf32>
    %734 = vector.multi_reduction <add>, %733, %cst_35 [1, 2] : vector<1x2x256xf32> to vector<1xf32>
    %735 = vector.shape_cast %734 : vector<1xf32> to vector<1x1x1xf32>
    %736 = vector.extract %735[0, 0, 0] : f32 from vector<1x1x1xf32>
    %cst_36 = arith.constant 0.001953125 : f32
    %737 = arith.mulf %736, %cst_36 : f32
    %738 = vector.broadcast %729 : f32 to vector<2x256xf32>
    %739 = arith.subf %661, %738 : vector<2x256xf32>
    %cst_37 = arith.constant 9.99999974E-6 : f32
    %740 = arith.addf %737, %cst_37 : f32
    %741 = math.rsqrt %740 : f32
    %c2_38 = arith.constant 2 : index
    %742 = memref.load %arg4[%c2_38] : memref<4xf32, #tpu.memory_space<smem>>
    %743 = arith.mulf %741, %742 : f32
    %744 = vector.broadcast %743 : f32 to vector<2x256xf32>
    %745 = arith.mulf %739, %744 : vector<2x256xf32>
    %c2_39 = arith.constant 2 : index
    %746 = memref.load %arg5[%c2_39] : memref<4xf32, #tpu.memory_space<smem>>
    %747 = vector.broadcast %746 : f32 to vector<2x256xf32>
    %748 = arith.addf %745, %747 : vector<2x256xf32>
    %cst_40 = arith.constant 0.000000e+00 : f32
    %749 = vector.broadcast %cst_40 : f32 to vector<2x256xf32>
    %750 = arith.cmpf oge, %748, %749 : vector<2x256xf32>
    %cst_41 = arith.constant 0.00999999977 : f32
    %751 = vector.broadcast %cst_41 : f32 to vector<2x256xf32>
    %752 = arith.mulf %751, %748 : vector<2x256xf32>
    %753 = arith.select %750, %748, %752 : vector<2x256xi1>, vector<2x256xf32>
    %c4_42 = arith.constant 4 : index
    %c0_43 = arith.constant 0 : index
    %754 = vector.load %arg11[%c4_42, %c0_43] : memref<8x256xf32, #tpu.memory_space<vmem>>, vector<2x256xf32>
    tpu.vector_store %arg11[%c4_42, %c0_43], %753 {strides = array<i32>} : memref<8x256xf32, #tpu.memory_space<vmem>>, vector<2x256xf32>,
    %755 = vector.shape_cast %664 : vector<2x256xf32> to vector<1x2x256xf32>
    %cst_44 = arith.constant dense<0.000000e+00> : vector<1xf32>
    %756 = vector.multi_reduction <add>, %755, %cst_44 [1, 2] : vector<1x2x256xf32> to vector<1xf32>
    %757 = vector.shape_cast %756 : vector<1xf32> to vector<1x1x1xf32>
    %758 = vector.extract %757[0, 0, 0] : f32 from vector<1x1x1xf32>
    %cst_45 = arith.constant 0.001953125 : f32
    %759 = arith.mulf %758, %cst_45 : f32
    %760 = vector.broadcast %759 : f32 to vector<2x256xf32>
    %761 = arith.subf %664, %760 : vector<2x256xf32>
    %762 = arith.mulf %761, %761 : vector<2x256xf32>
    %763 = vector.shape_cast %762 : vector<2x256xf32> to vector<1x2x256xf32>
    %cst_46 = arith.constant dense<0.000000e+00> : vector<1xf32>
    %764 = vector.multi_reduction <add>, %763, %cst_46 [1, 2] : vector<1x2x256xf32> to vector<1xf32>
    %765 = vector.shape_cast %764 : vector<1xf32> to vector<1x1x1xf32>
    %766 = vector.extract %765[0, 0, 0] : f32 from vector<1x1x1xf32>
    %cst_47 = arith.constant 0.001953125 : f32
    %767 = arith.mulf %766, %cst_47 : f32
    %768 = vector.broadcast %759 : f32 to vector<2x256xf32>
    %769 = arith.subf %664, %768 : vector<2x256xf32>
    %cst_48 = arith.constant 9.99999974E-6 : f32
    %770 = arith.addf %767, %cst_48 : f32
    %771 = math.rsqrt %770 : f32
    %c3_49 = arith.constant 3 : index
    %772 = memref.load %arg4[%c3_49] : memref<4xf32, #tpu.memory_space<smem>>
    %773 = arith.mulf %771, %772 : f32
    %774 = vector.broadcast %773 : f32 to vector<2x256xf32>
    %775 = arith.mulf %769, %774 : vector<2x256xf32>
    %c3_50 = arith.constant 3 : index
    %776 = memref.load %arg5[%c3_50] : memref<4xf32, #tpu.memory_space<smem>>
    %777 = vector.broadcast %776 : f32 to vector<2x256xf32>
    %778 = arith.addf %775, %777 : vector<2x256xf32>
    %cst_51 = arith.constant 0.000000e+00 : f32
    %779 = vector.broadcast %cst_51 : f32 to vector<2x256xf32>
    %780 = arith.cmpf oge, %778, %779 : vector<2x256xf32>
    %cst_52 = arith.constant 0.00999999977 : f32
    %781 = vector.broadcast %cst_52 : f32 to vector<2x256xf32>
    %782 = arith.mulf %781, %778 : vector<2x256xf32>
    %783 = arith.select %780, %778, %782 : vector<2x256xi1>, vector<2x256xf32>
    %c6_53 = arith.constant 6 : index
    %c0_54 = arith.constant 0 : index
    %784 = vector.load %arg11[%c6_53, %c0_54] : memref<8x256xf32, #tpu.memory_space<vmem>>, vector<2x256xf32>
    tpu.vector_store %arg11[%c6_53, %c0_54], %783 {strides = array<i32>} : memref<8x256xf32, #tpu.memory_space<vmem>>, vector<2x256xf32>,
    %c0_55 = arith.constant 0 : index
    %c0_56 = arith.constant 0 : index
    %785 = vector.load %arg11[%c0_55, %c0_56] : memref<8x256xf32, #tpu.memory_space<vmem>>, vector<8x256xf32>
    %cst_57 = arith.constant 0.000000e+00 : f32
    %786 = vector.broadcast %cst_57 : f32 to vector<2x256xf32>
    %cst_58 = arith.constant 0.000000e+00 : f32
    %787 = vector.broadcast %cst_58 : f32 to vector<2x256xf32>
    %cst_59 = arith.constant 0.000000e+00 : f32
    %788 = vector.broadcast %cst_59 : f32 to vector<2x256xf32>
    %cst_60 = arith.constant 0.000000e+00 : f32
    %789 = vector.broadcast %cst_60 : f32 to vector<2x256xf32>
    %c17_i32_61 = arith.constant 17 : i32
    %790 = tpu.dynamic_rotate %785 by %c17_i32_61 dim 1 : vector<8x256xf32>, i32 -> vector<8x256xf32>
    %791 = vector.extract_strided_slice %1 {offsets = [0, 0], sizes = [1, 256], strides = [1, 1]} : vector<9x256xf32> to vector<1x256xf32>
    %792 = vector.broadcast %791 : vector<1x256xf32> to vector<8x256xf32>
    %793 = arith.mulf %790, %792 : vector<8x256xf32>
    %794 = vector.extract_strided_slice %793 {offsets = [0, 0], sizes = [2, 256], strides = [1, 1]} : vector<8x256xf32> to vector<2x256xf32>
    %c0_62 = arith.constant 0 : index
    %795 = memref.load %arg6[%c0_62] : memref<144xf32, #tpu.memory_space<smem>>
    %796 = vector.broadcast %795 : f32 to vector<2x256xf32>
    %797 = arith.mulf %796, %794 : vector<2x256xf32>
    %798 = arith.addf %786, %797 : vector<2x256xf32>
    %c1_63 = arith.constant 1 : index
    %799 = memref.load %arg6[%c1_63] : memref<144xf32, #tpu.memory_space<smem>>
    %800 = vector.broadcast %799 : f32 to vector<2x256xf32>
    %801 = arith.mulf %800, %794 : vector<2x256xf32>
    %802 = arith.addf %787, %801 : vector<2x256xf32>
    %c2_64 = arith.constant 2 : index
    %803 = memref.load %arg6[%c2_64] : memref<144xf32, #tpu.memory_space<smem>>
    %804 = vector.broadcast %803 : f32 to vector<2x256xf32>
    %805 = arith.mulf %804, %794 : vector<2x256xf32>
    %806 = arith.addf %788, %805 : vector<2x256xf32>
    %c3_65 = arith.constant 3 : index
    %807 = memref.load %arg6[%c3_65] : memref<144xf32, #tpu.memory_space<smem>>
    %808 = vector.broadcast %807 : f32 to vector<2x256xf32>
    %809 = arith.mulf %808, %794 : vector<2x256xf32>
    %810 = arith.addf %789, %809 : vector<2x256xf32>
    %811 = vector.extract_strided_slice %793 {offsets = [2, 0], sizes = [2, 256], strides = [1, 1]} : vector<8x256xf32> to vector<2x256xf32>
    %c4_66 = arith.constant 4 : index
    %812 = memref.load %arg6[%c4_66] : memref<144xf32, #tpu.memory_space<smem>>
    %813 = vector.broadcast %812 : f32 to vector<2x256xf32>
    %814 = arith.mulf %813, %811 : vector<2x256xf32>
    %815 = arith.addf %798, %814 : vector<2x256xf32>
    %c5_67 = arith.constant 5 : index
    %816 = memref.load %arg6[%c5_67] : memref<144xf32, #tpu.memory_space<smem>>
    %817 = vector.broadcast %816 : f32 to vector<2x256xf32>
    %818 = arith.mulf %817, %811 : vector<2x256xf32>
    %819 = arith.addf %802, %818 : vector<2x256xf32>
    %c6_68 = arith.constant 6 : index
    %820 = memref.load %arg6[%c6_68] : memref<144xf32, #tpu.memory_space<smem>>
    %821 = vector.broadcast %820 : f32 to vector<2x256xf32>
    %822 = arith.mulf %821, %811 : vector<2x256xf32>
    %823 = arith.addf %806, %822 : vector<2x256xf32>
    %c7_69 = arith.constant 7 : index
    %824 = memref.load %arg6[%c7_69] : memref<144xf32, #tpu.memory_space<smem>>
    %825 = vector.broadcast %824 : f32 to vector<2x256xf32>
    %826 = arith.mulf %825, %811 : vector<2x256xf32>
    %827 = arith.addf %810, %826 : vector<2x256xf32>
    %828 = vector.extract_strided_slice %793 {offsets = [4, 0], sizes = [2, 256], strides = [1, 1]} : vector<8x256xf32> to vector<2x256xf32>
    %c8_70 = arith.constant 8 : index
    %829 = memref.load %arg6[%c8_70] : memref<144xf32, #tpu.memory_space<smem>>
    %830 = vector.broadcast %829 : f32 to vector<2x256xf32>
    %831 = arith.mulf %830, %828 : vector<2x256xf32>
    %832 = arith.addf %815, %831 : vector<2x256xf32>
    %c9_71 = arith.constant 9 : index
    %833 = memref.load %arg6[%c9_71] : memref<144xf32, #tpu.memory_space<smem>>
    %834 = vector.broadcast %833 : f32 to vector<2x256xf32>
    %835 = arith.mulf %834, %828 : vector<2x256xf32>
    %836 = arith.addf %819, %835 : vector<2x256xf32>
    %c10_72 = arith.constant 10 : index
    %837 = memref.load %arg6[%c10_72] : memref<144xf32, #tpu.memory_space<smem>>
    %838 = vector.broadcast %837 : f32 to vector<2x256xf32>
    %839 = arith.mulf %838, %828 : vector<2x256xf32>
    %840 = arith.addf %823, %839 : vector<2x256xf32>
    %c11_73 = arith.constant 11 : index
    %841 = memref.load %arg6[%c11_73] : memref<144xf32, #tpu.memory_space<smem>>
    %842 = vector.broadcast %841 : f32 to vector<2x256xf32>
    %843 = arith.mulf %842, %828 : vector<2x256xf32>
    %844 = arith.addf %827, %843 : vector<2x256xf32>
    %845 = vector.extract_strided_slice %793 {offsets = [6, 0], sizes = [2, 256], strides = [1, 1]} : vector<8x256xf32> to vector<2x256xf32>
    %c12_74 = arith.constant 12 : index
    %846 = memref.load %arg6[%c12_74] : memref<144xf32, #tpu.memory_space<smem>>
    %847 = vector.broadcast %846 : f32 to vector<2x256xf32>
    %848 = arith.mulf %847, %845 : vector<2x256xf32>
    %849 = arith.addf %832, %848 : vector<2x256xf32>
    %c13_75 = arith.constant 13 : index
    %850 = memref.load %arg6[%c13_75] : memref<144xf32, #tpu.memory_space<smem>>
    %851 = vector.broadcast %850 : f32 to vector<2x256xf32>
    %852 = arith.mulf %851, %845 : vector<2x256xf32>
    %853 = arith.addf %836, %852 : vector<2x256xf32>
    %c14_76 = arith.constant 14 : index
    %854 = memref.load %arg6[%c14_76] : memref<144xf32, #tpu.memory_space<smem>>
    %855 = vector.broadcast %854 : f32 to vector<2x256xf32>
    %856 = arith.mulf %855, %845 : vector<2x256xf32>
    %857 = arith.addf %840, %856 : vector<2x256xf32>
    %c15_77 = arith.constant 15 : index
    %858 = memref.load %arg6[%c15_77] : memref<144xf32, #tpu.memory_space<smem>>
    %859 = vector.broadcast %858 : f32 to vector<2x256xf32>
    %860 = arith.mulf %859, %845 : vector<2x256xf32>
    %861 = arith.addf %844, %860 : vector<2x256xf32>
    %c16_i32_78 = arith.constant 16 : i32
    %862 = tpu.dynamic_rotate %785 by %c16_i32_78 dim 1 : vector<8x256xf32>, i32 -> vector<8x256xf32>
    %863 = vector.extract_strided_slice %1 {offsets = [1, 0], sizes = [1, 256], strides = [1, 1]} : vector<9x256xf32> to vector<1x256xf32>
    %864 = vector.broadcast %863 : vector<1x256xf32> to vector<8x256xf32>
    %865 = arith.mulf %862, %864 : vector<8x256xf32>
    %866 = vector.extract_strided_slice %865 {offsets = [0, 0], sizes = [2, 256], strides = [1, 1]} : vector<8x256xf32> to vector<2x256xf32>
    %c16_79 = arith.constant 16 : index
    %867 = memref.load %arg6[%c16_79] : memref<144xf32, #tpu.memory_space<smem>>
    %868 = vector.broadcast %867 : f32 to vector<2x256xf32>
    %869 = arith.mulf %868, %866 : vector<2x256xf32>
    %870 = arith.addf %849, %869 : vector<2x256xf32>
    %c17_80 = arith.constant 17 : index
    %871 = memref.load %arg6[%c17_80] : memref<144xf32, #tpu.memory_space<smem>>
    %872 = vector.broadcast %871 : f32 to vector<2x256xf32>
    %873 = arith.mulf %872, %866 : vector<2x256xf32>
    %874 = arith.addf %853, %873 : vector<2x256xf32>
    %c18_81 = arith.constant 18 : index
    %875 = memref.load %arg6[%c18_81] : memref<144xf32, #tpu.memory_space<smem>>
    %876 = vector.broadcast %875 : f32 to vector<2x256xf32>
    %877 = arith.mulf %876, %866 : vector<2x256xf32>
    %878 = arith.addf %857, %877 : vector<2x256xf32>
    %c19_82 = arith.constant 19 : index
    %879 = memref.load %arg6[%c19_82] : memref<144xf32, #tpu.memory_space<smem>>
    %880 = vector.broadcast %879 : f32 to vector<2x256xf32>
    %881 = arith.mulf %880, %866 : vector<2x256xf32>
    %882 = arith.addf %861, %881 : vector<2x256xf32>
    %883 = vector.extract_strided_slice %865 {offsets = [2, 0], sizes = [2, 256], strides = [1, 1]} : vector<8x256xf32> to vector<2x256xf32>
    %c20_83 = arith.constant 20 : index
    %884 = memref.load %arg6[%c20_83] : memref<144xf32, #tpu.memory_space<smem>>
    %885 = vector.broadcast %884 : f32 to vector<2x256xf32>
    %886 = arith.mulf %885, %883 : vector<2x256xf32>
    %887 = arith.addf %870, %886 : vector<2x256xf32>
    %c21_84 = arith.constant 21 : index
    %888 = memref.load %arg6[%c21_84] : memref<144xf32, #tpu.memory_space<smem>>
    %889 = vector.broadcast %888 : f32 to vector<2x256xf32>
    %890 = arith.mulf %889, %883 : vector<2x256xf32>
    %891 = arith.addf %874, %890 : vector<2x256xf32>
    %c22_85 = arith.constant 22 : index
    %892 = memref.load %arg6[%c22_85] : memref<144xf32, #tpu.memory_space<smem>>
    %893 = vector.broadcast %892 : f32 to vector<2x256xf32>
    %894 = arith.mulf %893, %883 : vector<2x256xf32>
    %895 = arith.addf %878, %894 : vector<2x256xf32>
    %c23_86 = arith.constant 23 : index
    %896 = memref.load %arg6[%c23_86] : memref<144xf32, #tpu.memory_space<smem>>
    %897 = vector.broadcast %896 : f32 to vector<2x256xf32>
    %898 = arith.mulf %897, %883 : vector<2x256xf32>
    %899 = arith.addf %882, %898 : vector<2x256xf32>
    %900 = vector.extract_strided_slice %865 {offsets = [4, 0], sizes = [2, 256], strides = [1, 1]} : vector<8x256xf32> to vector<2x256xf32>
    %c24_87 = arith.constant 24 : index
    %901 = memref.load %arg6[%c24_87] : memref<144xf32, #tpu.memory_space<smem>>
    %902 = vector.broadcast %901 : f32 to vector<2x256xf32>
    %903 = arith.mulf %902, %900 : vector<2x256xf32>
    %904 = arith.addf %887, %903 : vector<2x256xf32>
    %c25_88 = arith.constant 25 : index
    %905 = memref.load %arg6[%c25_88] : memref<144xf32, #tpu.memory_space<smem>>
    %906 = vector.broadcast %905 : f32 to vector<2x256xf32>
    %907 = arith.mulf %906, %900 : vector<2x256xf32>
    %908 = arith.addf %891, %907 : vector<2x256xf32>
    %c26_89 = arith.constant 26 : index
    %909 = memref.load %arg6[%c26_89] : memref<144xf32, #tpu.memory_space<smem>>
    %910 = vector.broadcast %909 : f32 to vector<2x256xf32>
    %911 = arith.mulf %910, %900 : vector<2x256xf32>
    %912 = arith.addf %895, %911 : vector<2x256xf32>
    %c27_90 = arith.constant 27 : index
    %913 = memref.load %arg6[%c27_90] : memref<144xf32, #tpu.memory_space<smem>>
    %914 = vector.broadcast %913 : f32 to vector<2x256xf32>
    %915 = arith.mulf %914, %900 : vector<2x256xf32>
    %916 = arith.addf %899, %915 : vector<2x256xf32>
    %917 = vector.extract_strided_slice %865 {offsets = [6, 0], sizes = [2, 256], strides = [1, 1]} : vector<8x256xf32> to vector<2x256xf32>
    %c28_91 = arith.constant 28 : index
    %918 = memref.load %arg6[%c28_91] : memref<144xf32, #tpu.memory_space<smem>>
    %919 = vector.broadcast %918 : f32 to vector<2x256xf32>
    %920 = arith.mulf %919, %917 : vector<2x256xf32>
    %921 = arith.addf %904, %920 : vector<2x256xf32>
    %c29_92 = arith.constant 29 : index
    %922 = memref.load %arg6[%c29_92] : memref<144xf32, #tpu.memory_space<smem>>
    %923 = vector.broadcast %922 : f32 to vector<2x256xf32>
    %924 = arith.mulf %923, %917 : vector<2x256xf32>
    %925 = arith.addf %908, %924 : vector<2x256xf32>
    %c30_93 = arith.constant 30 : index
    %926 = memref.load %arg6[%c30_93] : memref<144xf32, #tpu.memory_space<smem>>
    %927 = vector.broadcast %926 : f32 to vector<2x256xf32>
    %928 = arith.mulf %927, %917 : vector<2x256xf32>
    %929 = arith.addf %912, %928 : vector<2x256xf32>
    %c31_94 = arith.constant 31 : index
    %930 = memref.load %arg6[%c31_94] : memref<144xf32, #tpu.memory_space<smem>>
    %931 = vector.broadcast %930 : f32 to vector<2x256xf32>
    %932 = arith.mulf %931, %917 : vector<2x256xf32>
    %933 = arith.addf %916, %932 : vector<2x256xf32>
    %c15_i32_95 = arith.constant 15 : i32
    %934 = tpu.dynamic_rotate %785 by %c15_i32_95 dim 1 : vector<8x256xf32>, i32 -> vector<8x256xf32>
    %935 = vector.extract_strided_slice %1 {offsets = [2, 0], sizes = [1, 256], strides = [1, 1]} : vector<9x256xf32> to vector<1x256xf32>
    %936 = vector.broadcast %935 : vector<1x256xf32> to vector<8x256xf32>
    %937 = arith.mulf %934, %936 : vector<8x256xf32>
    %938 = vector.extract_strided_slice %937 {offsets = [0, 0], sizes = [2, 256], strides = [1, 1]} : vector<8x256xf32> to vector<2x256xf32>
    %c32_96 = arith.constant 32 : index
    %939 = memref.load %arg6[%c32_96] : memref<144xf32, #tpu.memory_space<smem>>
    %940 = vector.broadcast %939 : f32 to vector<2x256xf32>
    %941 = arith.mulf %940, %938 : vector<2x256xf32>
    %942 = arith.addf %921, %941 : vector<2x256xf32>
    %c33_97 = arith.constant 33 : index
    %943 = memref.load %arg6[%c33_97] : memref<144xf32, #tpu.memory_space<smem>>
    %944 = vector.broadcast %943 : f32 to vector<2x256xf32>
    %945 = arith.mulf %944, %938 : vector<2x256xf32>
    %946 = arith.addf %925, %945 : vector<2x256xf32>
    %c34_98 = arith.constant 34 : index
    %947 = memref.load %arg6[%c34_98] : memref<144xf32, #tpu.memory_space<smem>>
    %948 = vector.broadcast %947 : f32 to vector<2x256xf32>
    %949 = arith.mulf %948, %938 : vector<2x256xf32>
    %950 = arith.addf %929, %949 : vector<2x256xf32>
    %c35_99 = arith.constant 35 : index
    %951 = memref.load %arg6[%c35_99] : memref<144xf32, #tpu.memory_space<smem>>
    %952 = vector.broadcast %951 : f32 to vector<2x256xf32>
    %953 = arith.mulf %952, %938 : vector<2x256xf32>
    %954 = arith.addf %933, %953 : vector<2x256xf32>
    %955 = vector.extract_strided_slice %937 {offsets = [2, 0], sizes = [2, 256], strides = [1, 1]} : vector<8x256xf32> to vector<2x256xf32>
    %c36_100 = arith.constant 36 : index
    %956 = memref.load %arg6[%c36_100] : memref<144xf32, #tpu.memory_space<smem>>
    %957 = vector.broadcast %956 : f32 to vector<2x256xf32>
    %958 = arith.mulf %957, %955 : vector<2x256xf32>
    %959 = arith.addf %942, %958 : vector<2x256xf32>
    %c37_101 = arith.constant 37 : index
    %960 = memref.load %arg6[%c37_101] : memref<144xf32, #tpu.memory_space<smem>>
    %961 = vector.broadcast %960 : f32 to vector<2x256xf32>
    %962 = arith.mulf %961, %955 : vector<2x256xf32>
    %963 = arith.addf %946, %962 : vector<2x256xf32>
    %c38_102 = arith.constant 38 : index
    %964 = memref.load %arg6[%c38_102] : memref<144xf32, #tpu.memory_space<smem>>
    %965 = vector.broadcast %964 : f32 to vector<2x256xf32>
    %966 = arith.mulf %965, %955 : vector<2x256xf32>
    %967 = arith.addf %950, %966 : vector<2x256xf32>
    %c39_103 = arith.constant 39 : index
    %968 = memref.load %arg6[%c39_103] : memref<144xf32, #tpu.memory_space<smem>>
    %969 = vector.broadcast %968 : f32 to vector<2x256xf32>
    %970 = arith.mulf %969, %955 : vector<2x256xf32>
    %971 = arith.addf %954, %970 : vector<2x256xf32>
    %972 = vector.extract_strided_slice %937 {offsets = [4, 0], sizes = [2, 256], strides = [1, 1]} : vector<8x256xf32> to vector<2x256xf32>
    %c40_104 = arith.constant 40 : index
    %973 = memref.load %arg6[%c40_104] : memref<144xf32, #tpu.memory_space<smem>>
    %974 = vector.broadcast %973 : f32 to vector<2x256xf32>
    %975 = arith.mulf %974, %972 : vector<2x256xf32>
    %976 = arith.addf %959, %975 : vector<2x256xf32>
    %c41_105 = arith.constant 41 : index
    %977 = memref.load %arg6[%c41_105] : memref<144xf32, #tpu.memory_space<smem>>
    %978 = vector.broadcast %977 : f32 to vector<2x256xf32>
    %979 = arith.mulf %978, %972 : vector<2x256xf32>
    %980 = arith.addf %963, %979 : vector<2x256xf32>
    %c42_106 = arith.constant 42 : index
    %981 = memref.load %arg6[%c42_106] : memref<144xf32, #tpu.memory_space<smem>>
    %982 = vector.broadcast %981 : f32 to vector<2x256xf32>
    %983 = arith.mulf %982, %972 : vector<2x256xf32>
    %984 = arith.addf %967, %983 : vector<2x256xf32>
    %c43_107 = arith.constant 43 : index
    %985 = memref.load %arg6[%c43_107] : memref<144xf32, #tpu.memory_space<smem>>
    %986 = vector.broadcast %985 : f32 to vector<2x256xf32>
    %987 = arith.mulf %986, %972 : vector<2x256xf32>
    %988 = arith.addf %971, %987 : vector<2x256xf32>
    %989 = vector.extract_strided_slice %937 {offsets = [6, 0], sizes = [2, 256], strides = [1, 1]} : vector<8x256xf32> to vector<2x256xf32>
    %c44_108 = arith.constant 44 : index
    %990 = memref.load %arg6[%c44_108] : memref<144xf32, #tpu.memory_space<smem>>
    %991 = vector.broadcast %990 : f32 to vector<2x256xf32>
    %992 = arith.mulf %991, %989 : vector<2x256xf32>
    %993 = arith.addf %976, %992 : vector<2x256xf32>
    %c45_109 = arith.constant 45 : index
    %994 = memref.load %arg6[%c45_109] : memref<144xf32, #tpu.memory_space<smem>>
    %995 = vector.broadcast %994 : f32 to vector<2x256xf32>
    %996 = arith.mulf %995, %989 : vector<2x256xf32>
    %997 = arith.addf %980, %996 : vector<2x256xf32>
    %c46_110 = arith.constant 46 : index
    %998 = memref.load %arg6[%c46_110] : memref<144xf32, #tpu.memory_space<smem>>
    %999 = vector.broadcast %998 : f32 to vector<2x256xf32>
    %1000 = arith.mulf %999, %989 : vector<2x256xf32>
    %1001 = arith.addf %984, %1000 : vector<2x256xf32>
    %c47_111 = arith.constant 47 : index
    %1002 = memref.load %arg6[%c47_111] : memref<144xf32, #tpu.memory_space<smem>>
    %1003 = vector.broadcast %1002 : f32 to vector<2x256xf32>
    %1004 = arith.mulf %1003, %989 : vector<2x256xf32>
    %1005 = arith.addf %988, %1004 : vector<2x256xf32>
    %c1_i32_112 = arith.constant 1 : i32
    %1006 = tpu.dynamic_rotate %785 by %c1_i32_112 dim 1 : vector<8x256xf32>, i32 -> vector<8x256xf32>
    %1007 = vector.extract_strided_slice %1 {offsets = [3, 0], sizes = [1, 256], strides = [1, 1]} : vector<9x256xf32> to vector<1x256xf32>
    %1008 = vector.broadcast %1007 : vector<1x256xf32> to vector<8x256xf32>
    %1009 = arith.mulf %1006, %1008 : vector<8x256xf32>
    %1010 = vector.extract_strided_slice %1009 {offsets = [0, 0], sizes = [2, 256], strides = [1, 1]} : vector<8x256xf32> to vector<2x256xf32>
    %c48_113 = arith.constant 48 : index
    %1011 = memref.load %arg6[%c48_113] : memref<144xf32, #tpu.memory_space<smem>>
    %1012 = vector.broadcast %1011 : f32 to vector<2x256xf32>
    %1013 = arith.mulf %1012, %1010 : vector<2x256xf32>
    %1014 = arith.addf %993, %1013 : vector<2x256xf32>
    %c49_114 = arith.constant 49 : index
    %1015 = memref.load %arg6[%c49_114] : memref<144xf32, #tpu.memory_space<smem>>
    %1016 = vector.broadcast %1015 : f32 to vector<2x256xf32>
    %1017 = arith.mulf %1016, %1010 : vector<2x256xf32>
    %1018 = arith.addf %997, %1017 : vector<2x256xf32>
    %c50_115 = arith.constant 50 : index
    %1019 = memref.load %arg6[%c50_115] : memref<144xf32, #tpu.memory_space<smem>>
    %1020 = vector.broadcast %1019 : f32 to vector<2x256xf32>
    %1021 = arith.mulf %1020, %1010 : vector<2x256xf32>
    %1022 = arith.addf %1001, %1021 : vector<2x256xf32>
    %c51_116 = arith.constant 51 : index
    %1023 = memref.load %arg6[%c51_116] : memref<144xf32, #tpu.memory_space<smem>>
    %1024 = vector.broadcast %1023 : f32 to vector<2x256xf32>
    %1025 = arith.mulf %1024, %1010 : vector<2x256xf32>
    %1026 = arith.addf %1005, %1025 : vector<2x256xf32>
    %1027 = vector.extract_strided_slice %1009 {offsets = [2, 0], sizes = [2, 256], strides = [1, 1]} : vector<8x256xf32> to vector<2x256xf32>
    %c52_117 = arith.constant 52 : index
    %1028 = memref.load %arg6[%c52_117] : memref<144xf32, #tpu.memory_space<smem>>
    %1029 = vector.broadcast %1028 : f32 to vector<2x256xf32>
    %1030 = arith.mulf %1029, %1027 : vector<2x256xf32>
    %1031 = arith.addf %1014, %1030 : vector<2x256xf32>
    %c53_118 = arith.constant 53 : index
    %1032 = memref.load %arg6[%c53_118] : memref<144xf32, #tpu.memory_space<smem>>
    %1033 = vector.broadcast %1032 : f32 to vector<2x256xf32>
    %1034 = arith.mulf %1033, %1027 : vector<2x256xf32>
    %1035 = arith.addf %1018, %1034 : vector<2x256xf32>
    %c54_119 = arith.constant 54 : index
    %1036 = memref.load %arg6[%c54_119] : memref<144xf32, #tpu.memory_space<smem>>
    %1037 = vector.broadcast %1036 : f32 to vector<2x256xf32>
    %1038 = arith.mulf %1037, %1027 : vector<2x256xf32>
    %1039 = arith.addf %1022, %1038 : vector<2x256xf32>
    %c55_120 = arith.constant 55 : index
    %1040 = memref.load %arg6[%c55_120] : memref<144xf32, #tpu.memory_space<smem>>
    %1041 = vector.broadcast %1040 : f32 to vector<2x256xf32>
    %1042 = arith.mulf %1041, %1027 : vector<2x256xf32>
    %1043 = arith.addf %1026, %1042 : vector<2x256xf32>
    %1044 = vector.extract_strided_slice %1009 {offsets = [4, 0], sizes = [2, 256], strides = [1, 1]} : vector<8x256xf32> to vector<2x256xf32>
    %c56_121 = arith.constant 56 : index
    %1045 = memref.load %arg6[%c56_121] : memref<144xf32, #tpu.memory_space<smem>>
    %1046 = vector.broadcast %1045 : f32 to vector<2x256xf32>
    %1047 = arith.mulf %1046, %1044 : vector<2x256xf32>
    %1048 = arith.addf %1031, %1047 : vector<2x256xf32>
    %c57_122 = arith.constant 57 : index
    %1049 = memref.load %arg6[%c57_122] : memref<144xf32, #tpu.memory_space<smem>>
    %1050 = vector.broadcast %1049 : f32 to vector<2x256xf32>
    %1051 = arith.mulf %1050, %1044 : vector<2x256xf32>
    %1052 = arith.addf %1035, %1051 : vector<2x256xf32>
    %c58_123 = arith.constant 58 : index
    %1053 = memref.load %arg6[%c58_123] : memref<144xf32, #tpu.memory_space<smem>>
    %1054 = vector.broadcast %1053 : f32 to vector<2x256xf32>
    %1055 = arith.mulf %1054, %1044 : vector<2x256xf32>
    %1056 = arith.addf %1039, %1055 : vector<2x256xf32>
    %c59_124 = arith.constant 59 : index
    %1057 = memref.load %arg6[%c59_124] : memref<144xf32, #tpu.memory_space<smem>>
    %1058 = vector.broadcast %1057 : f32 to vector<2x256xf32>
    %1059 = arith.mulf %1058, %1044 : vector<2x256xf32>
    %1060 = arith.addf %1043, %1059 : vector<2x256xf32>
    %1061 = vector.extract_strided_slice %1009 {offsets = [6, 0], sizes = [2, 256], strides = [1, 1]} : vector<8x256xf32> to vector<2x256xf32>
    %c60_125 = arith.constant 60 : index
    %1062 = memref.load %arg6[%c60_125] : memref<144xf32, #tpu.memory_space<smem>>
    %1063 = vector.broadcast %1062 : f32 to vector<2x256xf32>
    %1064 = arith.mulf %1063, %1061 : vector<2x256xf32>
    %1065 = arith.addf %1048, %1064 : vector<2x256xf32>
    %c61_126 = arith.constant 61 : index
    %1066 = memref.load %arg6[%c61_126] : memref<144xf32, #tpu.memory_space<smem>>
    %1067 = vector.broadcast %1066 : f32 to vector<2x256xf32>
    %1068 = arith.mulf %1067, %1061 : vector<2x256xf32>
    %1069 = arith.addf %1052, %1068 : vector<2x256xf32>
    %c62_127 = arith.constant 62 : index
    %1070 = memref.load %arg6[%c62_127] : memref<144xf32, #tpu.memory_space<smem>>
    %1071 = vector.broadcast %1070 : f32 to vector<2x256xf32>
    %1072 = arith.mulf %1071, %1061 : vector<2x256xf32>
    %1073 = arith.addf %1056, %1072 : vector<2x256xf32>
    %c63_128 = arith.constant 63 : index
    %1074 = memref.load %arg6[%c63_128] : memref<144xf32, #tpu.memory_space<smem>>
    %1075 = vector.broadcast %1074 : f32 to vector<2x256xf32>
    %1076 = arith.mulf %1075, %1061 : vector<2x256xf32>
    %1077 = arith.addf %1060, %1076 : vector<2x256xf32>
    %1078 = vector.extract_strided_slice %1 {offsets = [4, 0], sizes = [1, 256], strides = [1, 1]} : vector<9x256xf32> to vector<1x256xf32>
    %1079 = vector.broadcast %1078 : vector<1x256xf32> to vector<8x256xf32>
    %1080 = arith.mulf %785, %1079 : vector<8x256xf32>
    %1081 = vector.extract_strided_slice %1080 {offsets = [0, 0], sizes = [2, 256], strides = [1, 1]} : vector<8x256xf32> to vector<2x256xf32>
    %c64_129 = arith.constant 64 : index
    %1082 = memref.load %arg6[%c64_129] : memref<144xf32, #tpu.memory_space<smem>>
    %1083 = vector.broadcast %1082 : f32 to vector<2x256xf32>
    %1084 = arith.mulf %1083, %1081 : vector<2x256xf32>
    %1085 = arith.addf %1065, %1084 : vector<2x256xf32>
    %c65_130 = arith.constant 65 : index
    %1086 = memref.load %arg6[%c65_130] : memref<144xf32, #tpu.memory_space<smem>>
    %1087 = vector.broadcast %1086 : f32 to vector<2x256xf32>
    %1088 = arith.mulf %1087, %1081 : vector<2x256xf32>
    %1089 = arith.addf %1069, %1088 : vector<2x256xf32>
    %c66_131 = arith.constant 66 : index
    %1090 = memref.load %arg6[%c66_131] : memref<144xf32, #tpu.memory_space<smem>>
    %1091 = vector.broadcast %1090 : f32 to vector<2x256xf32>
    %1092 = arith.mulf %1091, %1081 : vector<2x256xf32>
    %1093 = arith.addf %1073, %1092 : vector<2x256xf32>
    %c67_132 = arith.constant 67 : index
    %1094 = memref.load %arg6[%c67_132] : memref<144xf32, #tpu.memory_space<smem>>
    %1095 = vector.broadcast %1094 : f32 to vector<2x256xf32>
    %1096 = arith.mulf %1095, %1081 : vector<2x256xf32>
    %1097 = arith.addf %1077, %1096 : vector<2x256xf32>
    %1098 = vector.extract_strided_slice %1080 {offsets = [2, 0], sizes = [2, 256], strides = [1, 1]} : vector<8x256xf32> to vector<2x256xf32>
    %c68_133 = arith.constant 68 : index
    %1099 = memref.load %arg6[%c68_133] : memref<144xf32, #tpu.memory_space<smem>>
    %1100 = vector.broadcast %1099 : f32 to vector<2x256xf32>
    %1101 = arith.mulf %1100, %1098 : vector<2x256xf32>
    %1102 = arith.addf %1085, %1101 : vector<2x256xf32>
    %c69_134 = arith.constant 69 : index
    %1103 = memref.load %arg6[%c69_134] : memref<144xf32, #tpu.memory_space<smem>>
    %1104 = vector.broadcast %1103 : f32 to vector<2x256xf32>
    %1105 = arith.mulf %1104, %1098 : vector<2x256xf32>
    %1106 = arith.addf %1089, %1105 : vector<2x256xf32>
    %c70_135 = arith.constant 70 : index
    %1107 = memref.load %arg6[%c70_135] : memref<144xf32, #tpu.memory_space<smem>>
    %1108 = vector.broadcast %1107 : f32 to vector<2x256xf32>
    %1109 = arith.mulf %1108, %1098 : vector<2x256xf32>
    %1110 = arith.addf %1093, %1109 : vector<2x256xf32>
    %c71_136 = arith.constant 71 : index
    %1111 = memref.load %arg6[%c71_136] : memref<144xf32, #tpu.memory_space<smem>>
    %1112 = vector.broadcast %1111 : f32 to vector<2x256xf32>
    %1113 = arith.mulf %1112, %1098 : vector<2x256xf32>
    %1114 = arith.addf %1097, %1113 : vector<2x256xf32>
    %1115 = vector.extract_strided_slice %1080 {offsets = [4, 0], sizes = [2, 256], strides = [1, 1]} : vector<8x256xf32> to vector<2x256xf32>
    %c72_137 = arith.constant 72 : index
    %1116 = memref.load %arg6[%c72_137] : memref<144xf32, #tpu.memory_space<smem>>
    %1117 = vector.broadcast %1116 : f32 to vector<2x256xf32>
    %1118 = arith.mulf %1117, %1115 : vector<2x256xf32>
    %1119 = arith.addf %1102, %1118 : vector<2x256xf32>
    %c73_138 = arith.constant 73 : index
    %1120 = memref.load %arg6[%c73_138] : memref<144xf32, #tpu.memory_space<smem>>
    %1121 = vector.broadcast %1120 : f32 to vector<2x256xf32>
    %1122 = arith.mulf %1121, %1115 : vector<2x256xf32>
    %1123 = arith.addf %1106, %1122 : vector<2x256xf32>
    %c74_139 = arith.constant 74 : index
    %1124 = memref.load %arg6[%c74_139] : memref<144xf32, #tpu.memory_space<smem>>
    %1125 = vector.broadcast %1124 : f32 to vector<2x256xf32>
    %1126 = arith.mulf %1125, %1115 : vector<2x256xf32>
    %1127 = arith.addf %1110, %1126 : vector<2x256xf32>
    %c75_140 = arith.constant 75 : index
    %1128 = memref.load %arg6[%c75_140] : memref<144xf32, #tpu.memory_space<smem>>
    %1129 = vector.broadcast %1128 : f32 to vector<2x256xf32>
    %1130 = arith.mulf %1129, %1115 : vector<2x256xf32>
    %1131 = arith.addf %1114, %1130 : vector<2x256xf32>
    %1132 = vector.extract_strided_slice %1080 {offsets = [6, 0], sizes = [2, 256], strides = [1, 1]} : vector<8x256xf32> to vector<2x256xf32>
    %c76_141 = arith.constant 76 : index
    %1133 = memref.load %arg6[%c76_141] : memref<144xf32, #tpu.memory_space<smem>>
    %1134 = vector.broadcast %1133 : f32 to vector<2x256xf32>
    %1135 = arith.mulf %1134, %1132 : vector<2x256xf32>
    %1136 = arith.addf %1119, %1135 : vector<2x256xf32>
    %c77_142 = arith.constant 77 : index
    %1137 = memref.load %arg6[%c77_142] : memref<144xf32, #tpu.memory_space<smem>>
    %1138 = vector.broadcast %1137 : f32 to vector<2x256xf32>
    %1139 = arith.mulf %1138, %1132 : vector<2x256xf32>
    %1140 = arith.addf %1123, %1139 : vector<2x256xf32>
    %c78_143 = arith.constant 78 : index
    %1141 = memref.load %arg6[%c78_143] : memref<144xf32, #tpu.memory_space<smem>>
    %1142 = vector.broadcast %1141 : f32 to vector<2x256xf32>
    %1143 = arith.mulf %1142, %1132 : vector<2x256xf32>
    %1144 = arith.addf %1127, %1143 : vector<2x256xf32>
    %c79_144 = arith.constant 79 : index
    %1145 = memref.load %arg6[%c79_144] : memref<144xf32, #tpu.memory_space<smem>>
    %1146 = vector.broadcast %1145 : f32 to vector<2x256xf32>
    %1147 = arith.mulf %1146, %1132 : vector<2x256xf32>
    %1148 = arith.addf %1131, %1147 : vector<2x256xf32>
    %c255_i32_145 = arith.constant 255 : i32
    %1149 = tpu.dynamic_rotate %785 by %c255_i32_145 dim 1 : vector<8x256xf32>, i32 -> vector<8x256xf32>
    %1150 = vector.extract_strided_slice %1 {offsets = [5, 0], sizes = [1, 256], strides = [1, 1]} : vector<9x256xf32> to vector<1x256xf32>
    %1151 = vector.broadcast %1150 : vector<1x256xf32> to vector<8x256xf32>
    %1152 = arith.mulf %1149, %1151 : vector<8x256xf32>
    %1153 = vector.extract_strided_slice %1152 {offsets = [0, 0], sizes = [2, 256], strides = [1, 1]} : vector<8x256xf32> to vector<2x256xf32>
    %c80_146 = arith.constant 80 : index
    %1154 = memref.load %arg6[%c80_146] : memref<144xf32, #tpu.memory_space<smem>>
    %1155 = vector.broadcast %1154 : f32 to vector<2x256xf32>
    %1156 = arith.mulf %1155, %1153 : vector<2x256xf32>
    %1157 = arith.addf %1136, %1156 : vector<2x256xf32>
    %c81_147 = arith.constant 81 : index
    %1158 = memref.load %arg6[%c81_147] : memref<144xf32, #tpu.memory_space<smem>>
    %1159 = vector.broadcast %1158 : f32 to vector<2x256xf32>
    %1160 = arith.mulf %1159, %1153 : vector<2x256xf32>
    %1161 = arith.addf %1140, %1160 : vector<2x256xf32>
    %c82_148 = arith.constant 82 : index
    %1162 = memref.load %arg6[%c82_148] : memref<144xf32, #tpu.memory_space<smem>>
    %1163 = vector.broadcast %1162 : f32 to vector<2x256xf32>
    %1164 = arith.mulf %1163, %1153 : vector<2x256xf32>
    %1165 = arith.addf %1144, %1164 : vector<2x256xf32>
    %c83_149 = arith.constant 83 : index
    %1166 = memref.load %arg6[%c83_149] : memref<144xf32, #tpu.memory_space<smem>>
    %1167 = vector.broadcast %1166 : f32 to vector<2x256xf32>
    %1168 = arith.mulf %1167, %1153 : vector<2x256xf32>
    %1169 = arith.addf %1148, %1168 : vector<2x256xf32>
    %1170 = vector.extract_strided_slice %1152 {offsets = [2, 0], sizes = [2, 256], strides = [1, 1]} : vector<8x256xf32> to vector<2x256xf32>
    %c84_150 = arith.constant 84 : index
    %1171 = memref.load %arg6[%c84_150] : memref<144xf32, #tpu.memory_space<smem>>
    %1172 = vector.broadcast %1171 : f32 to vector<2x256xf32>
    %1173 = arith.mulf %1172, %1170 : vector<2x256xf32>
    %1174 = arith.addf %1157, %1173 : vector<2x256xf32>
    %c85_151 = arith.constant 85 : index
    %1175 = memref.load %arg6[%c85_151] : memref<144xf32, #tpu.memory_space<smem>>
    %1176 = vector.broadcast %1175 : f32 to vector<2x256xf32>
    %1177 = arith.mulf %1176, %1170 : vector<2x256xf32>
    %1178 = arith.addf %1161, %1177 : vector<2x256xf32>
    %c86_152 = arith.constant 86 : index
    %1179 = memref.load %arg6[%c86_152] : memref<144xf32, #tpu.memory_space<smem>>
    %1180 = vector.broadcast %1179 : f32 to vector<2x256xf32>
    %1181 = arith.mulf %1180, %1170 : vector<2x256xf32>
    %1182 = arith.addf %1165, %1181 : vector<2x256xf32>
    %c87_153 = arith.constant 87 : index
    %1183 = memref.load %arg6[%c87_153] : memref<144xf32, #tpu.memory_space<smem>>
    %1184 = vector.broadcast %1183 : f32 to vector<2x256xf32>
    %1185 = arith.mulf %1184, %1170 : vector<2x256xf32>
    %1186 = arith.addf %1169, %1185 : vector<2x256xf32>
    %1187 = vector.extract_strided_slice %1152 {offsets = [4, 0], sizes = [2, 256], strides = [1, 1]} : vector<8x256xf32> to vector<2x256xf32>
    %c88_154 = arith.constant 88 : index
    %1188 = memref.load %arg6[%c88_154] : memref<144xf32, #tpu.memory_space<smem>>
    %1189 = vector.broadcast %1188 : f32 to vector<2x256xf32>
    %1190 = arith.mulf %1189, %1187 : vector<2x256xf32>
    %1191 = arith.addf %1174, %1190 : vector<2x256xf32>
    %c89_155 = arith.constant 89 : index
    %1192 = memref.load %arg6[%c89_155] : memref<144xf32, #tpu.memory_space<smem>>
    %1193 = vector.broadcast %1192 : f32 to vector<2x256xf32>
    %1194 = arith.mulf %1193, %1187 : vector<2x256xf32>
    %1195 = arith.addf %1178, %1194 : vector<2x256xf32>
    %c90_156 = arith.constant 90 : index
    %1196 = memref.load %arg6[%c90_156] : memref<144xf32, #tpu.memory_space<smem>>
    %1197 = vector.broadcast %1196 : f32 to vector<2x256xf32>
    %1198 = arith.mulf %1197, %1187 : vector<2x256xf32>
    %1199 = arith.addf %1182, %1198 : vector<2x256xf32>
    %c91_157 = arith.constant 91 : index
    %1200 = memref.load %arg6[%c91_157] : memref<144xf32, #tpu.memory_space<smem>>
    %1201 = vector.broadcast %1200 : f32 to vector<2x256xf32>
    %1202 = arith.mulf %1201, %1187 : vector<2x256xf32>
    %1203 = arith.addf %1186, %1202 : vector<2x256xf32>
    %1204 = vector.extract_strided_slice %1152 {offsets = [6, 0], sizes = [2, 256], strides = [1, 1]} : vector<8x256xf32> to vector<2x256xf32>
    %c92_158 = arith.constant 92 : index
    %1205 = memref.load %arg6[%c92_158] : memref<144xf32, #tpu.memory_space<smem>>
    %1206 = vector.broadcast %1205 : f32 to vector<2x256xf32>
    %1207 = arith.mulf %1206, %1204 : vector<2x256xf32>
    %1208 = arith.addf %1191, %1207 : vector<2x256xf32>
    %c93_159 = arith.constant 93 : index
    %1209 = memref.load %arg6[%c93_159] : memref<144xf32, #tpu.memory_space<smem>>
    %1210 = vector.broadcast %1209 : f32 to vector<2x256xf32>
    %1211 = arith.mulf %1210, %1204 : vector<2x256xf32>
    %1212 = arith.addf %1195, %1211 : vector<2x256xf32>
    %c94_160 = arith.constant 94 : index
    %1213 = memref.load %arg6[%c94_160] : memref<144xf32, #tpu.memory_space<smem>>
    %1214 = vector.broadcast %1213 : f32 to vector<2x256xf32>
    %1215 = arith.mulf %1214, %1204 : vector<2x256xf32>
    %1216 = arith.addf %1199, %1215 : vector<2x256xf32>
    %c95_161 = arith.constant 95 : index
    %1217 = memref.load %arg6[%c95_161] : memref<144xf32, #tpu.memory_space<smem>>
    %1218 = vector.broadcast %1217 : f32 to vector<2x256xf32>
    %1219 = arith.mulf %1218, %1204 : vector<2x256xf32>
    %1220 = arith.addf %1203, %1219 : vector<2x256xf32>
    %c241_i32_162 = arith.constant 241 : i32
    %1221 = tpu.dynamic_rotate %785 by %c241_i32_162 dim 1 : vector<8x256xf32>, i32 -> vector<8x256xf32>
    %1222 = vector.extract_strided_slice %1 {offsets = [6, 0], sizes = [1, 256], strides = [1, 1]} : vector<9x256xf32> to vector<1x256xf32>
    %1223 = vector.broadcast %1222 : vector<1x256xf32> to vector<8x256xf32>
    %1224 = arith.mulf %1221, %1223 : vector<8x256xf32>
    %1225 = vector.extract_strided_slice %1224 {offsets = [0, 0], sizes = [2, 256], strides = [1, 1]} : vector<8x256xf32> to vector<2x256xf32>
    %c96_163 = arith.constant 96 : index
    %1226 = memref.load %arg6[%c96_163] : memref<144xf32, #tpu.memory_space<smem>>
    %1227 = vector.broadcast %1226 : f32 to vector<2x256xf32>
    %1228 = arith.mulf %1227, %1225 : vector<2x256xf32>
    %1229 = arith.addf %1208, %1228 : vector<2x256xf32>
    %c97_164 = arith.constant 97 : index
    %1230 = memref.load %arg6[%c97_164] : memref<144xf32, #tpu.memory_space<smem>>
    %1231 = vector.broadcast %1230 : f32 to vector<2x256xf32>
    %1232 = arith.mulf %1231, %1225 : vector<2x256xf32>
    %1233 = arith.addf %1212, %1232 : vector<2x256xf32>
    %c98_165 = arith.constant 98 : index
    %1234 = memref.load %arg6[%c98_165] : memref<144xf32, #tpu.memory_space<smem>>
    %1235 = vector.broadcast %1234 : f32 to vector<2x256xf32>
    %1236 = arith.mulf %1235, %1225 : vector<2x256xf32>
    %1237 = arith.addf %1216, %1236 : vector<2x256xf32>
    %c99_166 = arith.constant 99 : index
    %1238 = memref.load %arg6[%c99_166] : memref<144xf32, #tpu.memory_space<smem>>
    %1239 = vector.broadcast %1238 : f32 to vector<2x256xf32>
    %1240 = arith.mulf %1239, %1225 : vector<2x256xf32>
    %1241 = arith.addf %1220, %1240 : vector<2x256xf32>
    %1242 = vector.extract_strided_slice %1224 {offsets = [2, 0], sizes = [2, 256], strides = [1, 1]} : vector<8x256xf32> to vector<2x256xf32>
    %c100_167 = arith.constant 100 : index
    %1243 = memref.load %arg6[%c100_167] : memref<144xf32, #tpu.memory_space<smem>>
    %1244 = vector.broadcast %1243 : f32 to vector<2x256xf32>
    %1245 = arith.mulf %1244, %1242 : vector<2x256xf32>
    %1246 = arith.addf %1229, %1245 : vector<2x256xf32>
    %c101_168 = arith.constant 101 : index
    %1247 = memref.load %arg6[%c101_168] : memref<144xf32, #tpu.memory_space<smem>>
    %1248 = vector.broadcast %1247 : f32 to vector<2x256xf32>
    %1249 = arith.mulf %1248, %1242 : vector<2x256xf32>
    %1250 = arith.addf %1233, %1249 : vector<2x256xf32>
    %c102_169 = arith.constant 102 : index
    %1251 = memref.load %arg6[%c102_169] : memref<144xf32, #tpu.memory_space<smem>>
    %1252 = vector.broadcast %1251 : f32 to vector<2x256xf32>
    %1253 = arith.mulf %1252, %1242 : vector<2x256xf32>
    %1254 = arith.addf %1237, %1253 : vector<2x256xf32>
    %c103_170 = arith.constant 103 : index
    %1255 = memref.load %arg6[%c103_170] : memref<144xf32, #tpu.memory_space<smem>>
    %1256 = vector.broadcast %1255 : f32 to vector<2x256xf32>
    %1257 = arith.mulf %1256, %1242 : vector<2x256xf32>
    %1258 = arith.addf %1241, %1257 : vector<2x256xf32>
    %1259 = vector.extract_strided_slice %1224 {offsets = [4, 0], sizes = [2, 256], strides = [1, 1]} : vector<8x256xf32> to vector<2x256xf32>
    %c104_171 = arith.constant 104 : index
    %1260 = memref.load %arg6[%c104_171] : memref<144xf32, #tpu.memory_space<smem>>
    %1261 = vector.broadcast %1260 : f32 to vector<2x256xf32>
    %1262 = arith.mulf %1261, %1259 : vector<2x256xf32>
    %1263 = arith.addf %1246, %1262 : vector<2x256xf32>
    %c105_172 = arith.constant 105 : index
    %1264 = memref.load %arg6[%c105_172] : memref<144xf32, #tpu.memory_space<smem>>
    %1265 = vector.broadcast %1264 : f32 to vector<2x256xf32>
    %1266 = arith.mulf %1265, %1259 : vector<2x256xf32>
    %1267 = arith.addf %1250, %1266 : vector<2x256xf32>
    %c106_173 = arith.constant 106 : index
    %1268 = memref.load %arg6[%c106_173] : memref<144xf32, #tpu.memory_space<smem>>
    %1269 = vector.broadcast %1268 : f32 to vector<2x256xf32>
    %1270 = arith.mulf %1269, %1259 : vector<2x256xf32>
    %1271 = arith.addf %1254, %1270 : vector<2x256xf32>
    %c107_174 = arith.constant 107 : index
    %1272 = memref.load %arg6[%c107_174] : memref<144xf32, #tpu.memory_space<smem>>
    %1273 = vector.broadcast %1272 : f32 to vector<2x256xf32>
    %1274 = arith.mulf %1273, %1259 : vector<2x256xf32>
    %1275 = arith.addf %1258, %1274 : vector<2x256xf32>
    %1276 = vector.extract_strided_slice %1224 {offsets = [6, 0], sizes = [2, 256], strides = [1, 1]} : vector<8x256xf32> to vector<2x256xf32>
    %c108_175 = arith.constant 108 : index
    %1277 = memref.load %arg6[%c108_175] : memref<144xf32, #tpu.memory_space<smem>>
    %1278 = vector.broadcast %1277 : f32 to vector<2x256xf32>
    %1279 = arith.mulf %1278, %1276 : vector<2x256xf32>
    %1280 = arith.addf %1263, %1279 : vector<2x256xf32>
    %c109_176 = arith.constant 109 : index
    %1281 = memref.load %arg6[%c109_176] : memref<144xf32, #tpu.memory_space<smem>>
    %1282 = vector.broadcast %1281 : f32 to vector<2x256xf32>
    %1283 = arith.mulf %1282, %1276 : vector<2x256xf32>
    %1284 = arith.addf %1267, %1283 : vector<2x256xf32>
    %c110_177 = arith.constant 110 : index
    %1285 = memref.load %arg6[%c110_177] : memref<144xf32, #tpu.memory_space<smem>>
    %1286 = vector.broadcast %1285 : f32 to vector<2x256xf32>
    %1287 = arith.mulf %1286, %1276 : vector<2x256xf32>
    %1288 = arith.addf %1271, %1287 : vector<2x256xf32>
    %c111_178 = arith.constant 111 : index
    %1289 = memref.load %arg6[%c111_178] : memref<144xf32, #tpu.memory_space<smem>>
    %1290 = vector.broadcast %1289 : f32 to vector<2x256xf32>
    %1291 = arith.mulf %1290, %1276 : vector<2x256xf32>
    %1292 = arith.addf %1275, %1291 : vector<2x256xf32>
    %c240_i32_179 = arith.constant 240 : i32
    %1293 = tpu.dynamic_rotate %785 by %c240_i32_179 dim 1 : vector<8x256xf32>, i32 -> vector<8x256xf32>
    %1294 = vector.extract_strided_slice %1 {offsets = [7, 0], sizes = [1, 256], strides = [1, 1]} : vector<9x256xf32> to vector<1x256xf32>
    %1295 = vector.broadcast %1294 : vector<1x256xf32> to vector<8x256xf32>
    %1296 = arith.mulf %1293, %1295 : vector<8x256xf32>
    %1297 = vector.extract_strided_slice %1296 {offsets = [0, 0], sizes = [2, 256], strides = [1, 1]} : vector<8x256xf32> to vector<2x256xf32>
    %c112_180 = arith.constant 112 : index
    %1298 = memref.load %arg6[%c112_180] : memref<144xf32, #tpu.memory_space<smem>>
    %1299 = vector.broadcast %1298 : f32 to vector<2x256xf32>
    %1300 = arith.mulf %1299, %1297 : vector<2x256xf32>
    %1301 = arith.addf %1280, %1300 : vector<2x256xf32>
    %c113_181 = arith.constant 113 : index
    %1302 = memref.load %arg6[%c113_181] : memref<144xf32, #tpu.memory_space<smem>>
    %1303 = vector.broadcast %1302 : f32 to vector<2x256xf32>
    %1304 = arith.mulf %1303, %1297 : vector<2x256xf32>
    %1305 = arith.addf %1284, %1304 : vector<2x256xf32>
    %c114_182 = arith.constant 114 : index
    %1306 = memref.load %arg6[%c114_182] : memref<144xf32, #tpu.memory_space<smem>>
    %1307 = vector.broadcast %1306 : f32 to vector<2x256xf32>
    %1308 = arith.mulf %1307, %1297 : vector<2x256xf32>
    %1309 = arith.addf %1288, %1308 : vector<2x256xf32>
    %c115_183 = arith.constant 115 : index
    %1310 = memref.load %arg6[%c115_183] : memref<144xf32, #tpu.memory_space<smem>>
    %1311 = vector.broadcast %1310 : f32 to vector<2x256xf32>
    %1312 = arith.mulf %1311, %1297 : vector<2x256xf32>
    %1313 = arith.addf %1292, %1312 : vector<2x256xf32>
    %1314 = vector.extract_strided_slice %1296 {offsets = [2, 0], sizes = [2, 256], strides = [1, 1]} : vector<8x256xf32> to vector<2x256xf32>
    %c116_184 = arith.constant 116 : index
    %1315 = memref.load %arg6[%c116_184] : memref<144xf32, #tpu.memory_space<smem>>
    %1316 = vector.broadcast %1315 : f32 to vector<2x256xf32>
    %1317 = arith.mulf %1316, %1314 : vector<2x256xf32>
    %1318 = arith.addf %1301, %1317 : vector<2x256xf32>
    %c117_185 = arith.constant 117 : index
    %1319 = memref.load %arg6[%c117_185] : memref<144xf32, #tpu.memory_space<smem>>
    %1320 = vector.broadcast %1319 : f32 to vector<2x256xf32>
    %1321 = arith.mulf %1320, %1314 : vector<2x256xf32>
    %1322 = arith.addf %1305, %1321 : vector<2x256xf32>
    %c118_186 = arith.constant 118 : index
    %1323 = memref.load %arg6[%c118_186] : memref<144xf32, #tpu.memory_space<smem>>
    %1324 = vector.broadcast %1323 : f32 to vector<2x256xf32>
    %1325 = arith.mulf %1324, %1314 : vector<2x256xf32>
    %1326 = arith.addf %1309, %1325 : vector<2x256xf32>
    %c119_187 = arith.constant 119 : index
    %1327 = memref.load %arg6[%c119_187] : memref<144xf32, #tpu.memory_space<smem>>
    %1328 = vector.broadcast %1327 : f32 to vector<2x256xf32>
    %1329 = arith.mulf %1328, %1314 : vector<2x256xf32>
    %1330 = arith.addf %1313, %1329 : vector<2x256xf32>
    %1331 = vector.extract_strided_slice %1296 {offsets = [4, 0], sizes = [2, 256], strides = [1, 1]} : vector<8x256xf32> to vector<2x256xf32>
    %c120_188 = arith.constant 120 : index
    %1332 = memref.load %arg6[%c120_188] : memref<144xf32, #tpu.memory_space<smem>>
    %1333 = vector.broadcast %1332 : f32 to vector<2x256xf32>
    %1334 = arith.mulf %1333, %1331 : vector<2x256xf32>
    %1335 = arith.addf %1318, %1334 : vector<2x256xf32>
    %c121_189 = arith.constant 121 : index
    %1336 = memref.load %arg6[%c121_189] : memref<144xf32, #tpu.memory_space<smem>>
    %1337 = vector.broadcast %1336 : f32 to vector<2x256xf32>
    %1338 = arith.mulf %1337, %1331 : vector<2x256xf32>
    %1339 = arith.addf %1322, %1338 : vector<2x256xf32>
    %c122_190 = arith.constant 122 : index
    %1340 = memref.load %arg6[%c122_190] : memref<144xf32, #tpu.memory_space<smem>>
    %1341 = vector.broadcast %1340 : f32 to vector<2x256xf32>
    %1342 = arith.mulf %1341, %1331 : vector<2x256xf32>
    %1343 = arith.addf %1326, %1342 : vector<2x256xf32>
    %c123_191 = arith.constant 123 : index
    %1344 = memref.load %arg6[%c123_191] : memref<144xf32, #tpu.memory_space<smem>>
    %1345 = vector.broadcast %1344 : f32 to vector<2x256xf32>
    %1346 = arith.mulf %1345, %1331 : vector<2x256xf32>
    %1347 = arith.addf %1330, %1346 : vector<2x256xf32>
    %1348 = vector.extract_strided_slice %1296 {offsets = [6, 0], sizes = [2, 256], strides = [1, 1]} : vector<8x256xf32> to vector<2x256xf32>
    %c124_192 = arith.constant 124 : index
    %1349 = memref.load %arg6[%c124_192] : memref<144xf32, #tpu.memory_space<smem>>
    %1350 = vector.broadcast %1349 : f32 to vector<2x256xf32>
    %1351 = arith.mulf %1350, %1348 : vector<2x256xf32>
    %1352 = arith.addf %1335, %1351 : vector<2x256xf32>
    %c125_193 = arith.constant 125 : index
    %1353 = memref.load %arg6[%c125_193] : memref<144xf32, #tpu.memory_space<smem>>
    %1354 = vector.broadcast %1353 : f32 to vector<2x256xf32>
    %1355 = arith.mulf %1354, %1348 : vector<2x256xf32>
    %1356 = arith.addf %1339, %1355 : vector<2x256xf32>
    %c126_194 = arith.constant 126 : index
    %1357 = memref.load %arg6[%c126_194] : memref<144xf32, #tpu.memory_space<smem>>
    %1358 = vector.broadcast %1357 : f32 to vector<2x256xf32>
    %1359 = arith.mulf %1358, %1348 : vector<2x256xf32>
    %1360 = arith.addf %1343, %1359 : vector<2x256xf32>
    %c127_195 = arith.constant 127 : index
    %1361 = memref.load %arg6[%c127_195] : memref<144xf32, #tpu.memory_space<smem>>
    %1362 = vector.broadcast %1361 : f32 to vector<2x256xf32>
    %1363 = arith.mulf %1362, %1348 : vector<2x256xf32>
    %1364 = arith.addf %1347, %1363 : vector<2x256xf32>
    %c239_i32_196 = arith.constant 239 : i32
    %1365 = tpu.dynamic_rotate %785 by %c239_i32_196 dim 1 : vector<8x256xf32>, i32 -> vector<8x256xf32>
    %1366 = vector.extract_strided_slice %1 {offsets = [8, 0], sizes = [1, 256], strides = [1, 1]} : vector<9x256xf32> to vector<1x256xf32>
    %1367 = vector.broadcast %1366 : vector<1x256xf32> to vector<8x256xf32>
    %1368 = arith.mulf %1365, %1367 : vector<8x256xf32>
    %1369 = vector.extract_strided_slice %1368 {offsets = [0, 0], sizes = [2, 256], strides = [1, 1]} : vector<8x256xf32> to vector<2x256xf32>
    %c128_197 = arith.constant 128 : index
    %1370 = memref.load %arg6[%c128_197] : memref<144xf32, #tpu.memory_space<smem>>
    %1371 = vector.broadcast %1370 : f32 to vector<2x256xf32>
    %1372 = arith.mulf %1371, %1369 : vector<2x256xf32>
    %1373 = arith.addf %1352, %1372 : vector<2x256xf32>
    %c129_198 = arith.constant 129 : index
    %1374 = memref.load %arg6[%c129_198] : memref<144xf32, #tpu.memory_space<smem>>
    %1375 = vector.broadcast %1374 : f32 to vector<2x256xf32>
    %1376 = arith.mulf %1375, %1369 : vector<2x256xf32>
    %1377 = arith.addf %1356, %1376 : vector<2x256xf32>
    %c130_199 = arith.constant 130 : index
    %1378 = memref.load %arg6[%c130_199] : memref<144xf32, #tpu.memory_space<smem>>
    %1379 = vector.broadcast %1378 : f32 to vector<2x256xf32>
    %1380 = arith.mulf %1379, %1369 : vector<2x256xf32>
    %1381 = arith.addf %1360, %1380 : vector<2x256xf32>
    %c131_200 = arith.constant 131 : index
    %1382 = memref.load %arg6[%c131_200] : memref<144xf32, #tpu.memory_space<smem>>
    %1383 = vector.broadcast %1382 : f32 to vector<2x256xf32>
    %1384 = arith.mulf %1383, %1369 : vector<2x256xf32>
    %1385 = arith.addf %1364, %1384 : vector<2x256xf32>
    %1386 = vector.extract_strided_slice %1368 {offsets = [2, 0], sizes = [2, 256], strides = [1, 1]} : vector<8x256xf32> to vector<2x256xf32>
    %c132_201 = arith.constant 132 : index
    %1387 = memref.load %arg6[%c132_201] : memref<144xf32, #tpu.memory_space<smem>>
    %1388 = vector.broadcast %1387 : f32 to vector<2x256xf32>
    %1389 = arith.mulf %1388, %1386 : vector<2x256xf32>
    %1390 = arith.addf %1373, %1389 : vector<2x256xf32>
    %c133_202 = arith.constant 133 : index
    %1391 = memref.load %arg6[%c133_202] : memref<144xf32, #tpu.memory_space<smem>>
    %1392 = vector.broadcast %1391 : f32 to vector<2x256xf32>
    %1393 = arith.mulf %1392, %1386 : vector<2x256xf32>
    %1394 = arith.addf %1377, %1393 : vector<2x256xf32>
    %c134_203 = arith.constant 134 : index
    %1395 = memref.load %arg6[%c134_203] : memref<144xf32, #tpu.memory_space<smem>>
    %1396 = vector.broadcast %1395 : f32 to vector<2x256xf32>
    %1397 = arith.mulf %1396, %1386 : vector<2x256xf32>
    %1398 = arith.addf %1381, %1397 : vector<2x256xf32>
    %c135_204 = arith.constant 135 : index
    %1399 = memref.load %arg6[%c135_204] : memref<144xf32, #tpu.memory_space<smem>>
    %1400 = vector.broadcast %1399 : f32 to vector<2x256xf32>
    %1401 = arith.mulf %1400, %1386 : vector<2x256xf32>
    %1402 = arith.addf %1385, %1401 : vector<2x256xf32>
    %1403 = vector.extract_strided_slice %1368 {offsets = [4, 0], sizes = [2, 256], strides = [1, 1]} : vector<8x256xf32> to vector<2x256xf32>
    %c136_205 = arith.constant 136 : index
    %1404 = memref.load %arg6[%c136_205] : memref<144xf32, #tpu.memory_space<smem>>
    %1405 = vector.broadcast %1404 : f32 to vector<2x256xf32>
    %1406 = arith.mulf %1405, %1403 : vector<2x256xf32>
    %1407 = arith.addf %1390, %1406 : vector<2x256xf32>
    %c137_206 = arith.constant 137 : index
    %1408 = memref.load %arg6[%c137_206] : memref<144xf32, #tpu.memory_space<smem>>
    %1409 = vector.broadcast %1408 : f32 to vector<2x256xf32>
    %1410 = arith.mulf %1409, %1403 : vector<2x256xf32>
    %1411 = arith.addf %1394, %1410 : vector<2x256xf32>
    %c138_207 = arith.constant 138 : index
    %1412 = memref.load %arg6[%c138_207] : memref<144xf32, #tpu.memory_space<smem>>
    %1413 = vector.broadcast %1412 : f32 to vector<2x256xf32>
    %1414 = arith.mulf %1413, %1403 : vector<2x256xf32>
    %1415 = arith.addf %1398, %1414 : vector<2x256xf32>
    %c139_208 = arith.constant 139 : index
    %1416 = memref.load %arg6[%c139_208] : memref<144xf32, #tpu.memory_space<smem>>
    %1417 = vector.broadcast %1416 : f32 to vector<2x256xf32>
    %1418 = arith.mulf %1417, %1403 : vector<2x256xf32>
    %1419 = arith.addf %1402, %1418 : vector<2x256xf32>
    %1420 = vector.extract_strided_slice %1368 {offsets = [6, 0], sizes = [2, 256], strides = [1, 1]} : vector<8x256xf32> to vector<2x256xf32>
    %c140_209 = arith.constant 140 : index
    %1421 = memref.load %arg6[%c140_209] : memref<144xf32, #tpu.memory_space<smem>>
    %1422 = vector.broadcast %1421 : f32 to vector<2x256xf32>
    %1423 = arith.mulf %1422, %1420 : vector<2x256xf32>
    %1424 = arith.addf %1407, %1423 : vector<2x256xf32>
    %c141_210 = arith.constant 141 : index
    %1425 = memref.load %arg6[%c141_210] : memref<144xf32, #tpu.memory_space<smem>>
    %1426 = vector.broadcast %1425 : f32 to vector<2x256xf32>
    %1427 = arith.mulf %1426, %1420 : vector<2x256xf32>
    %1428 = arith.addf %1411, %1427 : vector<2x256xf32>
    %c142_211 = arith.constant 142 : index
    %1429 = memref.load %arg6[%c142_211] : memref<144xf32, #tpu.memory_space<smem>>
    %1430 = vector.broadcast %1429 : f32 to vector<2x256xf32>
    %1431 = arith.mulf %1430, %1420 : vector<2x256xf32>
    %1432 = arith.addf %1415, %1431 : vector<2x256xf32>
    %c143_212 = arith.constant 143 : index
    %1433 = memref.load %arg6[%c143_212] : memref<144xf32, #tpu.memory_space<smem>>
    %1434 = vector.broadcast %1433 : f32 to vector<2x256xf32>
    %1435 = arith.mulf %1434, %1420 : vector<2x256xf32>
    %1436 = arith.addf %1419, %1435 : vector<2x256xf32>
    %c0_213 = arith.constant 0 : index
    %1437 = memref.load %arg7[%c0_213] : memref<4xf32, #tpu.memory_space<smem>>
    %1438 = vector.broadcast %1437 : f32 to vector<2x256xf32>
    %1439 = arith.addf %1424, %1438 : vector<2x256xf32>
    %c1_214 = arith.constant 1 : index
    %1440 = memref.load %arg7[%c1_214] : memref<4xf32, #tpu.memory_space<smem>>
    %1441 = vector.broadcast %1440 : f32 to vector<2x256xf32>
    %1442 = arith.addf %1428, %1441 : vector<2x256xf32>
    %c2_215 = arith.constant 2 : index
    %1443 = memref.load %arg7[%c2_215] : memref<4xf32, #tpu.memory_space<smem>>
    %1444 = vector.broadcast %1443 : f32 to vector<2x256xf32>
    %1445 = arith.addf %1432, %1444 : vector<2x256xf32>
    %c3_216 = arith.constant 3 : index
    %1446 = memref.load %arg7[%c3_216] : memref<4xf32, #tpu.memory_space<smem>>
    %1447 = vector.broadcast %1446 : f32 to vector<2x256xf32>
    %1448 = arith.addf %1436, %1447 : vector<2x256xf32>
    %cst_217 = arith.constant 0.000000e+00 : f32
    %1449 = vector.broadcast %cst_217 : f32 to vector<2x256xf32>
    %c0_218 = arith.constant 0 : index
    %1450 = memref.load %arg9[%c0_218] : memref<1xf32, #tpu.memory_space<smem>>
    %1451 = vector.broadcast %1450 : f32 to vector<2x256xf32>
    %1452 = arith.addf %1449, %1451 : vector<2x256xf32>
    %c0_219 = arith.constant 0 : index
    %1453 = memref.load %arg8[%c0_219] : memref<4xf32, #tpu.memory_space<smem>>
    %1454 = vector.broadcast %1453 : f32 to vector<2x256xf32>
    %1455 = arith.mulf %1454, %1439 : vector<2x256xf32>
    %1456 = arith.addf %1452, %1455 : vector<2x256xf32>
    %c1_220 = arith.constant 1 : index
    %1457 = memref.load %arg8[%c1_220] : memref<4xf32, #tpu.memory_space<smem>>
    %1458 = vector.broadcast %1457 : f32 to vector<2x256xf32>
    %1459 = arith.mulf %1458, %1442 : vector<2x256xf32>
    %1460 = arith.addf %1456, %1459 : vector<2x256xf32>
    %c2_221 = arith.constant 2 : index
    %1461 = memref.load %arg8[%c2_221] : memref<4xf32, #tpu.memory_space<smem>>
    %1462 = vector.broadcast %1461 : f32 to vector<2x256xf32>
    %1463 = arith.mulf %1462, %1445 : vector<2x256xf32>
    %1464 = arith.addf %1460, %1463 : vector<2x256xf32>
    %c3_222 = arith.constant 3 : index
    %1465 = memref.load %arg8[%c3_222] : memref<4xf32, #tpu.memory_space<smem>>
    %1466 = vector.broadcast %1465 : f32 to vector<2x256xf32>
    %1467 = arith.mulf %1466, %1448 : vector<2x256xf32>
    %1468 = arith.addf %1464, %1467 : vector<2x256xf32>
    %1469 = arith.negf %1468 : vector<2x256xf32>
    %1470 = math.exp %1469 : vector<2x256xf32>
    %cst_223 = arith.constant 1.000000e+00 : f32
    %1471 = vector.broadcast %cst_223 : f32 to vector<2x256xf32>
    %1472 = arith.addf %1471, %1470 : vector<2x256xf32>
    %1473 = arith.divf %1471, %1472 : vector<2x256xf32>
    %1474 = vector.extract_strided_slice %0 {offsets = [0, 0], sizes = [2, 256], strides = [1, 1]} : vector<8x256xf32> to vector<2x256xf32>
    %1475 = arith.mulf %1439, %1473 : vector<2x256xf32>
    %1476 = arith.addf %1474, %1475 : vector<2x256xf32>
    %c0_224 = arith.constant 0 : index
    %c0_225 = arith.constant 0 : index
    %1477 = vector.load %arg10[%c0_224, %c0_225] : memref<8x256xf32, #tpu.memory_space<vmem>>, vector<2x256xf32>
    tpu.vector_store %arg10[%c0_224, %c0_225], %1476 {strides = array<i32>} : memref<8x256xf32, #tpu.memory_space<vmem>>, vector<2x256xf32>,
    %1478 = vector.extract_strided_slice %0 {offsets = [2, 0], sizes = [2, 256], strides = [1, 1]} : vector<8x256xf32> to vector<2x256xf32>
    %1479 = arith.mulf %1442, %1473 : vector<2x256xf32>
    %1480 = arith.addf %1478, %1479 : vector<2x256xf32>
    %c2_226 = arith.constant 2 : index
    %c0_227 = arith.constant 0 : index
    %1481 = vector.load %arg10[%c2_226, %c0_227] : memref<8x256xf32, #tpu.memory_space<vmem>>, vector<2x256xf32>
    tpu.vector_store %arg10[%c2_226, %c0_227], %1480 {strides = array<i32>} : memref<8x256xf32, #tpu.memory_space<vmem>>, vector<2x256xf32>,
    %1482 = vector.extract_strided_slice %0 {offsets = [4, 0], sizes = [2, 256], strides = [1, 1]} : vector<8x256xf32> to vector<2x256xf32>
    %1483 = arith.mulf %1445, %1473 : vector<2x256xf32>
    %1484 = arith.addf %1482, %1483 : vector<2x256xf32>
    %c4_228 = arith.constant 4 : index
    %c0_229 = arith.constant 0 : index
    %1485 = vector.load %arg10[%c4_228, %c0_229] : memref<8x256xf32, #tpu.memory_space<vmem>>, vector<2x256xf32>
    tpu.vector_store %arg10[%c4_228, %c0_229], %1484 {strides = array<i32>} : memref<8x256xf32, #tpu.memory_space<vmem>>, vector<2x256xf32>,
    %1486 = vector.extract_strided_slice %0 {offsets = [6, 0], sizes = [2, 256], strides = [1, 1]} : vector<8x256xf32> to vector<2x256xf32>
    %1487 = arith.mulf %1448, %1473 : vector<2x256xf32>
    %1488 = arith.addf %1486, %1487 : vector<2x256xf32>
    %c6_230 = arith.constant 6 : index
    %c0_231 = arith.constant 0 : index
    %1489 = vector.load %arg10[%c6_230, %c0_231] : memref<8x256xf32, #tpu.memory_space<vmem>>, vector<2x256xf32>
    tpu.vector_store %arg10[%c6_230, %c0_231], %1488 {strides = array<i32>} : memref<8x256xf32, #tpu.memory_space<vmem>>, vector<2x256xf32>,
    return
  }
}

</mosaic_0001>

<llo_original>
// kernel: tpu_custom_call.1
$region0: #{tpu_custom_call.1}
  #allocation0 [shape = 'u32[]', space=smem, size = 0x4, offset = 0x4, fixed_abs, tag = 'smem constant byte address 0x4 - core index']
  #allocation1 [shape = 'u32[144,128]{1,0:T(1,128)}', space=vmem, size = 0x12000, scoped, tag = 'internal scratch']
  #allocation2 [shape = 'f32[8,256]{1,0:T(8,128)}', space=vmem, size = 0x2000, scoped, tag = 'scratch operand']
  #allocation3 [shape = 'f32[1]{0:T(128)S(6)}', space=smem, size = 0x200, scoped, tag = 'scoped memory for tpu_custom_call.1']
  %s0 = inlined_call_operand.hbm [shape: f32[8,256], index: 0, kind: input, shape index: {}]
  %s1 = inlined_call_operand.hbm [shape: f32[9,256], index: 1, kind: input, shape index: {}]
  %s2 = inlined_call_operand.vmem [shape: f32[144], index: 2, kind: input, shape index: {}]
  %s3 = inlined_call_operand.vmem [shape: f32[4], index: 3, kind: input, shape index: {}]
  %s4 = inlined_call_operand.vmem [shape: f32[4], index: 4, kind: input, shape index: {}]
  %s5 = inlined_call_operand.vmem [shape: f32[4], index: 5, kind: input, shape index: {}]
  %s6 = inlined_call_operand.vmem [shape: f32[144], index: 6, kind: input, shape index: {}]
  %s7 = inlined_call_operand.vmem [shape: f32[4], index: 7, kind: input, shape index: {}]
  %s8 = inlined_call_operand.vmem [shape: f32[4], index: 8, kind: input, shape index: {}]
  %s9 = inlined_call_operand.<no memory space> [shape: f32[1], index: 9, kind: input, shape index: {}]
  %s10 = inlined_call_operand.hbm [shape: f32[8,256], index: 10, kind: output, shape index: {}]
  %s11 = sld [smem:[#allocation0]]
  $region86: #{tpu_custom_call.1} parent=0
    _
  %s13 = ssub.s32 1, %s11
  %s14 = scalar_select 0, %s13, %s11
  %15 = sst [smem:[#allocation3]] %s9
  $region1: #{tpu_custom_call.1} parent=0
    #allocation4 [shape = 'u8[8192]{0}', space=vmem, size = 0x2000, scoped, tag = 'input window, operand 0, single buffered']
    #allocation5 [shape = 's32[1]{0}', space=sflag, size = 0x4, scoped, tag = 'scoped memory for tpu_custom_call.1']
    #allocation6 [shape = 's32[1]{0}', space=sflag, size = 0x4, scoped, tag = 'scoped memory for tpu_custom_call.1']
    #allocation7 [shape = 's32[1]{0}', space=sflag, size = 0x4, scoped, tag = 'scoped memory for tpu_custom_call.1']
    #allocation8 [shape = 'u8[16384]{0}', space=vmem, size = 0x4000, scoped, tag = 'input window, operand 1, single buffered']
    #allocation9 [shape = 's32[1]{0}', space=sflag, size = 0x4, scoped, tag = 'scoped memory for tpu_custom_call.1']
    #allocation10 [shape = 'u8[1024]{0}', space=smem, size = 0x400, scoped, tag = 'input window, operand 2, single buffered']
    #allocation11 [shape = 'u8[512]{0}', space=smem, size = 0x200, scoped, tag = 'input window, operand 3, single buffered']
    #allocation12 [shape = 's32[1]{0}', space=sflag, size = 0x4, scoped, tag = 'scoped memory for tpu_custom_call.1']
    #allocation13 [shape = 'u8[512]{0}', space=smem, size = 0x200, scoped, tag = 'input window, operand 4, single buffered']
    #allocation14 [shape = 'u8[512]{0}', space=smem, size = 0x200, scoped, tag = 'input window, operand 5, single buffered']
    #allocation15 [shape = 's32[1]{0}', space=sflag, size = 0x4, scoped, tag = 'scoped memory for tpu_custom_call.1']
    #allocation16 [shape = 'u8[1024]{0}', space=smem, size = 0x400, scoped, tag = 'input window, operand 6, single buffered']
    #allocation17 [shape = 'u8[512]{0}', space=smem, size = 0x200, scoped, tag = 'input window, operand 7, single buffered']
    #allocation18 [shape = 's32[1]{0}', space=sflag, size = 0x4, scoped, tag = 'scoped memory for tpu_custom_call.1']
    #allocation19 [shape = 'u8[512]{0}', space=smem, size = 0x200, scoped, tag = 'input window, operand 8, single buffered']
    #allocation20 [shape = 'u8[8192]{0}', space=vmem, size = 0x2000, scoped, tag = 'output window, operand 0, single buffered']
    %16 = vsyncpa [#allocation5], 0
    %17 = vsyncpa [#allocation9], 0
    %18 = vsyncpa [#allocation7], 0
    %19 = vsyncpa [#allocation12], 0
    %20 = vsyncpa [#allocation15], 0
    %21 = vsyncpa [#allocation18], 0
    %22 = vsyncpa [#allocation6], 0
    // Predicated region
    $region2: #{tpu_custom_call.1} parent=1 // pred_check
      _
    $region3: #{tpu_custom_call.1} parent=1 // pred_check_branch
      %24 = sbr.rel (0) target = $region5
    $region4: #{tpu_custom_call.1} parent=1 // pred_region
      %s26 = ssub.s32 256, 256
      %27 = vsyncadd [#allocation5], %s26
      %s29 = sshll.u32 [#allocation4], 4
      %s30 = int_to_ptr.vmem [resolvable:$true] %s29
      %32 = dma.hbm_to_vmem [thread:$0]  %s0, 256, %s30, [#allocation5]
    $region5: #{tpu_custom_call.1} parent=1 // pred_fallthru
      _
    // Predicated region
    $region6: #{tpu_custom_call.1} parent=1 // pred_check
      _
    $region7: #{tpu_custom_call.1} parent=1 // pred_check_branch
      %34 = sbr.rel (0) target = $region9
    $region8: #{tpu_custom_call.1} parent=1 // pred_region
      %s36 = ssub.s32 512, 512
      %37 = vsyncadd [#allocation9], %s36
      %s38 = sshll.u32 [#allocation8], 4
      %s39 = int_to_ptr.vmem [resolvable:$true] %s38
      %44 = dma.hbm_to_vmem [thread:$0]  %s1, 512, %s39, [#allocation9], 256, 256, 16
    $region9: #{tpu_custom_call.1} parent=1 // pred_fallthru
      _
    // Predicated region
    $region10: #{tpu_custom_call.1} parent=1 // pred_check
      _
    $region11: #{tpu_custom_call.1} parent=1 // pred_check_branch
      %46 = sbr.rel (0) target = $region13
    $region12: #{tpu_custom_call.1} parent=1 // pred_region
      %s48 = ssub.s32 32, 32
      %49 = vsyncadd [#allocation7], %s48
      %s51 = sshll.u32 %s2, 4
      %s52 = int_to_ptr.vmem [resolvable:$true] %s51
      %54 = dma.vmem_to_smem %s52, 32, [#allocation10], [#allocation7]
    $region13: #{tpu_custom_call.1} parent=1 // pred_fallthru
      _
    // Predicated region
    $region14: #{tpu_custom_call.1} parent=1 // pred_check
      _
    $region15: #{tpu_custom_call.1} parent=1 // pred_check_branch
      %56 = sbr.rel (0) target = $region17
    $region16: #{tpu_custom_call.1} parent=1 // pred_region
      %s58 = ssub.s32 16, 16
      %59 = vsyncadd [#allocation12], %s58
      %s61 = sshll.u32 %s3, 4
      %s62 = int_to_ptr.vmem [resolvable:$true] %s61
      %64 = dma.vmem_to_smem %s62, 16, [#allocation11], [#allocation12]
    $region17: #{tpu_custom_call.1} parent=1 // pred_fallthru
      _
    // Predicated region
    $region18: #{tpu_custom_call.1} parent=1 // pred_check
      _
    $region19: #{tpu_custom_call.1} parent=1 // pred_check_branch
      %66 = sbr.rel (0) target = $region21
    $region20: #{tpu_custom_call.1} parent=1 // pred_region
      %s68 = ssub.s32 16, 16
      %69 = vsyncadd [#allocation12], %s68
      %s71 = sshll.u32 %s4, 4
      %s72 = int_to_ptr.vmem [resolvable:$true] %s71
      %74 = dma.vmem_to_smem %s72, 16, [#allocation13], [#allocation12]
    $region21: #{tpu_custom_call.1} parent=1 // pred_fallthru
      _
    // Predicated region
    $region22: #{tpu_custom_call.1} parent=1 // pred_check
      _
    $region23: #{tpu_custom_call.1} parent=1 // pred_check_branch
      %76 = sbr.rel (0) target = $region25
    $region24: #{tpu_custom_call.1} parent=1 // pred_region
      %s78 = ssub.s32 16, 16
      %79 = vsyncadd [#allocation15], %s78
      %s81 = sshll.u32 %s5, 4
      %s82 = int_to_ptr.vmem [resolvable:$true] %s81
      %84 = dma.vmem_to_smem %s82, 16, [#allocation14], [#allocation15]
    $region25: #{tpu_custom_call.1} parent=1 // pred_fallthru
      _
    // Predicated region
    $region26: #{tpu_custom_call.1} parent=1 // pred_check
      _
    $region27: #{tpu_custom_call.1} parent=1 // pred_check_branch
      %86 = sbr.rel (0) target = $region29
    $region28: #{tpu_custom_call.1} parent=1 // pred_region
      %s88 = ssub.s32 32, 32
      %89 = vsyncadd [#allocation15], %s88
      %s91 = sshll.u32 %s6, 4
      %s92 = int_to_ptr.vmem [resolvable:$true] %s91
      %94 = dma.vmem_to_smem %s92, 32, [#allocation16], [#allocation15]
    $region29: #{tpu_custom_call.1} parent=1 // pred_fallthru
      _
    // Predicated region
    $region30: #{tpu_custom_call.1} parent=1 // pred_check
      _
    $region31: #{tpu_custom_call.1} parent=1 // pred_check_branch
      %96 = sbr.rel (0) target = $region33
    $region32: #{tpu_custom_call.1} parent=1 // pred_region
      %s98 = ssub.s32 16, 16
      %99 = vsyncadd [#allocation18], %s98
      %s101 = sshll.u32 %s7, 4
      %s102 = int_to_ptr.vmem [resolvable:$true] %s101
      %104 = dma.vmem_to_smem %s102, 16, [#allocation17], [#allocation18]
    $region33: #{tpu_custom_call.1} parent=1 // pred_fallthru
      _
    // Predicated region
    $region34: #{tpu_custom_call.1} parent=1 // pred_check
      _
    $region35: #{tpu_custom_call.1} parent=1 // pred_check_branch
      %106 = sbr.rel (0) target = $region37
    $region36: #{tpu_custom_call.1} parent=1 // pred_region
      %s108 = ssub.s32 16, 16
      %109 = vsyncadd [#allocation18], %s108
      %s111 = sshll.u32 %s8, 4
      %s112 = int_to_ptr.vmem [resolvable:$true] %s111
      %114 = dma.vmem_to_smem %s112, 16, [#allocation19], [#allocation18]
    $region37: #{tpu_custom_call.1} parent=1 // pred_fallthru
      _
    // Predicated region
    $region38: #{tpu_custom_call.1} parent=1 // pred_check
      _
    $region39: #{tpu_custom_call.1} parent=1 // pred_check_branch
      %116 = sbr.rel (0) target = $region41
    $region40: #{tpu_custom_call.1} parent=1 // pred_region
      _
    $region41: #{tpu_custom_call.1} parent=1 // pred_fallthru
      _
    // Predicated region
    $region42: #{tpu_custom_call.1} parent=1 // pred_check
      _
    $region43: #{tpu_custom_call.1} parent=1 // pred_check_branch
      %118 = sbr.rel (0) target = $region45
    $region44: #{tpu_custom_call.1} parent=1 // pred_region
      %119 = dma.done [#allocation5], 256
    $region45: #{tpu_custom_call.1} parent=1 // pred_fallthru
      _
    // Predicated region
    $region46: #{tpu_custom_call.1} parent=1 // pred_check
      _
    $region47: #{tpu_custom_call.1} parent=1 // pred_check_branch
      %121 = sbr.rel (0) target = $region49
    $region48: #{tpu_custom_call.1} parent=1 // pred_region
      %122 = dma.done [#allocation9], 512
    $region49: #{tpu_custom_call.1} parent=1 // pred_fallthru
      _
    // Predicated region
    $region50: #{tpu_custom_call.1} parent=1 // pred_check
      _
    $region51: #{tpu_custom_call.1} parent=1 // pred_check_branch
      %124 = sbr.rel (0) target = $region53
    $region52: #{tpu_custom_call.1} parent=1 // pred_region
      %125 = dma.done [#allocation7], 32
    $region53: #{tpu_custom_call.1} parent=1 // pred_fallthru
      _
    // Predicated region
    $region54: #{tpu_custom_call.1} parent=1 // pred_check
      _
    $region55: #{tpu_custom_call.1} parent=1 // pred_check_branch
      %127 = sbr.rel (0) target = $region57
    $region56: #{tpu_custom_call.1} parent=1 // pred_region
      %128 = dma.done [#allocation12], 16
    $region57: #{tpu_custom_call.1} parent=1 // pred_fallthru
      _
    // Predicated region
    $region58: #{tpu_custom_call.1} parent=1 // pred_check
      _
    $region59: #{tpu_custom_call.1} parent=1 // pred_check_branch
      %130 = sbr.rel (0) target = $region61
    $region60: #{tpu_custom_call.1} parent=1 // pred_region
      %131 = dma.done [#allocation12], 16
    $region61: #{tpu_custom_call.1} parent=1 // pred_fallthru
      _
    // Predicated region
    $region62: #{tpu_custom_call.1} parent=1 // pred_check
      _
    $region63: #{tpu_custom_call.1} parent=1 // pred_check_branch
      %133 = sbr.rel (0) target = $region65
    $region64: #{tpu_custom_call.1} parent=1 // pred_region
      %134 = dma.done [#allocation15], 16
    $region65: #{tpu_custom_call.1} parent=1 // pred_fallthru
      _
    // Predicated region
    $region66: #{tpu_custom_call.1} parent=1 // pred_check
      _
    $region67: #{tpu_custom_call.1} parent=1 // pred_check_branch
      %136 = sbr.rel (0) target = $region69
    $region68: #{tpu_custom_call.1} parent=1 // pred_region
      %137 = dma.done [#allocation15], 32
    $region69: #{tpu_custom_call.1} parent=1 // pred_fallthru
      _
    // Predicated region
    $region70: #{tpu_custom_call.1} parent=1 // pred_check
      _
    $region71: #{tpu_custom_call.1} parent=1 // pred_check_branch
      %139 = sbr.rel (0) target = $region73
    $region72: #{tpu_custom_call.1} parent=1 // pred_region
      %140 = dma.done [#allocation18], 16
    $region73: #{tpu_custom_call.1} parent=1 // pred_fallthru
      _
    // Predicated region
    $region74: #{tpu_custom_call.1} parent=1 // pred_check
      _
    $region75: #{tpu_custom_call.1} parent=1 // pred_check_branch
      %142 = sbr.rel (0) target = $region77
    $region76: #{tpu_custom_call.1} parent=1 // pred_region
      %143 = dma.done [#allocation18], 16
    $region77: #{tpu_custom_call.1} parent=1 // pred_fallthru
      _
    %144 = sfence
    %v145 = vld [vmem:[#allocation4] sm:$0xff]
    %v146 = vld [vmem:[#allocation4 + $0x8] sm:$0xff]
    %v147 = vld [vmem:[#allocation8] sm:$0xff]
    %v148 = vld [vmem:[#allocation8 + $0x8] sm:$0xff]
    %v149 = vld [vmem:[#allocation8 + $0x10] sm:$0x1]
    %v150 = vld [vmem:[#allocation8 + $0x18] sm:$0x1]
    %151 = vrot.lane.b32.xlu0 %v145, 17
    %v152 = vpop.permute.xlu0 %151
    %153 = vrot.lane.b32.xlu0 %v146, 17
    %v154 = vpop.permute.xlu0 %153
    %v155 = vlaneseq
    %v156 = vand.u32 %v155, 127
    %vm157 = vcmp.lt.s32.totalorder %v156, 17
    %v158 = vsel %vm157, %v152, %v154
    %v159 = vsel %vm157, %v154, %v152
    %v160 = vlaneseq
    %v161 = vshrl.u32 %v160, 7
    %v162 = vsub.s32 0, %v161
    %v163 = vrot.slane %v147, %v162
    %v164 = vlaneseq
    %v165 = vshrl.u32 %v164, 7
    %v166 = vsub.s32 0, %v165
    %v167 = vrot.slane %v148, %v166
    %v168 = vmul.f32 %v159, %v163
    %v169 = vmul.f32 %v158, %v167
    %s170 = sld [smem:[#allocation10]]
    %v171 = vstv %s170
    %v172 = vmul.f32 %v171, %v168
    %v173 = vmul.f32 %v171, %v169
    %v174 = vadd.f32 %v172, 0.0
    %v175 = vadd.f32 %v173, 0.0
    %s176 = sld [smem:[#allocation10 + $0x1]]
    %v177 = vstv %s176
    %v178 = vmul.f32 %v177, %v168
    %v179 = vmul.f32 %v177, %v169
    %v180 = vadd.f32 %v178, 0.0
    %v181 = vadd.f32 %v179, 0.0
    %s182 = sld [smem:[#allocation10 + $0x2]]
    %v183 = vstv %s182
    %v184 = vmul.f32 %v183, %v168
    %v185 = vmul.f32 %v183, %v169
    %v186 = vadd.f32 %v184, 0.0
    %v187 = vadd.f32 %v185, 0.0
    %s188 = sld [smem:[#allocation10 + $0x3]]
    %v189 = vstv %s188
    %v190 = vmul.f32 %v189, %v168
    %v191 = vmul.f32 %v189, %v169
    %v192 = vadd.f32 %v190, 0.0
    %v193 = vadd.f32 %v191, 0.0
    %s194 = sld [smem:[#allocation10 + $0x4]]
    %v195 = vstv %s194
    %v196 = vmul.f32 %v195, %v168
    %v197 = vmul.f32 %v195, %v169
    %v200 = vrot.slane %v196, 2
    %v201 = vrot.slane %v197, 2
    %v204 = vadd.f32 %v174, %v200
    %v205 = vadd.f32 %v175, %v201
    %s206 = sld [smem:[#allocation10 + $0x5]]
    %v207 = vstv %s206
    %v208 = vmul.f32 %v207, %v168
    %v209 = vmul.f32 %v207, %v169
    %v212 = vrot.slane %v208, 2
    %v213 = vrot.slane %v209, 2
    %v216 = vadd.f32 %v180, %v212
    %v217 = vadd.f32 %v181, %v213
    %s218 = sld [smem:[#allocation10 + $0x6]]
    %v219 = vstv %s218
    %v220 = vmul.f32 %v219, %v168
    %v221 = vmul.f32 %v219, %v169
    %v224 = vrot.slane %v220, 2
    %v225 = vrot.slane %v221, 2
    %v228 = vadd.f32 %v186, %v224
    %v229 = vadd.f32 %v187, %v225
    %s230 = sld [smem:[#allocation10 + $0x7]]
    %v231 = vstv %s230
    %v232 = vmul.f32 %v231, %v168
    %v233 = vmul.f32 %v231, %v169
    %v236 = vrot.slane %v232, 2
    %v237 = vrot.slane %v233, 2
    %v240 = vadd.f32 %v192, %v236
    %v241 = vadd.f32 %v193, %v237
    %s242 = sld [smem:[#allocation10 + $0x8]]
    %v243 = vstv %s242
    %v244 = vmul.f32 %v243, %v168
    %v245 = vmul.f32 %v243, %v169
    %v248 = vrot.slane %v244, 4
    %v249 = vrot.slane %v245, 4
    %v252 = vadd.f32 %v204, %v248
    %v253 = vadd.f32 %v205, %v249
    %s254 = sld [smem:[#allocation10 + $0x9]]
    %v255 = vstv %s254
    %v256 = vmul.f32 %v255, %v168
    %v257 = vmul.f32 %v255, %v169
    %v260 = vrot.slane %v256, 4
    %v261 = vrot.slane %v257, 4
    %v264 = vadd.f32 %v216, %v260
    %v265 = vadd.f32 %v217, %v261
    %s266 = sld [smem:[#allocation10 + $0xa]]
    %v267 = vstv %s266
    %v268 = vmul.f32 %v267, %v168
    %v269 = vmul.f32 %v267, %v169
    %v272 = vrot.slane %v268, 4
    %v273 = vrot.slane %v269, 4
    %v276 = vadd.f32 %v228, %v272
    %v277 = vadd.f32 %v229, %v273
    %s278 = sld [smem:[#allocation10 + $0xb]]
    %v279 = vstv %s278
    %v280 = vmul.f32 %v279, %v168
    %v281 = vmul.f32 %v279, %v169
    %v284 = vrot.slane %v280, 4
    %v285 = vrot.slane %v281, 4
    %v288 = vadd.f32 %v240, %v284
    %v289 = vadd.f32 %v241, %v285
    %s290 = sld [smem:[#allocation10 + $0xc]]
    %v291 = vstv %s290
    %v292 = vmul.f32 %v291, %v168
    %v293 = vmul.f32 %v291, %v169
    %v296 = vrot.slane %v292, 6
    %v297 = vrot.slane %v293, 6
    %v300 = vadd.f32 %v252, %v296
    %v301 = vadd.f32 %v253, %v297
    %s302 = sld [smem:[#allocation10 + $0xd]]
    %v303 = vstv %s302
    %v304 = vmul.f32 %v303, %v168
    %v305 = vmul.f32 %v303, %v169
    %v308 = vrot.slane %v304, 6
    %v309 = vrot.slane %v305, 6
    %v312 = vadd.f32 %v264, %v308
    %v313 = vadd.f32 %v265, %v309
    %s314 = sld [smem:[#allocation10 + $0xe]]
    %v315 = vstv %s314
    %v316 = vmul.f32 %v315, %v168
    %v317 = vmul.f32 %v315, %v169
    %v320 = vrot.slane %v316, 6
    %v321 = vrot.slane %v317, 6
    %v324 = vadd.f32 %v276, %v320
    %v325 = vadd.f32 %v277, %v321
    %s326 = sld [smem:[#allocation10 + $0xf]]
    %v327 = vstv %s326
    %v328 = vmul.f32 %v327, %v168
    %v329 = vmul.f32 %v327, %v169
    %v332 = vrot.slane %v328, 6
    %v333 = vrot.slane %v329, 6
    %v336 = vadd.f32 %v288, %v332
    %v337 = vadd.f32 %v289, %v333
    %338 = vrot.lane.b32.xlu0 %v145, 16
    %v339 = vpop.permute.xlu0 %338
    %340 = vrot.lane.b32.xlu0 %v146, 16
    %v341 = vpop.permute.xlu0 %340
    %vm342 = vcmp.lt.s32.totalorder %v156, 16
    %v343 = vsel %vm342, %v339, %v341
    %v344 = vsel %vm342, %v341, %v339
    %v345 = vlaneseq
    %v346 = vshrl.u32 %v345, 7
    %v347 = vsub.s32 1, %v346
    %v348 = vrot.slane %v147, %v347
    %v349 = vlaneseq
    %v350 = vshrl.u32 %v349, 7
    %v351 = vsub.s32 1, %v350
    %v352 = vrot.slane %v148, %v351
    %v353 = vmul.f32 %v344, %v348
    %v354 = vmul.f32 %v343, %v352
    %s355 = sld [smem:[#allocation10 + $0x10]]
    %v356 = vstv %s355
    %v357 = vmul.f32 %v356, %v353
    %v358 = vmul.f32 %v356, %v354
    %v359 = vadd.f32 %v300, %v357
    %v360 = vadd.f32 %v301, %v358
    %s361 = sld [smem:[#allocation10 + $0x11]]
    %v362 = vstv %s361
    %v363 = vmul.f32 %v362, %v353
    %v364 = vmul.f32 %v362, %v354
    %v365 = vadd.f32 %v312, %v363
    %v366 = vadd.f32 %v313, %v364
    %s367 = sld [smem:[#allocation10 + $0x12]]
    %v368 = vstv %s367
    %v369 = vmul.f32 %v368, %v353
    %v370 = vmul.f32 %v368, %v354
    %v371 = vadd.f32 %v324, %v369
    %v372 = vadd.f32 %v325, %v370
    %s373 = sld [smem:[#allocation10 + $0x13]]
    %v374 = vstv %s373
    %v375 = vmul.f32 %v374, %v353
    %v376 = vmul.f32 %v374, %v354
    %v377 = vadd.f32 %v336, %v375
    %v378 = vadd.f32 %v337, %v376
    %s379 = sld [smem:[#allocation10 + $0x14]]
    %v380 = vstv %s379
    %v381 = vmul.f32 %v380, %v353
    %v382 = vmul.f32 %v380, %v354
    %v385 = vrot.slane %v381, 2
    %v386 = vrot.slane %v382, 2
    %v389 = vadd.f32 %v359, %v385
    %v390 = vadd.f32 %v360, %v386
    %s391 = sld [smem:[#allocation10 + $0x15]]
    %v392 = vstv %s391
    %v393 = vmul.f32 %v392, %v353
    %v394 = vmul.f32 %v392, %v354
    %v397 = vrot.slane %v393, 2
    %v398 = vrot.slane %v394, 2
    %v401 = vadd.f32 %v365, %v397
    %v402 = vadd.f32 %v366, %v398
    %s403 = sld [smem:[#allocation10 + $0x16]]
    %v404 = vstv %s403
    %v405 = vmul.f32 %v404, %v353
    %v406 = vmul.f32 %v404, %v354
    %v409 = vrot.slane %v405, 2
    %v410 = vrot.slane %v406, 2
    %v413 = vadd.f32 %v371, %v409
    %v414 = vadd.f32 %v372, %v410
    %s415 = sld [smem:[#allocation10 + $0x17]]
    %v416 = vstv %s415
    %v417 = vmul.f32 %v416, %v353
    %v418 = vmul.f32 %v416, %v354
    %v421 = vrot.slane %v417, 2
    %v422 = vrot.slane %v418, 2
    %v425 = vadd.f32 %v377, %v421
    %v426 = vadd.f32 %v378, %v422
    %s427 = sld [smem:[#allocation10 + $0x18]]
    %v428 = vstv %s427
    %v429 = vmul.f32 %v428, %v353
    %v430 = vmul.f32 %v428, %v354
    %v433 = vrot.slane %v429, 4
    %v434 = vrot.slane %v430, 4
    %v437 = vadd.f32 %v389, %v433
    %v438 = vadd.f32 %v390, %v434
    %s439 = sld [smem:[#allocation10 + $0x19]]
    %v440 = vstv %s439
    %v441 = vmul.f32 %v440, %v353
    %v442 = vmul.f32 %v440, %v354
    %v445 = vrot.slane %v441, 4
    %v446 = vrot.slane %v442, 4
    %v449 = vadd.f32 %v401, %v445
    %v450 = vadd.f32 %v402, %v446
    %s451 = sld [smem:[#allocation10 + $0x1a]]
    %v452 = vstv %s451
    %v453 = vmul.f32 %v452, %v353
    %v454 = vmul.f32 %v452, %v354
    %v457 = vrot.slane %v453, 4
    %v458 = vrot.slane %v454, 4
    %v461 = vadd.f32 %v413, %v457
    %v462 = vadd.f32 %v414, %v458
    %s463 = sld [smem:[#allocation10 + $0x1b]]
    %v464 = vstv %s463
    %v465 = vmul.f32 %v464, %v353
    %v466 = vmul.f32 %v464, %v354
    %v469 = vrot.slane %v465, 4
    %v470 = vrot.slane %v466, 4
    %v473 = vadd.f32 %v425, %v469
    %v474 = vadd.f32 %v426, %v470
    %s475 = sld [smem:[#allocation10 + $0x1c]]
    %v476 = vstv %s475
    %v477 = vmul.f32 %v476, %v353
    %v478 = vmul.f32 %v476, %v354
    %v481 = vrot.slane %v477, 6
    %v482 = vrot.slane %v478, 6
    %v485 = vadd.f32 %v437, %v481
    %v486 = vadd.f32 %v438, %v482
    %s487 = sld [smem:[#allocation10 + $0x1d]]
    %v488 = vstv %s487
    %v489 = vmul.f32 %v488, %v353
    %v490 = vmul.f32 %v488, %v354
    %v493 = vrot.slane %v489, 6
    %v494 = vrot.slane %v490, 6
    %v497 = vadd.f32 %v449, %v493
    %v498 = vadd.f32 %v450, %v494
    %s499 = sld [smem:[#allocation10 + $0x1e]]
    %v500 = vstv %s499
    %v501 = vmul.f32 %v500, %v353
    %v502 = vmul.f32 %v500, %v354
    %v505 = vrot.slane %v501, 6
    %v506 = vrot.slane %v502, 6
    %v509 = vadd.f32 %v461, %v505
    %v510 = vadd.f32 %v462, %v506
    %s511 = sld [smem:[#allocation10 + $0x1f]]
    %v512 = vstv %s511
    %v513 = vmul.f32 %v512, %v353
    %v514 = vmul.f32 %v512, %v354
    %v517 = vrot.slane %v513, 6
    %v518 = vrot.slane %v514, 6
    %v521 = vadd.f32 %v473, %v517
    %v522 = vadd.f32 %v474, %v518
    %523 = vrot.lane.b32.xlu0 %v145, 15
    %v524 = vpop.permute.xlu0 %523
    %525 = vrot.lane.b32.xlu0 %v146, 15
    %v526 = vpop.permute.xlu0 %525
    %vm527 = vcmp.lt.s32.totalorder %v156, 15
    %v528 = vsel %vm527, %v524, %v526
    %v529 = vsel %vm527, %v526, %v524
    %v530 = vlaneseq
    %v531 = vshrl.u32 %v530, 7
    %v532 = vsub.s32 2, %v531
    %v533 = vrot.slane %v147, %v532
    %v534 = vlaneseq
    %v535 = vshrl.u32 %v534, 7
    %v536 = vsub.s32 2, %v535
    %v537 = vrot.slane %v148, %v536
    %v538 = vmul.f32 %v529, %v533
    %v539 = vmul.f32 %v528, %v537
    %s540 = sld [smem:[#allocation10 + $0x20]]
    %v541 = vstv %s540
    %v542 = vmul.f32 %v541, %v538
    %v543 = vmul.f32 %v541, %v539
    %v544 = vadd.f32 %v485, %v542
    %v545 = vadd.f32 %v486, %v543
    %s546 = sld [smem:[#allocation10 + $0x21]]
    %v547 = vstv %s546
    %v548 = vmul.f32 %v547, %v538
    %v549 = vmul.f32 %v547, %v539
    %v550 = vadd.f32 %v497, %v548
    %v551 = vadd.f32 %v498, %v549
    %s552 = sld [smem:[#allocation10 + $0x22]]
    %v553 = vstv %s552
    %v554 = vmul.f32 %v553, %v538
    %v555 = vmul.f32 %v553, %v539
    %v556 = vadd.f32 %v509, %v554
    %v557 = vadd.f32 %v510, %v555
    %s558 = sld [smem:[#allocation10 + $0x23]]
    %v559 = vstv %s558
    %v560 = vmul.f32 %v559, %v538
    %v561 = vmul.f32 %v559, %v539
    %v562 = vadd.f32 %v521, %v560
    %v563 = vadd.f32 %v522, %v561
    %s564 = sld [smem:[#allocation10 + $0x24]]
    %v565 = vstv %s564
    %v566 = vmul.f32 %v565, %v538
    %v567 = vmul.f32 %v565, %v539
    %v570 = vrot.slane %v566, 2
    %v571 = vrot.slane %v567, 2
    %v574 = vadd.f32 %v544, %v570
    %v575 = vadd.f32 %v545, %v571
    %s576 = sld [smem:[#allocation10 + $0x25]]
    %v577 = vstv %s576
    %v578 = vmul.f32 %v577, %v538
    %v579 = vmul.f32 %v577, %v539
    %v582 = vrot.slane %v578, 2
    %v583 = vrot.slane %v579, 2
    %v586 = vadd.f32 %v550, %v582
    %v587 = vadd.f32 %v551, %v583
    %s588 = sld [smem:[#allocation10 + $0x26]]
    %v589 = vstv %s588
    %v590 = vmul.f32 %v589, %v538
    %v591 = vmul.f32 %v589, %v539
    %v594 = vrot.slane %v590, 2
    %v595 = vrot.slane %v591, 2
    %v598 = vadd.f32 %v556, %v594
    %v599 = vadd.f32 %v557, %v595
    %s600 = sld [smem:[#allocation10 + $0x27]]
    %v601 = vstv %s600
    %v602 = vmul.f32 %v601, %v538
    %v603 = vmul.f32 %v601, %v539
    %v606 = vrot.slane %v602, 2
    %v607 = vrot.slane %v603, 2
    %v610 = vadd.f32 %v562, %v606
    %v611 = vadd.f32 %v563, %v607
    %s612 = sld [smem:[#allocation10 + $0x28]]
    %v613 = vstv %s612
    %v614 = vmul.f32 %v613, %v538
    %v615 = vmul.f32 %v613, %v539
    %v618 = vrot.slane %v614, 4
    %v619 = vrot.slane %v615, 4
    %v622 = vadd.f32 %v574, %v618
    %v623 = vadd.f32 %v575, %v619
    %s624 = sld [smem:[#allocation10 + $0x29]]
    %v625 = vstv %s624
    %v626 = vmul.f32 %v625, %v538
    %v627 = vmul.f32 %v625, %v539
    %v630 = vrot.slane %v626, 4
    %v631 = vrot.slane %v627, 4
    %v634 = vadd.f32 %v586, %v630
    %v635 = vadd.f32 %v587, %v631
    %s636 = sld [smem:[#allocation10 + $0x2a]]
    %v637 = vstv %s636
    %v638 = vmul.f32 %v637, %v538
    %v639 = vmul.f32 %v637, %v539
    %v642 = vrot.slane %v638, 4
    %v643 = vrot.slane %v639, 4
    %v646 = vadd.f32 %v598, %v642
    %v647 = vadd.f32 %v599, %v643
    %s648 = sld [smem:[#allocation10 + $0x2b]]
    %v649 = vstv %s648
    %v650 = vmul.f32 %v649, %v538
    %v651 = vmul.f32 %v649, %v539
    %v654 = vrot.slane %v650, 4
    %v655 = vrot.slane %v651, 4
    %v658 = vadd.f32 %v610, %v654
    %v659 = vadd.f32 %v611, %v655
    %s660 = sld [smem:[#allocation10 + $0x2c]]
    %v661 = vstv %s660
    %v662 = vmul.f32 %v661, %v538
    %v663 = vmul.f32 %v661, %v539
    %v666 = vrot.slane %v662, 6
    %v667 = vrot.slane %v663, 6
    %v670 = vadd.f32 %v622, %v666
    %v671 = vadd.f32 %v623, %v667
    %s672 = sld [smem:[#allocation10 + $0x2d]]
    %v673 = vstv %s672
    %v674 = vmul.f32 %v673, %v538
    %v675 = vmul.f32 %v673, %v539
    %v678 = vrot.slane %v674, 6
    %v679 = vrot.slane %v675, 6
    %v682 = vadd.f32 %v634, %v678
    %v683 = vadd.f32 %v635, %v679
    %s684 = sld [smem:[#allocation10 + $0x2e]]
    %v685 = vstv %s684
    %v686 = vmul.f32 %v685, %v538
    %v687 = vmul.f32 %v685, %v539
    %v690 = vrot.slane %v686, 6
    %v691 = vrot.slane %v687, 6
    %v694 = vadd.f32 %v646, %v690
    %v695 = vadd.f32 %v647, %v691
    %s696 = sld [smem:[#allocation10 + $0x2f]]
    %v697 = vstv %s696
    %v698 = vmul.f32 %v697, %v538
    %v699 = vmul.f32 %v697, %v539
    %v702 = vrot.slane %v698, 6
    %v703 = vrot.slane %v699, 6
    %v706 = vadd.f32 %v658, %v702
    %v707 = vadd.f32 %v659, %v703
    %708 = vrot.lane.b32.xlu0 %v145, 1
    %v709 = vpop.permute.xlu0 %708
    %710 = vrot.lane.b32.xlu0 %v146, 1
    %v711 = vpop.permute.xlu0 %710
    %vm712 = vcmp.lt.s32.totalorder %v156, 1
    %v713 = vsel %vm712, %v709, %v711
    %v714 = vsel %vm712, %v711, %v709
    %v715 = vlaneseq
    %v716 = vshrl.u32 %v715, 7
    %v717 = vsub.s32 3, %v716
    %v718 = vrot.slane %v147, %v717
    %v719 = vlaneseq
    %v720 = vshrl.u32 %v719, 7
    %v721 = vsub.s32 3, %v720
    %v722 = vrot.slane %v148, %v721
    %v723 = vmul.f32 %v714, %v718
    %v724 = vmul.f32 %v713, %v722
    %s725 = sld [smem:[#allocation10 + $0x30]]
    %v726 = vstv %s725
    %v727 = vmul.f32 %v726, %v723
    %v728 = vmul.f32 %v726, %v724
    %v729 = vadd.f32 %v670, %v727
    %v730 = vadd.f32 %v671, %v728
    %s731 = sld [smem:[#allocation10 + $0x31]]
    %v732 = vstv %s731
    %v733 = vmul.f32 %v732, %v723
    %v734 = vmul.f32 %v732, %v724
    %v735 = vadd.f32 %v682, %v733
    %v736 = vadd.f32 %v683, %v734
    %s737 = sld [smem:[#allocation10 + $0x32]]
    %v738 = vstv %s737
    %v739 = vmul.f32 %v738, %v723
    %v740 = vmul.f32 %v738, %v724
    %v741 = vadd.f32 %v694, %v739
    %v742 = vadd.f32 %v695, %v740
    %s743 = sld [smem:[#allocation10 + $0x33]]
    %v744 = vstv %s743
    %v745 = vmul.f32 %v744, %v723
    %v746 = vmul.f32 %v744, %v724
    %v747 = vadd.f32 %v706, %v745
    %v748 = vadd.f32 %v707, %v746
    %s749 = sld [smem:[#allocation10 + $0x34]]
    %v750 = vstv %s749
    %v751 = vmul.f32 %v750, %v723
    %v752 = vmul.f32 %v750, %v724
    %v755 = vrot.slane %v751, 2
    %v756 = vrot.slane %v752, 2
    %v759 = vadd.f32 %v729, %v755
    %v760 = vadd.f32 %v730, %v756
    %s761 = sld [smem:[#allocation10 + $0x35]]
    %v762 = vstv %s761
    %v763 = vmul.f32 %v762, %v723
    %v764 = vmul.f32 %v762, %v724
    %v767 = vrot.slane %v763, 2
    %v768 = vrot.slane %v764, 2
    %v771 = vadd.f32 %v735, %v767
    %v772 = vadd.f32 %v736, %v768
    %s773 = sld [smem:[#allocation10 + $0x36]]
    %v774 = vstv %s773
    %v775 = vmul.f32 %v774, %v723
    %v776 = vmul.f32 %v774, %v724
    %v779 = vrot.slane %v775, 2
    %v780 = vrot.slane %v776, 2
    %v783 = vadd.f32 %v741, %v779
    %v784 = vadd.f32 %v742, %v780
    %s785 = sld [smem:[#allocation10 + $0x37]]
    %v786 = vstv %s785
    %v787 = vmul.f32 %v786, %v723
    %v788 = vmul.f32 %v786, %v724
    %v791 = vrot.slane %v787, 2
    %v792 = vrot.slane %v788, 2
    %v795 = vadd.f32 %v747, %v791
    %v796 = vadd.f32 %v748, %v792
    %s797 = sld [smem:[#allocation10 + $0x38]]
    %v798 = vstv %s797
    %v799 = vmul.f32 %v798, %v723
    %v800 = vmul.f32 %v798, %v724
    %v803 = vrot.slane %v799, 4
    %v804 = vrot.slane %v800, 4
    %v807 = vadd.f32 %v759, %v803
    %v808 = vadd.f32 %v760, %v804
    %s809 = sld [smem:[#allocation10 + $0x39]]
    %v810 = vstv %s809
    %v811 = vmul.f32 %v810, %v723
    %v812 = vmul.f32 %v810, %v724
    %v815 = vrot.slane %v811, 4
    %v816 = vrot.slane %v812, 4
    %v819 = vadd.f32 %v771, %v815
    %v820 = vadd.f32 %v772, %v816
    %s821 = sld [smem:[#allocation10 + $0x3a]]
    %v822 = vstv %s821
    %v823 = vmul.f32 %v822, %v723
    %v824 = vmul.f32 %v822, %v724
    %v827 = vrot.slane %v823, 4
    %v828 = vrot.slane %v824, 4
    %v831 = vadd.f32 %v783, %v827
    %v832 = vadd.f32 %v784, %v828
    %s833 = sld [smem:[#allocation10 + $0x3b]]
    %v834 = vstv %s833
    %v835 = vmul.f32 %v834, %v723
    %v836 = vmul.f32 %v834, %v724
    %v839 = vrot.slane %v835, 4
    %v840 = vrot.slane %v836, 4
    %v843 = vadd.f32 %v795, %v839
    %v844 = vadd.f32 %v796, %v840
    %s845 = sld [smem:[#allocation10 + $0x3c]]
    %v846 = vstv %s845
    %v847 = vmul.f32 %v846, %v723
    %v848 = vmul.f32 %v846, %v724
    %v851 = vrot.slane %v847, 6
    %v852 = vrot.slane %v848, 6
    %v855 = vadd.f32 %v807, %v851
    %v856 = vadd.f32 %v808, %v852
    %s857 = sld [smem:[#allocation10 + $0x3d]]
    %v858 = vstv %s857
    %v859 = vmul.f32 %v858, %v723
    %v860 = vmul.f32 %v858, %v724
    %v863 = vrot.slane %v859, 6
    %v864 = vrot.slane %v860, 6
    %v867 = vadd.f32 %v819, %v863
    %v868 = vadd.f32 %v820, %v864
    %s869 = sld [smem:[#allocation10 + $0x3e]]
    %v870 = vstv %s869
    %v871 = vmul.f32 %v870, %v723
    %v872 = vmul.f32 %v870, %v724
    %v875 = vrot.slane %v871, 6
    %v876 = vrot.slane %v872, 6
    %v879 = vadd.f32 %v831, %v875
    %v880 = vadd.f32 %v832, %v876
    %s881 = sld [smem:[#allocation10 + $0x3f]]
    %v882 = vstv %s881
    %v883 = vmul.f32 %v882, %v723
    %v884 = vmul.f32 %v882, %v724
    %v887 = vrot.slane %v883, 6
    %v888 = vrot.slane %v884, 6
    %v891 = vadd.f32 %v843, %v887
    %v892 = vadd.f32 %v844, %v888
    %v893 = vlaneseq
    %v894 = vshrl.u32 %v893, 7
    %v895 = vsub.s32 4, %v894
    %v896 = vrot.slane %v147, %v895
    %v897 = vlaneseq
    %v898 = vshrl.u32 %v897, 7
    %v899 = vsub.s32 4, %v898
    %v900 = vrot.slane %v148, %v899
    %v901 = vmul.f32 %v145, %v896
    %v902 = vmul.f32 %v146, %v900
    %s903 = sld [smem:[#allocation10 + $0x40]]
    %v904 = vstv %s903
    %v905 = vmul.f32 %v904, %v901
    %v906 = vmul.f32 %v904, %v902
    %v907 = vadd.f32 %v855, %v905
    %v908 = vadd.f32 %v856, %v906
    %s909 = sld [smem:[#allocation10 + $0x41]]
    %v910 = vstv %s909
    %v911 = vmul.f32 %v910, %v901
    %v912 = vmul.f32 %v910, %v902
    %v913 = vadd.f32 %v867, %v911
    %v914 = vadd.f32 %v868, %v912
    %s915 = sld [smem:[#allocation10 + $0x42]]
    %v916 = vstv %s915
    %v917 = vmul.f32 %v916, %v901
    %v918 = vmul.f32 %v916, %v902
    %v919 = vadd.f32 %v879, %v917
    %v920 = vadd.f32 %v880, %v918
    %s921 = sld [smem:[#allocation10 + $0x43]]
    %v922 = vstv %s921
    %v923 = vmul.f32 %v922, %v901
    %v924 = vmul.f32 %v922, %v902
    %v925 = vadd.f32 %v891, %v923
    %v926 = vadd.f32 %v892, %v924
    %s927 = sld [smem:[#allocation10 + $0x44]]
    %v928 = vstv %s927
    %v929 = vmul.f32 %v928, %v901
    %v930 = vmul.f32 %v928, %v902
    %v933 = vrot.slane %v929, 2
    %v934 = vrot.slane %v930, 2
    %v937 = vadd.f32 %v907, %v933
    %v938 = vadd.f32 %v908, %v934
    %s939 = sld [smem:[#allocation10 + $0x45]]
    %v940 = vstv %s939
    %v941 = vmul.f32 %v940, %v901
    %v942 = vmul.f32 %v940, %v902
    %v945 = vrot.slane %v941, 2
    %v946 = vrot.slane %v942, 2
    %v949 = vadd.f32 %v913, %v945
    %v950 = vadd.f32 %v914, %v946
    %s951 = sld [smem:[#allocation10 + $0x46]]
    %v952 = vstv %s951
    %v953 = vmul.f32 %v952, %v901
    %v954 = vmul.f32 %v952, %v902
    %v957 = vrot.slane %v953, 2
    %v958 = vrot.slane %v954, 2
    %v961 = vadd.f32 %v919, %v957
    %v962 = vadd.f32 %v920, %v958
    %s963 = sld [smem:[#allocation10 + $0x47]]
    %v964 = vstv %s963
    %v965 = vmul.f32 %v964, %v901
    %v966 = vmul.f32 %v964, %v902
    %v969 = vrot.slane %v965, 2
    %v970 = vrot.slane %v966, 2
    %v973 = vadd.f32 %v925, %v969
    %v974 = vadd.f32 %v926, %v970
    %s975 = sld [smem:[#allocation10 + $0x48]]
    %v976 = vstv %s975
    %v977 = vmul.f32 %v976, %v901
    %v978 = vmul.f32 %v976, %v902
    %v981 = vrot.slane %v977, 4
    %v982 = vrot.slane %v978, 4
    %v985 = vadd.f32 %v937, %v981
    %v986 = vadd.f32 %v938, %v982
    %s987 = sld [smem:[#allocation10 + $0x49]]
    %v988 = vstv %s987
    %v989 = vmul.f32 %v988, %v901
    %v990 = vmul.f32 %v988, %v902
    %v993 = vrot.slane %v989, 4
    %v994 = vrot.slane %v990, 4
    %v997 = vadd.f32 %v949, %v993
    %v998 = vadd.f32 %v950, %v994
    %s999 = sld [smem:[#allocation10 + $0x4a]]
    %v1000 = vstv %s999
    %v1001 = vmul.f32 %v1000, %v901
    %v1002 = vmul.f32 %v1000, %v902
    %v1005 = vrot.slane %v1001, 4
    %v1006 = vrot.slane %v1002, 4
    %v1009 = vadd.f32 %v961, %v1005
    %v1010 = vadd.f32 %v962, %v1006
    %s1011 = sld [smem:[#allocation10 + $0x4b]]
    %v1012 = vstv %s1011
    %v1013 = vmul.f32 %v1012, %v901
    %v1014 = vmul.f32 %v1012, %v902
    %v1017 = vrot.slane %v1013, 4
    %v1018 = vrot.slane %v1014, 4
    %v1021 = vadd.f32 %v973, %v1017
    %v1022 = vadd.f32 %v974, %v1018
    %s1023 = sld [smem:[#allocation10 + $0x4c]]
    %v1024 = vstv %s1023
    %v1025 = vmul.f32 %v1024, %v901
    %v1026 = vmul.f32 %v1024, %v902
    %v1029 = vrot.slane %v1025, 6
    %v1030 = vrot.slane %v1026, 6
    %v1033 = vadd.f32 %v985, %v1029
    %v1034 = vadd.f32 %v986, %v1030
    %s1035 = sld [smem:[#allocation10 + $0x4d]]
    %v1036 = vstv %s1035
    %v1037 = vmul.f32 %v1036, %v901
    %v1038 = vmul.f32 %v1036, %v902
    %v1041 = vrot.slane %v1037, 6
    %v1042 = vrot.slane %v1038, 6
    %v1045 = vadd.f32 %v997, %v1041
    %v1046 = vadd.f32 %v998, %v1042
    %s1047 = sld [smem:[#allocation10 + $0x4e]]
    %v1048 = vstv %s1047
    %v1049 = vmul.f32 %v1048, %v901
    %v1050 = vmul.f32 %v1048, %v902
    %v1053 = vrot.slane %v1049, 6
    %v1054 = vrot.slane %v1050, 6
    %v1057 = vadd.f32 %v1009, %v1053
    %v1058 = vadd.f32 %v1010, %v1054
    %s1059 = sld [smem:[#allocation10 + $0x4f]]
    %v1060 = vstv %s1059
    %v1061 = vmul.f32 %v1060, %v901
    %v1062 = vmul.f32 %v1060, %v902
    %v1065 = vrot.slane %v1061, 6
    %v1066 = vrot.slane %v1062, 6
    %v1069 = vadd.f32 %v1021, %v1065
    %v1070 = vadd.f32 %v1022, %v1066
    %1071 = vrot.lane.b32.xlu0 %v145, 127
    %v1072 = vpop.permute.xlu0 %1071
    %1073 = vrot.lane.b32.xlu0 %v146, 127
    %v1074 = vpop.permute.xlu0 %1073
    %vm1075 = vcmp.lt.s32.totalorder %v156, 127
    %v1076 = vsel %vm1075, %v1072, %v1074
    %v1077 = vsel %vm1075, %v1074, %v1072
    %v1078 = vlaneseq
    %v1079 = vshrl.u32 %v1078, 7
    %v1080 = vsub.s32 5, %v1079
    %v1081 = vrot.slane %v147, %v1080
    %v1082 = vlaneseq
    %v1083 = vshrl.u32 %v1082, 7
    %v1084 = vsub.s32 5, %v1083
    %v1085 = vrot.slane %v148, %v1084
    %v1086 = vmul.f32 %v1076, %v1081
    %v1087 = vmul.f32 %v1077, %v1085
    %s1088 = sld [smem:[#allocation10 + $0x50]]
    %v1089 = vstv %s1088
    %v1090 = vmul.f32 %v1089, %v1086
    %v1091 = vmul.f32 %v1089, %v1087
    %v1092 = vadd.f32 %v1033, %v1090
    %v1093 = vadd.f32 %v1034, %v1091
    %s1094 = sld [smem:[#allocation10 + $0x51]]
    %v1095 = vstv %s1094
    %v1096 = vmul.f32 %v1095, %v1086
    %v1097 = vmul.f32 %v1095, %v1087
    %v1098 = vadd.f32 %v1045, %v1096
    %v1099 = vadd.f32 %v1046, %v1097
    %s1100 = sld [smem:[#allocation10 + $0x52]]
    %v1101 = vstv %s1100
    %v1102 = vmul.f32 %v1101, %v1086
    %v1103 = vmul.f32 %v1101, %v1087
    %v1104 = vadd.f32 %v1057, %v1102
    %v1105 = vadd.f32 %v1058, %v1103
    %s1106 = sld [smem:[#allocation10 + $0x53]]
    %v1107 = vstv %s1106
    %v1108 = vmul.f32 %v1107, %v1086
    %v1109 = vmul.f32 %v1107, %v1087
    %v1110 = vadd.f32 %v1069, %v1108
    %v1111 = vadd.f32 %v1070, %v1109
    %s1112 = sld [smem:[#allocation10 + $0x54]]
    %v1113 = vstv %s1112
    %v1114 = vmul.f32 %v1113, %v1086
    %v1115 = vmul.f32 %v1113, %v1087
    %v1118 = vrot.slane %v1114, 2
    %v1119 = vrot.slane %v1115, 2
    %v1122 = vadd.f32 %v1092, %v1118
    %v1123 = vadd.f32 %v1093, %v1119
    %s1124 = sld [smem:[#allocation10 + $0x55]]
    %v1125 = vstv %s1124
    %v1126 = vmul.f32 %v1125, %v1086
    %v1127 = vmul.f32 %v1125, %v1087
    %v1130 = vrot.slane %v1126, 2
    %v1131 = vrot.slane %v1127, 2
    %v1134 = vadd.f32 %v1098, %v1130
    %v1135 = vadd.f32 %v1099, %v1131
    %s1136 = sld [smem:[#allocation10 + $0x56]]
    %v1137 = vstv %s1136
    %v1138 = vmul.f32 %v1137, %v1086
    %v1139 = vmul.f32 %v1137, %v1087
    %v1142 = vrot.slane %v1138, 2
    %v1143 = vrot.slane %v1139, 2
    %v1146 = vadd.f32 %v1104, %v1142
    %v1147 = vadd.f32 %v1105, %v1143
    %s1148 = sld [smem:[#allocation10 + $0x57]]
    %v1149 = vstv %s1148
    %v1150 = vmul.f32 %v1149, %v1086
    %v1151 = vmul.f32 %v1149, %v1087
    %v1154 = vrot.slane %v1150, 2
    %v1155 = vrot.slane %v1151, 2
    %v1158 = vadd.f32 %v1110, %v1154
    %v1159 = vadd.f32 %v1111, %v1155
    %s1160 = sld [smem:[#allocation10 + $0x58]]
    %v1161 = vstv %s1160
    %v1162 = vmul.f32 %v1161, %v1086
    %v1163 = vmul.f32 %v1161, %v1087
    %v1166 = vrot.slane %v1162, 4
    %v1167 = vrot.slane %v1163, 4
    %v1170 = vadd.f32 %v1122, %v1166
    %v1171 = vadd.f32 %v1123, %v1167
    %s1172 = sld [smem:[#allocation10 + $0x59]]
    %v1173 = vstv %s1172
    %v1174 = vmul.f32 %v1173, %v1086
    %v1175 = vmul.f32 %v1173, %v1087
    %v1178 = vrot.slane %v1174, 4
    %v1179 = vrot.slane %v1175, 4
    %v1182 = vadd.f32 %v1134, %v1178
    %v1183 = vadd.f32 %v1135, %v1179
    %s1184 = sld [smem:[#allocation10 + $0x5a]]
    %v1185 = vstv %s1184
    %v1186 = vmul.f32 %v1185, %v1086
    %v1187 = vmul.f32 %v1185, %v1087
    %v1190 = vrot.slane %v1186, 4
    %v1191 = vrot.slane %v1187, 4
    %v1194 = vadd.f32 %v1146, %v1190
    %v1195 = vadd.f32 %v1147, %v1191
    %s1196 = sld [smem:[#allocation10 + $0x5b]]
    %v1197 = vstv %s1196
    %v1198 = vmul.f32 %v1197, %v1086
    %v1199 = vmul.f32 %v1197, %v1087
    %v1202 = vrot.slane %v1198, 4
    %v1203 = vrot.slane %v1199, 4
    %v1206 = vadd.f32 %v1158, %v1202
    %v1207 = vadd.f32 %v1159, %v1203
    %s1208 = sld [smem:[#allocation10 + $0x5c]]
    %v1209 = vstv %s1208
    %v1210 = vmul.f32 %v1209, %v1086
    %v1211 = vmul.f32 %v1209, %v1087
    %v1214 = vrot.slane %v1210, 6
    %v1215 = vrot.slane %v1211, 6
    %v1218 = vadd.f32 %v1170, %v1214
    %v1219 = vadd.f32 %v1171, %v1215
    %s1220 = sld [smem:[#allocation10 + $0x5d]]
    %v1221 = vstv %s1220
    %v1222 = vmul.f32 %v1221, %v1086
    %v1223 = vmul.f32 %v1221, %v1087
    %v1226 = vrot.slane %v1222, 6
    %v1227 = vrot.slane %v1223, 6
    %v1230 = vadd.f32 %v1182, %v1226
    %v1231 = vadd.f32 %v1183, %v1227
    %s1232 = sld [smem:[#allocation10 + $0x5e]]
    %v1233 = vstv %s1232
    %v1234 = vmul.f32 %v1233, %v1086
    %v1235 = vmul.f32 %v1233, %v1087
    %v1238 = vrot.slane %v1234, 6
    %v1239 = vrot.slane %v1235, 6
    %v1242 = vadd.f32 %v1194, %v1238
    %v1243 = vadd.f32 %v1195, %v1239
    %s1244 = sld [smem:[#allocation10 + $0x5f]]
    %v1245 = vstv %s1244
    %v1246 = vmul.f32 %v1245, %v1086
    %v1247 = vmul.f32 %v1245, %v1087
    %v1250 = vrot.slane %v1246, 6
    %v1251 = vrot.slane %v1247, 6
    %v1254 = vadd.f32 %v1206, %v1250
    %v1255 = vadd.f32 %v1207, %v1251
    %1256 = vrot.lane.b32.xlu0 %v145, 113
    %v1257 = vpop.permute.xlu0 %1256
    %1258 = vrot.lane.b32.xlu0 %v146, 113
    %v1259 = vpop.permute.xlu0 %1258
    %vm1260 = vcmp.lt.s32.totalorder %v156, 113
    %v1261 = vsel %vm1260, %v1257, %v1259
    %v1262 = vsel %vm1260, %v1259, %v1257
    %v1263 = vlaneseq
    %v1264 = vshrl.u32 %v1263, 7
    %v1265 = vsub.s32 6, %v1264
    %v1266 = vrot.slane %v147, %v1265
    %v1267 = vlaneseq
    %v1268 = vshrl.u32 %v1267, 7
    %v1269 = vsub.s32 6, %v1268
    %v1270 = vrot.slane %v148, %v1269
    %v1271 = vmul.f32 %v1261, %v1266
    %v1272 = vmul.f32 %v1262, %v1270
    %s1273 = sld [smem:[#allocation10 + $0x60]]
    %v1274 = vstv %s1273
    %v1275 = vmul.f32 %v1274, %v1271
    %v1276 = vmul.f32 %v1274, %v1272
    %v1277 = vadd.f32 %v1218, %v1275
    %v1278 = vadd.f32 %v1219, %v1276
    %s1279 = sld [smem:[#allocation10 + $0x61]]
    %v1280 = vstv %s1279
    %v1281 = vmul.f32 %v1280, %v1271
    %v1282 = vmul.f32 %v1280, %v1272
    %v1283 = vadd.f32 %v1230, %v1281
    %v1284 = vadd.f32 %v1231, %v1282
    %s1285 = sld [smem:[#allocation10 + $0x62]]
    %v1286 = vstv %s1285
    %v1287 = vmul.f32 %v1286, %v1271
    %v1288 = vmul.f32 %v1286, %v1272
    %v1289 = vadd.f32 %v1242, %v1287
    %v1290 = vadd.f32 %v1243, %v1288
    %s1291 = sld [smem:[#allocation10 + $0x63]]
    %v1292 = vstv %s1291
    %v1293 = vmul.f32 %v1292, %v1271
    %v1294 = vmul.f32 %v1292, %v1272
    %v1295 = vadd.f32 %v1254, %v1293
    %v1296 = vadd.f32 %v1255, %v1294
    %s1297 = sld [smem:[#allocation10 + $0x64]]
    %v1298 = vstv %s1297
    %v1299 = vmul.f32 %v1298, %v1271
    %v1300 = vmul.f32 %v1298, %v1272
    %v1303 = vrot.slane %v1299, 2
    %v1304 = vrot.slane %v1300, 2
    %v1307 = vadd.f32 %v1277, %v1303
    %v1308 = vadd.f32 %v1278, %v1304
    %s1309 = sld [smem:[#allocation10 + $0x65]]
    %v1310 = vstv %s1309
    %v1311 = vmul.f32 %v1310, %v1271
    %v1312 = vmul.f32 %v1310, %v1272
    %v1315 = vrot.slane %v1311, 2
    %v1316 = vrot.slane %v1312, 2
    %v1319 = vadd.f32 %v1283, %v1315
    %v1320 = vadd.f32 %v1284, %v1316
    %s1321 = sld [smem:[#allocation10 + $0x66]]
    %v1322 = vstv %s1321
    %v1323 = vmul.f32 %v1322, %v1271
    %v1324 = vmul.f32 %v1322, %v1272
    %v1327 = vrot.slane %v1323, 2
    %v1328 = vrot.slane %v1324, 2
    %v1331 = vadd.f32 %v1289, %v1327
    %v1332 = vadd.f32 %v1290, %v1328
    %s1333 = sld [smem:[#allocation10 + $0x67]]
    %v1334 = vstv %s1333
    %v1335 = vmul.f32 %v1334, %v1271
    %v1336 = vmul.f32 %v1334, %v1272
    %v1339 = vrot.slane %v1335, 2
    %v1340 = vrot.slane %v1336, 2
    %v1343 = vadd.f32 %v1295, %v1339
    %v1344 = vadd.f32 %v1296, %v1340
    %s1345 = sld [smem:[#allocation10 + $0x68]]
    %v1346 = vstv %s1345
    %v1347 = vmul.f32 %v1346, %v1271
    %v1348 = vmul.f32 %v1346, %v1272
    %v1351 = vrot.slane %v1347, 4
    %v1352 = vrot.slane %v1348, 4
    %v1355 = vadd.f32 %v1307, %v1351
    %v1356 = vadd.f32 %v1308, %v1352
    %s1357 = sld [smem:[#allocation10 + $0x69]]
    %v1358 = vstv %s1357
    %v1359 = vmul.f32 %v1358, %v1271
    %v1360 = vmul.f32 %v1358, %v1272
    %v1363 = vrot.slane %v1359, 4
    %v1364 = vrot.slane %v1360, 4
    %v1367 = vadd.f32 %v1319, %v1363
    %v1368 = vadd.f32 %v1320, %v1364
    %s1369 = sld [smem:[#allocation10 + $0x6a]]
    %v1370 = vstv %s1369
    %v1371 = vmul.f32 %v1370, %v1271
    %v1372 = vmul.f32 %v1370, %v1272
    %v1375 = vrot.slane %v1371, 4
    %v1376 = vrot.slane %v1372, 4
    %v1379 = vadd.f32 %v1331, %v1375
    %v1380 = vadd.f32 %v1332, %v1376
    %s1381 = sld [smem:[#allocation10 + $0x6b]]
    %v1382 = vstv %s1381
    %v1383 = vmul.f32 %v1382, %v1271
    %v1384 = vmul.f32 %v1382, %v1272
    %v1387 = vrot.slane %v1383, 4
    %v1388 = vrot.slane %v1384, 4
    %v1391 = vadd.f32 %v1343, %v1387
    %v1392 = vadd.f32 %v1344, %v1388
    %s1393 = sld [smem:[#allocation10 + $0x6c]]
    %v1394 = vstv %s1393
    %v1395 = vmul.f32 %v1394, %v1271
    %v1396 = vmul.f32 %v1394, %v1272
    %v1399 = vrot.slane %v1395, 6
    %v1400 = vrot.slane %v1396, 6
    %v1403 = vadd.f32 %v1355, %v1399
    %v1404 = vadd.f32 %v1356, %v1400
    %s1405 = sld [smem:[#allocation10 + $0x6d]]
    %v1406 = vstv %s1405
    %v1407 = vmul.f32 %v1406, %v1271
    %v1408 = vmul.f32 %v1406, %v1272
    %v1411 = vrot.slane %v1407, 6
    %v1412 = vrot.slane %v1408, 6
    %v1415 = vadd.f32 %v1367, %v1411
    %v1416 = vadd.f32 %v1368, %v1412
    %s1417 = sld [smem:[#allocation10 + $0x6e]]
    %v1418 = vstv %s1417
    %v1419 = vmul.f32 %v1418, %v1271
    %v1420 = vmul.f32 %v1418, %v1272
    %v1423 = vrot.slane %v1419, 6
    %v1424 = vrot.slane %v1420, 6
    %v1427 = vadd.f32 %v1379, %v1423
    %v1428 = vadd.f32 %v1380, %v1424
    %s1429 = sld [smem:[#allocation10 + $0x6f]]
    %v1430 = vstv %s1429
    %v1431 = vmul.f32 %v1430, %v1271
    %v1432 = vmul.f32 %v1430, %v1272
    %v1435 = vrot.slane %v1431, 6
    %v1436 = vrot.slane %v1432, 6
    %v1439 = vadd.f32 %v1391, %v1435
    %v1440 = vadd.f32 %v1392, %v1436
    %1441 = vrot.lane.b32.xlu0 %v145, 112
    %v1442 = vpop.permute.xlu0 %1441
    %1443 = vrot.lane.b32.xlu0 %v146, 112
    %v1444 = vpop.permute.xlu0 %1443
    %vm1445 = vcmp.lt.s32.totalorder %v156, 112
    %v1446 = vsel %vm1445, %v1442, %v1444
    %v1447 = vsel %vm1445, %v1444, %v1442
    %v1448 = vlaneseq
    %v1449 = vshrl.u32 %v1448, 7
    %v1450 = vsub.s32 7, %v1449
    %v1451 = vrot.slane %v147, %v1450
    %v1452 = vlaneseq
    %v1453 = vshrl.u32 %v1452, 7
    %v1454 = vsub.s32 7, %v1453
    %v1455 = vrot.slane %v148, %v1454
    %v1456 = vmul.f32 %v1446, %v1451
    %v1457 = vmul.f32 %v1447, %v1455
    %s1458 = sld [smem:[#allocation10 + $0x70]]
    %v1459 = vstv %s1458
    %v1460 = vmul.f32 %v1459, %v1456
    %v1461 = vmul.f32 %v1459, %v1457
    %v1462 = vadd.f32 %v1403, %v1460
    %v1463 = vadd.f32 %v1404, %v1461
    %s1464 = sld [smem:[#allocation10 + $0x71]]
    %v1465 = vstv %s1464
    %v1466 = vmul.f32 %v1465, %v1456
    %v1467 = vmul.f32 %v1465, %v1457
    %v1468 = vadd.f32 %v1415, %v1466
    %v1469 = vadd.f32 %v1416, %v1467
    %s1470 = sld [smem:[#allocation10 + $0x72]]
    %v1471 = vstv %s1470
    %v1472 = vmul.f32 %v1471, %v1456
    %v1473 = vmul.f32 %v1471, %v1457
    %v1474 = vadd.f32 %v1427, %v1472
    %v1475 = vadd.f32 %v1428, %v1473
    %s1476 = sld [smem:[#allocation10 + $0x73]]
    %v1477 = vstv %s1476
    %v1478 = vmul.f32 %v1477, %v1456
    %v1479 = vmul.f32 %v1477, %v1457
    %v1480 = vadd.f32 %v1439, %v1478
    %v1481 = vadd.f32 %v1440, %v1479
    %s1482 = sld [smem:[#allocation10 + $0x74]]
    %v1483 = vstv %s1482
    %v1484 = vmul.f32 %v1483, %v1456
    %v1485 = vmul.f32 %v1483, %v1457
    %v1488 = vrot.slane %v1484, 2
    %v1489 = vrot.slane %v1485, 2
    %v1492 = vadd.f32 %v1462, %v1488
    %v1493 = vadd.f32 %v1463, %v1489
    %s1494 = sld [smem:[#allocation10 + $0x75]]
    %v1495 = vstv %s1494
    %v1496 = vmul.f32 %v1495, %v1456
    %v1497 = vmul.f32 %v1495, %v1457
    %v1500 = vrot.slane %v1496, 2
    %v1501 = vrot.slane %v1497, 2
    %v1504 = vadd.f32 %v1468, %v1500
    %v1505 = vadd.f32 %v1469, %v1501
    %s1506 = sld [smem:[#allocation10 + $0x76]]
    %v1507 = vstv %s1506
    %v1508 = vmul.f32 %v1507, %v1456
    %v1509 = vmul.f32 %v1507, %v1457
    %v1512 = vrot.slane %v1508, 2
    %v1513 = vrot.slane %v1509, 2
    %v1516 = vadd.f32 %v1474, %v1512
    %v1517 = vadd.f32 %v1475, %v1513
    %s1518 = sld [smem:[#allocation10 + $0x77]]
    %v1519 = vstv %s1518
    %v1520 = vmul.f32 %v1519, %v1456
    %v1521 = vmul.f32 %v1519, %v1457
    %v1524 = vrot.slane %v1520, 2
    %v1525 = vrot.slane %v1521, 2
    %v1528 = vadd.f32 %v1480, %v1524
    %v1529 = vadd.f32 %v1481, %v1525
    %s1530 = sld [smem:[#allocation10 + $0x78]]
    %v1531 = vstv %s1530
    %v1532 = vmul.f32 %v1531, %v1456
    %v1533 = vmul.f32 %v1531, %v1457
    %v1536 = vrot.slane %v1532, 4
    %v1537 = vrot.slane %v1533, 4
    %v1540 = vadd.f32 %v1492, %v1536
    %v1541 = vadd.f32 %v1493, %v1537
    %s1542 = sld [smem:[#allocation10 + $0x79]]
    %v1543 = vstv %s1542
    %v1544 = vmul.f32 %v1543, %v1456
    %v1545 = vmul.f32 %v1543, %v1457
    %v1548 = vrot.slane %v1544, 4
    %v1549 = vrot.slane %v1545, 4
    %v1552 = vadd.f32 %v1504, %v1548
    %v1553 = vadd.f32 %v1505, %v1549
    %s1554 = sld [smem:[#allocation10 + $0x7a]]
    %v1555 = vstv %s1554
    %v1556 = vmul.f32 %v1555, %v1456
    %v1557 = vmul.f32 %v1555, %v1457
    %v1560 = vrot.slane %v1556, 4
    %v1561 = vrot.slane %v1557, 4
    %v1564 = vadd.f32 %v1516, %v1560
    %v1565 = vadd.f32 %v1517, %v1561
    %s1566 = sld [smem:[#allocation10 + $0x7b]]
    %v1567 = vstv %s1566
    %v1568 = vmul.f32 %v1567, %v1456
    %v1569 = vmul.f32 %v1567, %v1457
    %v1572 = vrot.slane %v1568, 4
    %v1573 = vrot.slane %v1569, 4
    %v1576 = vadd.f32 %v1528, %v1572
    %v1577 = vadd.f32 %v1529, %v1573
    %s1578 = sld [smem:[#allocation10 + $0x7c]]
    %v1579 = vstv %s1578
    %v1580 = vmul.f32 %v1579, %v1456
    %v1581 = vmul.f32 %v1579, %v1457
    %v1584 = vrot.slane %v1580, 6
    %v1585 = vrot.slane %v1581, 6
    %v1588 = vadd.f32 %v1540, %v1584
    %v1589 = vadd.f32 %v1541, %v1585
    %s1590 = sld [smem:[#allocation10 + $0x7d]]
    %v1591 = vstv %s1590
    %v1592 = vmul.f32 %v1591, %v1456
    %v1593 = vmul.f32 %v1591, %v1457
    %v1596 = vrot.slane %v1592, 6
    %v1597 = vrot.slane %v1593, 6
    %v1600 = vadd.f32 %v1552, %v1596
    %v1601 = vadd.f32 %v1553, %v1597
    %s1602 = sld [smem:[#allocation10 + $0x7e]]
    %v1603 = vstv %s1602
    %v1604 = vmul.f32 %v1603, %v1456
    %v1605 = vmul.f32 %v1603, %v1457
    %v1608 = vrot.slane %v1604, 6
    %v1609 = vrot.slane %v1605, 6
    %v1612 = vadd.f32 %v1564, %v1608
    %v1613 = vadd.f32 %v1565, %v1609
    %s1614 = sld [smem:[#allocation10 + $0x7f]]
    %v1615 = vstv %s1614
    %v1616 = vmul.f32 %v1615, %v1456
    %v1617 = vmul.f32 %v1615, %v1457
    %v1620 = vrot.slane %v1616, 6
    %v1621 = vrot.slane %v1617, 6
    %v1624 = vadd.f32 %v1576, %v1620
    %v1625 = vadd.f32 %v1577, %v1621
    %1626 = vrot.lane.b32.xlu0 %v145, 111
    %v1627 = vpop.permute.xlu0 %1626
    %1628 = vrot.lane.b32.xlu0 %v146, 111
    %v1629 = vpop.permute.xlu0 %1628
    %vm1630 = vcmp.lt.s32.totalorder %v156, 111
    %v1631 = vsel %vm1630, %v1627, %v1629
    %v1632 = vsel %vm1630, %v1629, %v1627
    %v1633 = vlaneseq
    %v1634 = vshrl.u32 %v1633, 7
    %v1635 = vsub.s32 0, %v1634
    %v1636 = vrot.slane %v149, %v1635
    %v1637 = vlaneseq
    %v1638 = vshrl.u32 %v1637, 7
    %v1639 = vsub.s32 0, %v1638
    %v1640 = vrot.slane %v150, %v1639
    %v1641 = vmul.f32 %v1631, %v1636
    %v1642 = vmul.f32 %v1632, %v1640
    %s1643 = sld [smem:[#allocation10 + $0x80]]
    %v1644 = vstv %s1643
    %v1645 = vmul.f32 %v1644, %v1641
    %v1646 = vmul.f32 %v1644, %v1642
    %v1647 = vadd.f32 %v1588, %v1645
    %v1648 = vadd.f32 %v1589, %v1646
    %s1649 = sld [smem:[#allocation10 + $0x81]]
    %v1650 = vstv %s1649
    %v1651 = vmul.f32 %v1650, %v1641
    %v1652 = vmul.f32 %v1650, %v1642
    %v1653 = vadd.f32 %v1600, %v1651
    %v1654 = vadd.f32 %v1601, %v1652
    %s1655 = sld [smem:[#allocation10 + $0x82]]
    %v1656 = vstv %s1655
    %v1657 = vmul.f32 %v1656, %v1641
    %v1658 = vmul.f32 %v1656, %v1642
    %v1659 = vadd.f32 %v1612, %v1657
    %v1660 = vadd.f32 %v1613, %v1658
    %s1661 = sld [smem:[#allocation10 + $0x83]]
    %v1662 = vstv %s1661
    %v1663 = vmul.f32 %v1662, %v1641
    %v1664 = vmul.f32 %v1662, %v1642
    %v1665 = vadd.f32 %v1624, %v1663
    %v1666 = vadd.f32 %v1625, %v1664
    %s1667 = sld [smem:[#allocation10 + $0x84]]
    %v1668 = vstv %s1667
    %v1669 = vmul.f32 %v1668, %v1641
    %v1670 = vmul.f32 %v1668, %v1642
    %v1673 = vrot.slane %v1669, 2
    %v1674 = vrot.slane %v1670, 2
    %v1677 = vadd.f32 %v1647, %v1673
    %v1678 = vadd.f32 %v1648, %v1674
    %s1679 = sld [smem:[#allocation10 + $0x85]]
    %v1680 = vstv %s1679
    %v1681 = vmul.f32 %v1680, %v1641
    %v1682 = vmul.f32 %v1680, %v1642
    %v1685 = vrot.slane %v1681, 2
    %v1686 = vrot.slane %v1682, 2
    %v1689 = vadd.f32 %v1653, %v1685
    %v1690 = vadd.f32 %v1654, %v1686
    %s1691 = sld [smem:[#allocation10 + $0x86]]
    %v1692 = vstv %s1691
    %v1693 = vmul.f32 %v1692, %v1641
    %v1694 = vmul.f32 %v1692, %v1642
    %v1697 = vrot.slane %v1693, 2
    %v1698 = vrot.slane %v1694, 2
    %v1701 = vadd.f32 %v1659, %v1697
    %v1702 = vadd.f32 %v1660, %v1698
    %s1703 = sld [smem:[#allocation10 + $0x87]]
    %v1704 = vstv %s1703
    %v1705 = vmul.f32 %v1704, %v1641
    %v1706 = vmul.f32 %v1704, %v1642
    %v1709 = vrot.slane %v1705, 2
    %v1710 = vrot.slane %v1706, 2
    %v1713 = vadd.f32 %v1665, %v1709
    %v1714 = vadd.f32 %v1666, %v1710
    %s1715 = sld [smem:[#allocation10 + $0x88]]
    %v1716 = vstv %s1715
    %v1717 = vmul.f32 %v1716, %v1641
    %v1718 = vmul.f32 %v1716, %v1642
    %v1721 = vrot.slane %v1717, 4
    %v1722 = vrot.slane %v1718, 4
    %v1725 = vadd.f32 %v1677, %v1721
    %v1726 = vadd.f32 %v1678, %v1722
    %s1727 = sld [smem:[#allocation10 + $0x89]]
    %v1728 = vstv %s1727
    %v1729 = vmul.f32 %v1728, %v1641
    %v1730 = vmul.f32 %v1728, %v1642
    %v1733 = vrot.slane %v1729, 4
    %v1734 = vrot.slane %v1730, 4
    %v1737 = vadd.f32 %v1689, %v1733
    %v1738 = vadd.f32 %v1690, %v1734
    %s1739 = sld [smem:[#allocation10 + $0x8a]]
    %v1740 = vstv %s1739
    %v1741 = vmul.f32 %v1740, %v1641
    %v1742 = vmul.f32 %v1740, %v1642
    %v1745 = vrot.slane %v1741, 4
    %v1746 = vrot.slane %v1742, 4
    %v1749 = vadd.f32 %v1701, %v1745
    %v1750 = vadd.f32 %v1702, %v1746
    %s1751 = sld [smem:[#allocation10 + $0x8b]]
    %v1752 = vstv %s1751
    %v1753 = vmul.f32 %v1752, %v1641
    %v1754 = vmul.f32 %v1752, %v1642
    %v1757 = vrot.slane %v1753, 4
    %v1758 = vrot.slane %v1754, 4
    %v1761 = vadd.f32 %v1713, %v1757
    %v1762 = vadd.f32 %v1714, %v1758
    %s1763 = sld [smem:[#allocation10 + $0x8c]]
    %v1764 = vstv %s1763
    %v1765 = vmul.f32 %v1764, %v1641
    %v1766 = vmul.f32 %v1764, %v1642
    %v1769 = vrot.slane %v1765, 6
    %v1770 = vrot.slane %v1766, 6
    %v1773 = vadd.f32 %v1725, %v1769
    %v1774 = vadd.f32 %v1726, %v1770
    %s1775 = sld [smem:[#allocation10 + $0x8d]]
    %v1776 = vstv %s1775
    %v1777 = vmul.f32 %v1776, %v1641
    %v1778 = vmul.f32 %v1776, %v1642
    %v1781 = vrot.slane %v1777, 6
    %v1782 = vrot.slane %v1778, 6
    %v1785 = vadd.f32 %v1737, %v1781
    %v1786 = vadd.f32 %v1738, %v1782
    %s1787 = sld [smem:[#allocation10 + $0x8e]]
    %v1788 = vstv %s1787
    %v1789 = vmul.f32 %v1788, %v1641
    %v1790 = vmul.f32 %v1788, %v1642
    %v1793 = vrot.slane %v1789, 6
    %v1794 = vrot.slane %v1790, 6
    %v1797 = vadd.f32 %v1749, %v1793
    %v1798 = vadd.f32 %v1750, %v1794
    %s1799 = sld [smem:[#allocation10 + $0x8f]]
    %v1800 = vstv %s1799
    %v1801 = vmul.f32 %v1800, %v1641
    %v1802 = vmul.f32 %v1800, %v1642
    %v1805 = vrot.slane %v1801, 6
    %v1806 = vrot.slane %v1802, 6
    %v1809 = vadd.f32 %v1761, %v1805
    %v1810 = vadd.f32 %v1762, %v1806
    %s1811 = sld [smem:[#allocation11]]
    %v1812 = vstv %s1811
    %v1813 = vadd.f32 %v1773, %v1812
    %v1814 = vadd.f32 %v1774, %v1812
    %s1815 = sld [smem:[#allocation11 + $0x1]]
    %v1816 = vstv %s1815
    %v1817 = vadd.f32 %v1785, %v1816
    %v1818 = vadd.f32 %v1786, %v1816
    %s1819 = sld [smem:[#allocation11 + $0x2]]
    %v1820 = vstv %s1819
    %v1821 = vadd.f32 %v1797, %v1820
    %v1822 = vadd.f32 %v1798, %v1820
    %s1823 = sld [smem:[#allocation11 + $0x3]]
    %v1824 = vstv %s1823
    %v1825 = vadd.f32 %v1809, %v1824
    %v1826 = vadd.f32 %v1810, %v1824
    %vm1827 = vcmask 1041408
    %v1828 = vsel %vm1827, %v1813, 0.0
    %v1829 = vsel %vm1827, %v1814, 0.0
    %v1830 = vadd.f32 %v1828, %v1829
    %1831 = vadd.xlane.f32.xlu0 %v1830
    %v1832 = vpop.xlane.xlu0 %1831
    %v1833 = vrot.slane %v1832, 4
    %v1834 = vadd.f32 %v1832, %v1833
    %v1835 = vrot.slane %v1834, 2
    %v1836 = vadd.f32 %v1834, %v1835
    %v1837 = vrot.slane %v1836, 1
    %v1838 = vadd.f32 %v1836, %v1837
    %s1839 = vtos %v1838
    %s1840 = smul.f32 %s1839, 0.001953125
    %v1841 = vstv %s1840
    %v1842 = vsub.f32 %v1813, %v1841
    %v1843 = vsub.f32 %v1814, %v1841
    %v1844 = vmul.f32 %v1842, %v1842
    %v1845 = vmul.f32 %v1843, %v1843
    %v1846 = vsel %vm1827, %v1844, 0.0
    %v1847 = vsel %vm1827, %v1845, 0.0
    %v1848 = vadd.f32 %v1846, %v1847
    %1849 = vadd.xlane.f32.xlu0 %v1848
    %v1850 = vpop.xlane.xlu0 %1849
    %v1851 = vrot.slane %v1850, 4
    %v1852 = vadd.f32 %v1850, %v1851
    %v1853 = vrot.slane %v1852, 2
    %v1854 = vadd.f32 %v1852, %v1853
    %v1855 = vrot.slane %v1854, 1
    %v1856 = vadd.f32 %v1854, %v1855
    %s1857 = vtos %v1856
    %s1858 = smul.f32 %s1857, 0.001953125
    %s1859 = sadd.f32 %s1858, 1e-05
    %v1860 = vstv %s1859
    %v1861 = vrsqrt.pop %v1860
    %s1862 = vtos %v1861
    %s1863 = sld [smem:[#allocation13]]
    %s1864 = smul.f32 %s1862, %s1863
    %v1865 = vstv %s1864
    %v1866 = vmul.f32 %v1842, %v1865
    %v1867 = vmul.f32 %v1843, %v1865
    %s1868 = sld [smem:[#allocation14]]
    %v1869 = vstv %s1868
    %v1870 = vadd.f32 %v1866, %v1869
    %v1871 = vadd.f32 %v1867, %v1869
    %vm1872 = vcmp.ge.f32.partialorder %v1870, 0.0
    %vm1873 = vcmp.ge.f32.partialorder %v1871, 0.0
    %v1874 = vmul.f32 %v1870, 0.01
    %v1875 = vmul.f32 %v1871, 0.01
    %v1876 = vsel %vm1872, %v1870, %v1874
    %v1877 = vsel %vm1873, %v1871, %v1875
    %1878 = vst [vmem:[#allocation2] sm:$0x3] %v1876
    %1879 = vst [vmem:[#allocation2 + $0x8] sm:$0x3] %v1877
    %v1880 = vsel %vm1827, %v1817, 0.0
    %v1881 = vsel %vm1827, %v1818, 0.0
    %v1882 = vadd.f32 %v1880, %v1881
    %1883 = vadd.xlane.f32.xlu0 %v1882
    %v1884 = vpop.xlane.xlu0 %1883
    %v1885 = vrot.slane %v1884, 4
    %v1886 = vadd.f32 %v1884, %v1885
    %v1887 = vrot.slane %v1886, 2
    %v1888 = vadd.f32 %v1886, %v1887
    %v1889 = vrot.slane %v1888, 1
    %v1890 = vadd.f32 %v1888, %v1889
    %s1891 = vtos %v1890
    %s1892 = smul.f32 %s1891, 0.001953125
    %v1893 = vstv %s1892
    %v1894 = vsub.f32 %v1817, %v1893
    %v1895 = vsub.f32 %v1818, %v1893
    %v1896 = vmul.f32 %v1894, %v1894
    %v1897 = vmul.f32 %v1895, %v1895
    %v1898 = vsel %vm1827, %v1896, 0.0
    %v1899 = vsel %vm1827, %v1897, 0.0
    %v1900 = vadd.f32 %v1898, %v1899
    %1901 = vadd.xlane.f32.xlu0 %v1900
    %v1902 = vpop.xlane.xlu0 %1901
    %v1903 = vrot.slane %v1902, 4
    %v1904 = vadd.f32 %v1902, %v1903
    %v1905 = vrot.slane %v1904, 2
    %v1906 = vadd.f32 %v1904, %v1905
    %v1907 = vrot.slane %v1906, 1
    %v1908 = vadd.f32 %v1906, %v1907
    %s1909 = vtos %v1908
    %s1910 = smul.f32 %s1909, 0.001953125
    %s1911 = sadd.f32 %s1910, 1e-05
    %v1912 = vstv %s1911
    %v1913 = vrsqrt.pop %v1912
    %s1914 = vtos %v1913
    %s1915 = sld [smem:[#allocation13 + $0x1]]
    %s1916 = smul.f32 %s1914, %s1915
    %v1917 = vstv %s1916
    %v1918 = vmul.f32 %v1894, %v1917
    %v1919 = vmul.f32 %v1895, %v1917
    %s1920 = sld [smem:[#allocation14 + $0x1]]
    %v1921 = vstv %s1920
    %v1922 = vadd.f32 %v1918, %v1921
    %v1923 = vadd.f32 %v1919, %v1921
    %vm1924 = vcmp.ge.f32.partialorder %v1922, 0.0
    %vm1925 = vcmp.ge.f32.partialorder %v1923, 0.0
    %v1926 = vmul.f32 %v1922, 0.01
    %v1927 = vmul.f32 %v1923, 0.01
    %v1928 = vsel %vm1924, %v1922, %v1926
    %v1929 = vsel %vm1925, %v1923, %v1927
    %v1932 = vrot.slane %v1928, 6
    %v1933 = vrot.slane %v1929, 6
    %1936 = vst [vmem:[#allocation2] sm:$0xc] %v1932
    %1937 = vst [vmem:[#allocation2 + $0x8] sm:$0xc] %v1933
    %v1938 = vsel %vm1827, %v1821, 0.0
    %v1939 = vsel %vm1827, %v1822, 0.0
    %v1940 = vadd.f32 %v1938, %v1939
    %1941 = vadd.xlane.f32.xlu0 %v1940
    %v1942 = vpop.xlane.xlu0 %1941
    %v1943 = vrot.slane %v1942, 4
    %v1944 = vadd.f32 %v1942, %v1943
    %v1945 = vrot.slane %v1944, 2
    %v1946 = vadd.f32 %v1944, %v1945
    %v1947 = vrot.slane %v1946, 1
    %v1948 = vadd.f32 %v1946, %v1947
    %s1949 = vtos %v1948
    %s1950 = smul.f32 %s1949, 0.001953125
    %v1951 = vstv %s1950
    %v1952 = vsub.f32 %v1821, %v1951
    %v1953 = vsub.f32 %v1822, %v1951
    %v1954 = vmul.f32 %v1952, %v1952
    %v1955 = vmul.f32 %v1953, %v1953
    %v1956 = vsel %vm1827, %v1954, 0.0
    %v1957 = vsel %vm1827, %v1955, 0.0
    %v1958 = vadd.f32 %v1956, %v1957
    %1959 = vadd.xlane.f32.xlu0 %v1958
    %v1960 = vpop.xlane.xlu0 %1959
    %v1961 = vrot.slane %v1960, 4
    %v1962 = vadd.f32 %v1960, %v1961
    %v1963 = vrot.slane %v1962, 2
    %v1964 = vadd.f32 %v1962, %v1963
    %v1965 = vrot.slane %v1964, 1
    %v1966 = vadd.f32 %v1964, %v1965
    %s1967 = vtos %v1966
    %s1968 = smul.f32 %s1967, 0.001953125
    %s1969 = sadd.f32 %s1968, 1e-05
    %v1970 = vstv %s1969
    %v1971 = vrsqrt.pop %v1970
    %s1972 = vtos %v1971
    %s1973 = sld [smem:[#allocation13 + $0x2]]
    %s1974 = smul.f32 %s1972, %s1973
    %v1975 = vstv %s1974
    %v1976 = vmul.f32 %v1952, %v1975
    %v1977 = vmul.f32 %v1953, %v1975
    %s1978 = sld [smem:[#allocation14 + $0x2]]
    %v1979 = vstv %s1978
    %v1980 = vadd.f32 %v1976, %v1979
    %v1981 = vadd.f32 %v1977, %v1979
    %vm1982 = vcmp.ge.f32.partialorder %v1980, 0.0
    %vm1983 = vcmp.ge.f32.partialorder %v1981, 0.0
    %v1984 = vmul.f32 %v1980, 0.01
    %v1985 = vmul.f32 %v1981, 0.01
    %v1986 = vsel %vm1982, %v1980, %v1984
    %v1987 = vsel %vm1983, %v1981, %v1985
    %v1990 = vrot.slane %v1986, 4
    %v1991 = vrot.slane %v1987, 4
    %1994 = vst [vmem:[#allocation2] sm:$0x30] %v1990
    %1995 = vst [vmem:[#allocation2 + $0x8] sm:$0x30] %v1991
    %v1996 = vsel %vm1827, %v1825, 0.0
    %v1997 = vsel %vm1827, %v1826, 0.0
    %v1998 = vadd.f32 %v1996, %v1997
    %1999 = vadd.xlane.f32.xlu0 %v1998
    %v2000 = vpop.xlane.xlu0 %1999
    %v2001 = vrot.slane %v2000, 4
    %v2002 = vadd.f32 %v2000, %v2001
    %v2003 = vrot.slane %v2002, 2
    %v2004 = vadd.f32 %v2002, %v2003
    %v2005 = vrot.slane %v2004, 1
    %v2006 = vadd.f32 %v2004, %v2005
    %s2007 = vtos %v2006
    %s2008 = smul.f32 %s2007, 0.001953125
    %v2009 = vstv %s2008
    %v2010 = vsub.f32 %v1825, %v2009
    %v2011 = vsub.f32 %v1826, %v2009
    %v2012 = vmul.f32 %v2010, %v2010
    %v2013 = vmul.f32 %v2011, %v2011
    %v2014 = vsel %vm1827, %v2012, 0.0
    %v2015 = vsel %vm1827, %v2013, 0.0
    %v2016 = vadd.f32 %v2014, %v2015
    %2017 = vadd.xlane.f32.xlu0 %v2016
    %v2018 = vpop.xlane.xlu0 %2017
    %v2019 = vrot.slane %v2018, 4
    %v2020 = vadd.f32 %v2018, %v2019
    %v2021 = vrot.slane %v2020, 2
    %v2022 = vadd.f32 %v2020, %v2021
    %v2023 = vrot.slane %v2022, 1
    %v2024 = vadd.f32 %v2022, %v2023
    %s2025 = vtos %v2024
    %s2026 = smul.f32 %s2025, 0.001953125
    %s2027 = sadd.f32 %s2026, 1e-05
    %v2028 = vstv %s2027
    %v2029 = vrsqrt.pop %v2028
    %s2030 = vtos %v2029
    %s2031 = sld [smem:[#allocation13 + $0x3]]
    %s2032 = smul.f32 %s2030, %s2031
    %v2033 = vstv %s2032
    %v2034 = vmul.f32 %v2010, %v2033
    %v2035 = vmul.f32 %v2011, %v2033
    %s2036 = sld [smem:[#allocation14 + $0x3]]
    %v2037 = vstv %s2036
    %v2038 = vadd.f32 %v2034, %v2037
    %v2039 = vadd.f32 %v2035, %v2037
    %vm2040 = vcmp.ge.f32.partialorder %v2038, 0.0
    %vm2041 = vcmp.ge.f32.partialorder %v2039, 0.0
    %v2042 = vmul.f32 %v2038, 0.01
    %v2043 = vmul.f32 %v2039, 0.01
    %v2044 = vsel %vm2040, %v2038, %v2042
    %v2045 = vsel %vm2041, %v2039, %v2043
    %v2048 = vrot.slane %v2044, 2
    %v2049 = vrot.slane %v2045, 2
    %2052 = vst [vmem:[#allocation2] sm:$0xc0] %v2048
    %2053 = vst [vmem:[#allocation2 + $0x8] sm:$0xc0] %v2049
    %v2054 = vld [vmem:[#allocation2] sm:$0xff]
    %v2055 = vld [vmem:[#allocation2 + $0x8] sm:$0xff]
    %2056 = vrot.lane.b32.xlu0 %v2054, 17
    %v2057 = vpop.permute.xlu0 %2056
    %2058 = vrot.lane.b32.xlu0 %v2055, 17
    %v2059 = vpop.permute.xlu0 %2058
    %v2060 = vsel %vm157, %v2057, %v2059
    %v2061 = vsel %vm157, %v2059, %v2057
    %v2062 = vmul.f32 %v2061, %v163
    %v2063 = vmul.f32 %v2060, %v167
    %s2064 = sld [smem:[#allocation16]]
    %v2065 = vstv %s2064
    %v2066 = vmul.f32 %v2065, %v2062
    %v2067 = vmul.f32 %v2065, %v2063
    %v2068 = vadd.f32 %v2066, 0.0
    %v2069 = vadd.f32 %v2067, 0.0
    %s2070 = sld [smem:[#allocation16 + $0x1]]
    %v2071 = vstv %s2070
    %v2072 = vmul.f32 %v2071, %v2062
    %v2073 = vmul.f32 %v2071, %v2063
    %v2074 = vadd.f32 %v2072, 0.0
    %v2075 = vadd.f32 %v2073, 0.0
    %s2076 = sld [smem:[#allocation16 + $0x2]]
    %v2077 = vstv %s2076
    %v2078 = vmul.f32 %v2077, %v2062
    %v2079 = vmul.f32 %v2077, %v2063
    %v2080 = vadd.f32 %v2078, 0.0
    %v2081 = vadd.f32 %v2079, 0.0
    %s2082 = sld [smem:[#allocation16 + $0x3]]
    %v2083 = vstv %s2082
    %v2084 = vmul.f32 %v2083, %v2062
    %v2085 = vmul.f32 %v2083, %v2063
    %v2086 = vadd.f32 %v2084, 0.0
    %v2087 = vadd.f32 %v2085, 0.0
    %s2088 = sld [smem:[#allocation16 + $0x4]]
    %v2089 = vstv %s2088
    %v2090 = vmul.f32 %v2089, %v2062
    %v2091 = vmul.f32 %v2089, %v2063
    %v2094 = vrot.slane %v2090, 2
    %v2095 = vrot.slane %v2091, 2
    %v2098 = vadd.f32 %v2068, %v2094
    %v2099 = vadd.f32 %v2069, %v2095
    %s2100 = sld [smem:[#allocation16 + $0x5]]
    %v2101 = vstv %s2100
    %v2102 = vmul.f32 %v2101, %v2062
    %v2103 = vmul.f32 %v2101, %v2063
    %v2106 = vrot.slane %v2102, 2
    %v2107 = vrot.slane %v2103, 2
    %v2110 = vadd.f32 %v2074, %v2106
    %v2111 = vadd.f32 %v2075, %v2107
    %s2112 = sld [smem:[#allocation16 + $0x6]]
    %v2113 = vstv %s2112
    %v2114 = vmul.f32 %v2113, %v2062
    %v2115 = vmul.f32 %v2113, %v2063
    %v2118 = vrot.slane %v2114, 2
    %v2119 = vrot.slane %v2115, 2
    %v2122 = vadd.f32 %v2080, %v2118
    %v2123 = vadd.f32 %v2081, %v2119
    %s2124 = sld [smem:[#allocation16 + $0x7]]
    %v2125 = vstv %s2124
    %v2126 = vmul.f32 %v2125, %v2062
    %v2127 = vmul.f32 %v2125, %v2063
    %v2130 = vrot.slane %v2126, 2
    %v2131 = vrot.slane %v2127, 2
    %v2134 = vadd.f32 %v2086, %v2130
    %v2135 = vadd.f32 %v2087, %v2131
    %s2136 = sld [smem:[#allocation16 + $0x8]]
    %v2137 = vstv %s2136
    %v2138 = vmul.f32 %v2137, %v2062
    %v2139 = vmul.f32 %v2137, %v2063
    %v2142 = vrot.slane %v2138, 4
    %v2143 = vrot.slane %v2139, 4
    %v2146 = vadd.f32 %v2098, %v2142
    %v2147 = vadd.f32 %v2099, %v2143
    %s2148 = sld [smem:[#allocation16 + $0x9]]
    %v2149 = vstv %s2148
    %v2150 = vmul.f32 %v2149, %v2062
    %v2151 = vmul.f32 %v2149, %v2063
    %v2154 = vrot.slane %v2150, 4
    %v2155 = vrot.slane %v2151, 4
    %v2158 = vadd.f32 %v2110, %v2154
    %v2159 = vadd.f32 %v2111, %v2155
    %s2160 = sld [smem:[#allocation16 + $0xa]]
    %v2161 = vstv %s2160
    %v2162 = vmul.f32 %v2161, %v2062
    %v2163 = vmul.f32 %v2161, %v2063
    %v2166 = vrot.slane %v2162, 4
    %v2167 = vrot.slane %v2163, 4
    %v2170 = vadd.f32 %v2122, %v2166
    %v2171 = vadd.f32 %v2123, %v2167
    %s2172 = sld [smem:[#allocation16 + $0xb]]
    %v2173 = vstv %s2172
    %v2174 = vmul.f32 %v2173, %v2062
    %v2175 = vmul.f32 %v2173, %v2063
    %v2178 = vrot.slane %v2174, 4
    %v2179 = vrot.slane %v2175, 4
    %v2182 = vadd.f32 %v2134, %v2178
    %v2183 = vadd.f32 %v2135, %v2179
    %s2184 = sld [smem:[#allocation16 + $0xc]]
    %v2185 = vstv %s2184
    %v2186 = vmul.f32 %v2185, %v2062
    %v2187 = vmul.f32 %v2185, %v2063
    %v2190 = vrot.slane %v2186, 6
    %v2191 = vrot.slane %v2187, 6
    %v2194 = vadd.f32 %v2146, %v2190
    %v2195 = vadd.f32 %v2147, %v2191
    %s2196 = sld [smem:[#allocation16 + $0xd]]
    %v2197 = vstv %s2196
    %v2198 = vmul.f32 %v2197, %v2062
    %v2199 = vmul.f32 %v2197, %v2063
    %v2202 = vrot.slane %v2198, 6
    %v2203 = vrot.slane %v2199, 6
    %v2206 = vadd.f32 %v2158, %v2202
    %v2207 = vadd.f32 %v2159, %v2203
    %s2208 = sld [smem:[#allocation16 + $0xe]]
    %v2209 = vstv %s2208
    %v2210 = vmul.f32 %v2209, %v2062
    %v2211 = vmul.f32 %v2209, %v2063
    %v2214 = vrot.slane %v2210, 6
    %v2215 = vrot.slane %v2211, 6
    %v2218 = vadd.f32 %v2170, %v2214
    %v2219 = vadd.f32 %v2171, %v2215
    %s2220 = sld [smem:[#allocation16 + $0xf]]
    %v2221 = vstv %s2220
    %v2222 = vmul.f32 %v2221, %v2062
    %v2223 = vmul.f32 %v2221, %v2063
    %v2226 = vrot.slane %v2222, 6
    %v2227 = vrot.slane %v2223, 6
    %v2230 = vadd.f32 %v2182, %v2226
    %v2231 = vadd.f32 %v2183, %v2227
    %2232 = vrot.lane.b32.xlu0 %v2054, 16
    %v2233 = vpop.permute.xlu0 %2232
    %2234 = vrot.lane.b32.xlu0 %v2055, 16
    %v2235 = vpop.permute.xlu0 %2234
    %v2236 = vsel %vm342, %v2233, %v2235
    %v2237 = vsel %vm342, %v2235, %v2233
    %v2238 = vmul.f32 %v2237, %v348
    %v2239 = vmul.f32 %v2236, %v352
    %s2240 = sld [smem:[#allocation16 + $0x10]]
    %v2241 = vstv %s2240
    %v2242 = vmul.f32 %v2241, %v2238
    %v2243 = vmul.f32 %v2241, %v2239
    %v2244 = vadd.f32 %v2194, %v2242
    %v2245 = vadd.f32 %v2195, %v2243
    %s2246 = sld [smem:[#allocation16 + $0x11]]
    %v2247 = vstv %s2246
    %v2248 = vmul.f32 %v2247, %v2238
    %v2249 = vmul.f32 %v2247, %v2239
    %v2250 = vadd.f32 %v2206, %v2248
    %v2251 = vadd.f32 %v2207, %v2249
    %s2252 = sld [smem:[#allocation16 + $0x12]]
    %v2253 = vstv %s2252
    %v2254 = vmul.f32 %v2253, %v2238
    %v2255 = vmul.f32 %v2253, %v2239
    %v2256 = vadd.f32 %v2218, %v2254
    %v2257 = vadd.f32 %v2219, %v2255
    %s2258 = sld [smem:[#allocation16 + $0x13]]
    %v2259 = vstv %s2258
    %v2260 = vmul.f32 %v2259, %v2238
    %v2261 = vmul.f32 %v2259, %v2239
    %v2262 = vadd.f32 %v2230, %v2260
    %v2263 = vadd.f32 %v2231, %v2261
    %s2264 = sld [smem:[#allocation16 + $0x14]]
    %v2265 = vstv %s2264
    %v2266 = vmul.f32 %v2265, %v2238
    %v2267 = vmul.f32 %v2265, %v2239
    %v2270 = vrot.slane %v2266, 2
    %v2271 = vrot.slane %v2267, 2
    %v2274 = vadd.f32 %v2244, %v2270
    %v2275 = vadd.f32 %v2245, %v2271
    %s2276 = sld [smem:[#allocation16 + $0x15]]
    %v2277 = vstv %s2276
    %v2278 = vmul.f32 %v2277, %v2238
    %v2279 = vmul.f32 %v2277, %v2239
    %v2282 = vrot.slane %v2278, 2
    %v2283 = vrot.slane %v2279, 2
    %v2286 = vadd.f32 %v2250, %v2282
    %v2287 = vadd.f32 %v2251, %v2283
    %s2288 = sld [smem:[#allocation16 + $0x16]]
    %v2289 = vstv %s2288
    %v2290 = vmul.f32 %v2289, %v2238
    %v2291 = vmul.f32 %v2289, %v2239
    %v2294 = vrot.slane %v2290, 2
    %v2295 = vrot.slane %v2291, 2
    %v2298 = vadd.f32 %v2256, %v2294
    %v2299 = vadd.f32 %v2257, %v2295
    %s2300 = sld [smem:[#allocation16 + $0x17]]
    %v2301 = vstv %s2300
    %v2302 = vmul.f32 %v2301, %v2238
    %v2303 = vmul.f32 %v2301, %v2239
    %v2306 = vrot.slane %v2302, 2
    %v2307 = vrot.slane %v2303, 2
    %v2310 = vadd.f32 %v2262, %v2306
    %v2311 = vadd.f32 %v2263, %v2307
    %s2312 = sld [smem:[#allocation16 + $0x18]]
    %v2313 = vstv %s2312
    %v2314 = vmul.f32 %v2313, %v2238
    %v2315 = vmul.f32 %v2313, %v2239
    %v2318 = vrot.slane %v2314, 4
    %v2319 = vrot.slane %v2315, 4
    %v2322 = vadd.f32 %v2274, %v2318
    %v2323 = vadd.f32 %v2275, %v2319
    %s2324 = sld [smem:[#allocation16 + $0x19]]
    %v2325 = vstv %s2324
    %v2326 = vmul.f32 %v2325, %v2238
    %v2327 = vmul.f32 %v2325, %v2239
    %v2330 = vrot.slane %v2326, 4
    %v2331 = vrot.slane %v2327, 4
    %v2334 = vadd.f32 %v2286, %v2330
    %v2335 = vadd.f32 %v2287, %v2331
    %s2336 = sld [smem:[#allocation16 + $0x1a]]
    %v2337 = vstv %s2336
    %v2338 = vmul.f32 %v2337, %v2238
    %v2339 = vmul.f32 %v2337, %v2239
    %v2342 = vrot.slane %v2338, 4
    %v2343 = vrot.slane %v2339, 4
    %v2346 = vadd.f32 %v2298, %v2342
    %v2347 = vadd.f32 %v2299, %v2343
    %s2348 = sld [smem:[#allocation16 + $0x1b]]
    %v2349 = vstv %s2348
    %v2350 = vmul.f32 %v2349, %v2238
    %v2351 = vmul.f32 %v2349, %v2239
    %v2354 = vrot.slane %v2350, 4
    %v2355 = vrot.slane %v2351, 4
    %v2358 = vadd.f32 %v2310, %v2354
    %v2359 = vadd.f32 %v2311, %v2355
    %s2360 = sld [smem:[#allocation16 + $0x1c]]
    %v2361 = vstv %s2360
    %v2362 = vmul.f32 %v2361, %v2238
    %v2363 = vmul.f32 %v2361, %v2239
    %v2366 = vrot.slane %v2362, 6
    %v2367 = vrot.slane %v2363, 6
    %v2370 = vadd.f32 %v2322, %v2366
    %v2371 = vadd.f32 %v2323, %v2367
    %s2372 = sld [smem:[#allocation16 + $0x1d]]
    %v2373 = vstv %s2372
    %v2374 = vmul.f32 %v2373, %v2238
    %v2375 = vmul.f32 %v2373, %v2239
    %v2378 = vrot.slane %v2374, 6
    %v2379 = vrot.slane %v2375, 6
    %v2382 = vadd.f32 %v2334, %v2378
    %v2383 = vadd.f32 %v2335, %v2379
    %s2384 = sld [smem:[#allocation16 + $0x1e]]
    %v2385 = vstv %s2384
    %v2386 = vmul.f32 %v2385, %v2238
    %v2387 = vmul.f32 %v2385, %v2239
    %v2390 = vrot.slane %v2386, 6
    %v2391 = vrot.slane %v2387, 6
    %v2394 = vadd.f32 %v2346, %v2390
    %v2395 = vadd.f32 %v2347, %v2391
    %s2396 = sld [smem:[#allocation16 + $0x1f]]
    %v2397 = vstv %s2396
    %v2398 = vmul.f32 %v2397, %v2238
    %v2399 = vmul.f32 %v2397, %v2239
    %v2402 = vrot.slane %v2398, 6
    %v2403 = vrot.slane %v2399, 6
    %v2406 = vadd.f32 %v2358, %v2402
    %v2407 = vadd.f32 %v2359, %v2403
    %2408 = vrot.lane.b32.xlu0 %v2054, 15
    %v2409 = vpop.permute.xlu0 %2408
    %2410 = vrot.lane.b32.xlu0 %v2055, 15
    %v2411 = vpop.permute.xlu0 %2410
    %v2412 = vsel %vm527, %v2409, %v2411
    %v2413 = vsel %vm527, %v2411, %v2409
    %v2414 = vmul.f32 %v2413, %v533
    %v2415 = vmul.f32 %v2412, %v537
    %s2416 = sld [smem:[#allocation16 + $0x20]]
    %v2417 = vstv %s2416
    %v2418 = vmul.f32 %v2417, %v2414
    %v2419 = vmul.f32 %v2417, %v2415
    %v2420 = vadd.f32 %v2370, %v2418
    %v2421 = vadd.f32 %v2371, %v2419
    %s2422 = sld [smem:[#allocation16 + $0x21]]
    %v2423 = vstv %s2422
    %v2424 = vmul.f32 %v2423, %v2414
    %v2425 = vmul.f32 %v2423, %v2415
    %v2426 = vadd.f32 %v2382, %v2424
    %v2427 = vadd.f32 %v2383, %v2425
    %s2428 = sld [smem:[#allocation16 + $0x22]]
    %v2429 = vstv %s2428
    %v2430 = vmul.f32 %v2429, %v2414
    %v2431 = vmul.f32 %v2429, %v2415
    %v2432 = vadd.f32 %v2394, %v2430
    %v2433 = vadd.f32 %v2395, %v2431
    %s2434 = sld [smem:[#allocation16 + $0x23]]
    %v2435 = vstv %s2434
    %v2436 = vmul.f32 %v2435, %v2414
    %v2437 = vmul.f32 %v2435, %v2415
    %v2438 = vadd.f32 %v2406, %v2436
    %v2439 = vadd.f32 %v2407, %v2437
    %s2440 = sld [smem:[#allocation16 + $0x24]]
    %v2441 = vstv %s2440
    %v2442 = vmul.f32 %v2441, %v2414
    %v2443 = vmul.f32 %v2441, %v2415
    %v2446 = vrot.slane %v2442, 2
    %v2447 = vrot.slane %v2443, 2
    %v2450 = vadd.f32 %v2420, %v2446
    %v2451 = vadd.f32 %v2421, %v2447
    %s2452 = sld [smem:[#allocation16 + $0x25]]
    %v2453 = vstv %s2452
    %v2454 = vmul.f32 %v2453, %v2414
    %v2455 = vmul.f32 %v2453, %v2415
    %v2458 = vrot.slane %v2454, 2
    %v2459 = vrot.slane %v2455, 2
    %v2462 = vadd.f32 %v2426, %v2458
    %v2463 = vadd.f32 %v2427, %v2459
    %s2464 = sld [smem:[#allocation16 + $0x26]]
    %v2465 = vstv %s2464
    %v2466 = vmul.f32 %v2465, %v2414
    %v2467 = vmul.f32 %v2465, %v2415
    %v2470 = vrot.slane %v2466, 2
    %v2471 = vrot.slane %v2467, 2
    %v2474 = vadd.f32 %v2432, %v2470
    %v2475 = vadd.f32 %v2433, %v2471
    %s2476 = sld [smem:[#allocation16 + $0x27]]
    %v2477 = vstv %s2476
    %v2478 = vmul.f32 %v2477, %v2414
    %v2479 = vmul.f32 %v2477, %v2415
    %v2482 = vrot.slane %v2478, 2
    %v2483 = vrot.slane %v2479, 2
    %v2486 = vadd.f32 %v2438, %v2482
    %v2487 = vadd.f32 %v2439, %v2483
    %s2488 = sld [smem:[#allocation16 + $0x28]]
    %v2489 = vstv %s2488
    %v2490 = vmul.f32 %v2489, %v2414
    %v2491 = vmul.f32 %v2489, %v2415
    %v2494 = vrot.slane %v2490, 4
    %v2495 = vrot.slane %v2491, 4
    %v2498 = vadd.f32 %v2450, %v2494
    %v2499 = vadd.f32 %v2451, %v2495
    %s2500 = sld [smem:[#allocation16 + $0x29]]
    %v2501 = vstv %s2500
    %v2502 = vmul.f32 %v2501, %v2414
    %v2503 = vmul.f32 %v2501, %v2415
    %v2506 = vrot.slane %v2502, 4
    %v2507 = vrot.slane %v2503, 4
    %v2510 = vadd.f32 %v2462, %v2506
    %v2511 = vadd.f32 %v2463, %v2507
    %s2512 = sld [smem:[#allocation16 + $0x2a]]
    %v2513 = vstv %s2512
    %v2514 = vmul.f32 %v2513, %v2414
    %v2515 = vmul.f32 %v2513, %v2415
    %v2518 = vrot.slane %v2514, 4
    %v2519 = vrot.slane %v2515, 4
    %v2522 = vadd.f32 %v2474, %v2518
    %v2523 = vadd.f32 %v2475, %v2519
    %s2524 = sld [smem:[#allocation16 + $0x2b]]
    %v2525 = vstv %s2524
    %v2526 = vmul.f32 %v2525, %v2414
    %v2527 = vmul.f32 %v2525, %v2415
    %v2530 = vrot.slane %v2526, 4
    %v2531 = vrot.slane %v2527, 4
    %v2534 = vadd.f32 %v2486, %v2530
    %v2535 = vadd.f32 %v2487, %v2531
    %s2536 = sld [smem:[#allocation16 + $0x2c]]
    %v2537 = vstv %s2536
    %v2538 = vmul.f32 %v2537, %v2414
    %v2539 = vmul.f32 %v2537, %v2415
    %v2542 = vrot.slane %v2538, 6
    %v2543 = vrot.slane %v2539, 6
    %v2546 = vadd.f32 %v2498, %v2542
    %v2547 = vadd.f32 %v2499, %v2543
    %s2548 = sld [smem:[#allocation16 + $0x2d]]
    %v2549 = vstv %s2548
    %v2550 = vmul.f32 %v2549, %v2414
    %v2551 = vmul.f32 %v2549, %v2415
    %v2554 = vrot.slane %v2550, 6
    %v2555 = vrot.slane %v2551, 6
    %v2558 = vadd.f32 %v2510, %v2554
    %v2559 = vadd.f32 %v2511, %v2555
    %s2560 = sld [smem:[#allocation16 + $0x2e]]
    %v2561 = vstv %s2560
    %v2562 = vmul.f32 %v2561, %v2414
    %v2563 = vmul.f32 %v2561, %v2415
    %v2566 = vrot.slane %v2562, 6
    %v2567 = vrot.slane %v2563, 6
    %v2570 = vadd.f32 %v2522, %v2566
    %v2571 = vadd.f32 %v2523, %v2567
    %s2572 = sld [smem:[#allocation16 + $0x2f]]
    %v2573 = vstv %s2572
    %v2574 = vmul.f32 %v2573, %v2414
    %v2575 = vmul.f32 %v2573, %v2415
    %v2578 = vrot.slane %v2574, 6
    %v2579 = vrot.slane %v2575, 6
    %v2582 = vadd.f32 %v2534, %v2578
    %v2583 = vadd.f32 %v2535, %v2579
    %2584 = vrot.lane.b32.xlu0 %v2054, 1
    %v2585 = vpop.permute.xlu0 %2584
    %2586 = vrot.lane.b32.xlu0 %v2055, 1
    %v2587 = vpop.permute.xlu0 %2586
    %v2588 = vsel %vm712, %v2585, %v2587
    %v2589 = vsel %vm712, %v2587, %v2585
    %v2590 = vmul.f32 %v2589, %v718
    %v2591 = vmul.f32 %v2588, %v722
    %s2592 = sld [smem:[#allocation16 + $0x30]]
    %v2593 = vstv %s2592
    %v2594 = vmul.f32 %v2593, %v2590
    %v2595 = vmul.f32 %v2593, %v2591
    %v2596 = vadd.f32 %v2546, %v2594
    %v2597 = vadd.f32 %v2547, %v2595
    %s2598 = sld [smem:[#allocation16 + $0x31]]
    %v2599 = vstv %s2598
    %v2600 = vmul.f32 %v2599, %v2590
    %v2601 = vmul.f32 %v2599, %v2591
    %v2602 = vadd.f32 %v2558, %v2600
    %v2603 = vadd.f32 %v2559, %v2601
    %s2604 = sld [smem:[#allocation16 + $0x32]]
    %v2605 = vstv %s2604
    %v2606 = vmul.f32 %v2605, %v2590
    %v2607 = vmul.f32 %v2605, %v2591
    %v2608 = vadd.f32 %v2570, %v2606
    %v2609 = vadd.f32 %v2571, %v2607
    %s2610 = sld [smem:[#allocation16 + $0x33]]
    %v2611 = vstv %s2610
    %v2612 = vmul.f32 %v2611, %v2590
    %v2613 = vmul.f32 %v2611, %v2591
    %v2614 = vadd.f32 %v2582, %v2612
    %v2615 = vadd.f32 %v2583, %v2613
    %s2616 = sld [smem:[#allocation16 + $0x34]]
    %v2617 = vstv %s2616
    %v2618 = vmul.f32 %v2617, %v2590
    %v2619 = vmul.f32 %v2617, %v2591
    %v2622 = vrot.slane %v2618, 2
    %v2623 = vrot.slane %v2619, 2
    %v2626 = vadd.f32 %v2596, %v2622
    %v2627 = vadd.f32 %v2597, %v2623
    %s2628 = sld [smem:[#allocation16 + $0x35]]
    %v2629 = vstv %s2628
    %v2630 = vmul.f32 %v2629, %v2590
    %v2631 = vmul.f32 %v2629, %v2591
    %v2634 = vrot.slane %v2630, 2
    %v2635 = vrot.slane %v2631, 2
    %v2638 = vadd.f32 %v2602, %v2634
    %v2639 = vadd.f32 %v2603, %v2635
    %s2640 = sld [smem:[#allocation16 + $0x36]]
    %v2641 = vstv %s2640
    %v2642 = vmul.f32 %v2641, %v2590
    %v2643 = vmul.f32 %v2641, %v2591
    %v2646 = vrot.slane %v2642, 2
    %v2647 = vrot.slane %v2643, 2
    %v2650 = vadd.f32 %v2608, %v2646
    %v2651 = vadd.f32 %v2609, %v2647
    %s2652 = sld [smem:[#allocation16 + $0x37]]
    %v2653 = vstv %s2652
    %v2654 = vmul.f32 %v2653, %v2590
    %v2655 = vmul.f32 %v2653, %v2591
    %v2658 = vrot.slane %v2654, 2
    %v2659 = vrot.slane %v2655, 2
    %v2662 = vadd.f32 %v2614, %v2658
    %v2663 = vadd.f32 %v2615, %v2659
    %s2664 = sld [smem:[#allocation16 + $0x38]]
    %v2665 = vstv %s2664
    %v2666 = vmul.f32 %v2665, %v2590
    %v2667 = vmul.f32 %v2665, %v2591
    %v2670 = vrot.slane %v2666, 4
    %v2671 = vrot.slane %v2667, 4
    %v2674 = vadd.f32 %v2626, %v2670
    %v2675 = vadd.f32 %v2627, %v2671
    %s2676 = sld [smem:[#allocation16 + $0x39]]
    %v2677 = vstv %s2676
    %v2678 = vmul.f32 %v2677, %v2590
    %v2679 = vmul.f32 %v2677, %v2591
    %v2682 = vrot.slane %v2678, 4
    %v2683 = vrot.slane %v2679, 4
    %v2686 = vadd.f32 %v2638, %v2682
    %v2687 = vadd.f32 %v2639, %v2683
    %s2688 = sld [smem:[#allocation16 + $0x3a]]
    %v2689 = vstv %s2688
    %v2690 = vmul.f32 %v2689, %v2590
    %v2691 = vmul.f32 %v2689, %v2591
    %v2694 = vrot.slane %v2690, 4
    %v2695 = vrot.slane %v2691, 4
    %v2698 = vadd.f32 %v2650, %v2694
    %v2699 = vadd.f32 %v2651, %v2695
    %s2700 = sld [smem:[#allocation16 + $0x3b]]
    %v2701 = vstv %s2700
    %v2702 = vmul.f32 %v2701, %v2590
    %v2703 = vmul.f32 %v2701, %v2591
    %v2706 = vrot.slane %v2702, 4
    %v2707 = vrot.slane %v2703, 4
    %v2710 = vadd.f32 %v2662, %v2706
    %v2711 = vadd.f32 %v2663, %v2707
    %s2712 = sld [smem:[#allocation16 + $0x3c]]
    %v2713 = vstv %s2712
    %v2714 = vmul.f32 %v2713, %v2590
    %v2715 = vmul.f32 %v2713, %v2591
    %v2718 = vrot.slane %v2714, 6
    %v2719 = vrot.slane %v2715, 6
    %v2722 = vadd.f32 %v2674, %v2718
    %v2723 = vadd.f32 %v2675, %v2719
    %s2724 = sld [smem:[#allocation16 + $0x3d]]
    %v2725 = vstv %s2724
    %v2726 = vmul.f32 %v2725, %v2590
    %v2727 = vmul.f32 %v2725, %v2591
    %v2730 = vrot.slane %v2726, 6
    %v2731 = vrot.slane %v2727, 6
    %v2734 = vadd.f32 %v2686, %v2730
    %v2735 = vadd.f32 %v2687, %v2731
    %s2736 = sld [smem:[#allocation16 + $0x3e]]
    %v2737 = vstv %s2736
    %v2738 = vmul.f32 %v2737, %v2590
    %v2739 = vmul.f32 %v2737, %v2591
    %v2742 = vrot.slane %v2738, 6
    %v2743 = vrot.slane %v2739, 6
    %v2746 = vadd.f32 %v2698, %v2742
    %v2747 = vadd.f32 %v2699, %v2743
    %s2748 = sld [smem:[#allocation16 + $0x3f]]
    %v2749 = vstv %s2748
    %v2750 = vmul.f32 %v2749, %v2590
    %v2751 = vmul.f32 %v2749, %v2591
    %v2754 = vrot.slane %v2750, 6
    %v2755 = vrot.slane %v2751, 6
    %v2758 = vadd.f32 %v2710, %v2754
    %v2759 = vadd.f32 %v2711, %v2755
    %v2760 = vmul.f32 %v2054, %v896
    %v2761 = vmul.f32 %v2055, %v900
    %s2762 = sld [smem:[#allocation16 + $0x40]]
    %v2763 = vstv %s2762
    %v2764 = vmul.f32 %v2763, %v2760
    %v2765 = vmul.f32 %v2763, %v2761
    %v2766 = vadd.f32 %v2722, %v2764
    %v2767 = vadd.f32 %v2723, %v2765
    %s2768 = sld [smem:[#allocation16 + $0x41]]
    %v2769 = vstv %s2768
    %v2770 = vmul.f32 %v2769, %v2760
    %v2771 = vmul.f32 %v2769, %v2761
    %v2772 = vadd.f32 %v2734, %v2770
    %v2773 = vadd.f32 %v2735, %v2771
    %s2774 = sld [smem:[#allocation16 + $0x42]]
    %v2775 = vstv %s2774
    %v2776 = vmul.f32 %v2775, %v2760
    %v2777 = vmul.f32 %v2775, %v2761
    %v2778 = vadd.f32 %v2746, %v2776
    %v2779 = vadd.f32 %v2747, %v2777
    %s2780 = sld [smem:[#allocation16 + $0x43]]
    %v2781 = vstv %s2780
    %v2782 = vmul.f32 %v2781, %v2760
    %v2783 = vmul.f32 %v2781, %v2761
    %v2784 = vadd.f32 %v2758, %v2782
    %v2785 = vadd.f32 %v2759, %v2783
    %s2786 = sld [smem:[#allocation16 + $0x44]]
    %v2787 = vstv %s2786
    %v2788 = vmul.f32 %v2787, %v2760
    %v2789 = vmul.f32 %v2787, %v2761
    %v2792 = vrot.slane %v2788, 2
    %v2793 = vrot.slane %v2789, 2
    %v2796 = vadd.f32 %v2766, %v2792
    %v2797 = vadd.f32 %v2767, %v2793
    %s2798 = sld [smem:[#allocation16 + $0x45]]
    %v2799 = vstv %s2798
    %v2800 = vmul.f32 %v2799, %v2760
    %v2801 = vmul.f32 %v2799, %v2761
    %v2804 = vrot.slane %v2800, 2
    %v2805 = vrot.slane %v2801, 2
    %v2808 = vadd.f32 %v2772, %v2804
    %v2809 = vadd.f32 %v2773, %v2805
    %s2810 = sld [smem:[#allocation16 + $0x46]]
    %v2811 = vstv %s2810
    %v2812 = vmul.f32 %v2811, %v2760
    %v2813 = vmul.f32 %v2811, %v2761
    %v2816 = vrot.slane %v2812, 2
    %v2817 = vrot.slane %v2813, 2
    %v2820 = vadd.f32 %v2778, %v2816
    %v2821 = vadd.f32 %v2779, %v2817
    %s2822 = sld [smem:[#allocation16 + $0x47]]
    %v2823 = vstv %s2822
    %v2824 = vmul.f32 %v2823, %v2760
    %v2825 = vmul.f32 %v2823, %v2761
    %v2828 = vrot.slane %v2824, 2
    %v2829 = vrot.slane %v2825, 2
    %v2832 = vadd.f32 %v2784, %v2828
    %v2833 = vadd.f32 %v2785, %v2829
    %s2834 = sld [smem:[#allocation16 + $0x48]]
    %v2835 = vstv %s2834
    %v2836 = vmul.f32 %v2835, %v2760
    %v2837 = vmul.f32 %v2835, %v2761
    %v2840 = vrot.slane %v2836, 4
    %v2841 = vrot.slane %v2837, 4
    %v2844 = vadd.f32 %v2796, %v2840
    %v2845 = vadd.f32 %v2797, %v2841
    %s2846 = sld [smem:[#allocation16 + $0x49]]
    %v2847 = vstv %s2846
    %v2848 = vmul.f32 %v2847, %v2760
    %v2849 = vmul.f32 %v2847, %v2761
    %v2852 = vrot.slane %v2848, 4
    %v2853 = vrot.slane %v2849, 4
    %v2856 = vadd.f32 %v2808, %v2852
    %v2857 = vadd.f32 %v2809, %v2853
    %s2858 = sld [smem:[#allocation16 + $0x4a]]
    %v2859 = vstv %s2858
    %v2860 = vmul.f32 %v2859, %v2760
    %v2861 = vmul.f32 %v2859, %v2761
    %v2864 = vrot.slane %v2860, 4
    %v2865 = vrot.slane %v2861, 4
    %v2868 = vadd.f32 %v2820, %v2864
    %v2869 = vadd.f32 %v2821, %v2865
    %s2870 = sld [smem:[#allocation16 + $0x4b]]
    %v2871 = vstv %s2870
    %v2872 = vmul.f32 %v2871, %v2760
    %v2873 = vmul.f32 %v2871, %v2761
    %v2876 = vrot.slane %v2872, 4
    %v2877 = vrot.slane %v2873, 4
    %v2880 = vadd.f32 %v2832, %v2876
    %v2881 = vadd.f32 %v2833, %v2877
    %s2882 = sld [smem:[#allocation16 + $0x4c]]
    %v2883 = vstv %s2882
    %v2884 = vmul.f32 %v2883, %v2760
    %v2885 = vmul.f32 %v2883, %v2761
    %v2888 = vrot.slane %v2884, 6
    %v2889 = vrot.slane %v2885, 6
    %v2892 = vadd.f32 %v2844, %v2888
    %v2893 = vadd.f32 %v2845, %v2889
    %s2894 = sld [smem:[#allocation16 + $0x4d]]
    %v2895 = vstv %s2894
    %v2896 = vmul.f32 %v2895, %v2760
    %v2897 = vmul.f32 %v2895, %v2761
    %v2900 = vrot.slane %v2896, 6
    %v2901 = vrot.slane %v2897, 6
    %v2904 = vadd.f32 %v2856, %v2900
    %v2905 = vadd.f32 %v2857, %v2901
    %s2906 = sld [smem:[#allocation16 + $0x4e]]
    %v2907 = vstv %s2906
    %v2908 = vmul.f32 %v2907, %v2760
    %v2909 = vmul.f32 %v2907, %v2761
    %v2912 = vrot.slane %v2908, 6
    %v2913 = vrot.slane %v2909, 6
    %v2916 = vadd.f32 %v2868, %v2912
    %v2917 = vadd.f32 %v2869, %v2913
    %s2918 = sld [smem:[#allocation16 + $0x4f]]
    %v2919 = vstv %s2918
    %v2920 = vmul.f32 %v2919, %v2760
    %v2921 = vmul.f32 %v2919, %v2761
    %v2924 = vrot.slane %v2920, 6
    %v2925 = vrot.slane %v2921, 6
    %v2928 = vadd.f32 %v2880, %v2924
    %v2929 = vadd.f32 %v2881, %v2925
    %2930 = vrot.lane.b32.xlu0 %v2054, 127
    %v2931 = vpop.permute.xlu0 %2930
    %2932 = vrot.lane.b32.xlu0 %v2055, 127
    %v2933 = vpop.permute.xlu0 %2932
    %v2934 = vsel %vm1075, %v2931, %v2933
    %v2935 = vsel %vm1075, %v2933, %v2931
    %v2936 = vmul.f32 %v2934, %v1081
    %v2937 = vmul.f32 %v2935, %v1085
    %s2938 = sld [smem:[#allocation16 + $0x50]]
    %v2939 = vstv %s2938
    %v2940 = vmul.f32 %v2939, %v2936
    %v2941 = vmul.f32 %v2939, %v2937
    %v2942 = vadd.f32 %v2892, %v2940
    %v2943 = vadd.f32 %v2893, %v2941
    %s2944 = sld [smem:[#allocation16 + $0x51]]
    %v2945 = vstv %s2944
    %v2946 = vmul.f32 %v2945, %v2936
    %v2947 = vmul.f32 %v2945, %v2937
    %v2948 = vadd.f32 %v2904, %v2946
    %v2949 = vadd.f32 %v2905, %v2947
    %s2950 = sld [smem:[#allocation16 + $0x52]]
    %v2951 = vstv %s2950
    %v2952 = vmul.f32 %v2951, %v2936
    %v2953 = vmul.f32 %v2951, %v2937
    %v2954 = vadd.f32 %v2916, %v2952
    %v2955 = vadd.f32 %v2917, %v2953
    %s2956 = sld [smem:[#allocation16 + $0x53]]
    %v2957 = vstv %s2956
    %v2958 = vmul.f32 %v2957, %v2936
    %v2959 = vmul.f32 %v2957, %v2937
    %v2960 = vadd.f32 %v2928, %v2958
    %v2961 = vadd.f32 %v2929, %v2959
    %s2962 = sld [smem:[#allocation16 + $0x54]]
    %v2963 = vstv %s2962
    %v2964 = vmul.f32 %v2963, %v2936
    %v2965 = vmul.f32 %v2963, %v2937
    %v2968 = vrot.slane %v2964, 2
    %v2969 = vrot.slane %v2965, 2
    %v2972 = vadd.f32 %v2942, %v2968
    %v2973 = vadd.f32 %v2943, %v2969
    %s2974 = sld [smem:[#allocation16 + $0x55]]
    %v2975 = vstv %s2974
    %v2976 = vmul.f32 %v2975, %v2936
    %v2977 = vmul.f32 %v2975, %v2937
    %v2980 = vrot.slane %v2976, 2
    %v2981 = vrot.slane %v2977, 2
    %v2984 = vadd.f32 %v2948, %v2980
    %v2985 = vadd.f32 %v2949, %v2981
    %s2986 = sld [smem:[#allocation16 + $0x56]]
    %v2987 = vstv %s2986
    %v2988 = vmul.f32 %v2987, %v2936
    %v2989 = vmul.f32 %v2987, %v2937
    %v2992 = vrot.slane %v2988, 2
    %v2993 = vrot.slane %v2989, 2
    %v2996 = vadd.f32 %v2954, %v2992
    %v2997 = vadd.f32 %v2955, %v2993
    %s2998 = sld [smem:[#allocation16 + $0x57]]
    %v2999 = vstv %s2998
    %v3000 = vmul.f32 %v2999, %v2936
    %v3001 = vmul.f32 %v2999, %v2937
    %v3004 = vrot.slane %v3000, 2
    %v3005 = vrot.slane %v3001, 2
    %v3008 = vadd.f32 %v2960, %v3004
    %v3009 = vadd.f32 %v2961, %v3005
    %s3010 = sld [smem:[#allocation16 + $0x58]]
    %v3011 = vstv %s3010
    %v3012 = vmul.f32 %v3011, %v2936
    %v3013 = vmul.f32 %v3011, %v2937
    %v3016 = vrot.slane %v3012, 4
    %v3017 = vrot.slane %v3013, 4
    %v3020 = vadd.f32 %v2972, %v3016
    %v3021 = vadd.f32 %v2973, %v3017
    %s3022 = sld [smem:[#allocation16 + $0x59]]
    %v3023 = vstv %s3022
    %v3024 = vmul.f32 %v3023, %v2936
    %v3025 = vmul.f32 %v3023, %v2937
    %v3028 = vrot.slane %v3024, 4
    %v3029 = vrot.slane %v3025, 4
    %v3032 = vadd.f32 %v2984, %v3028
    %v3033 = vadd.f32 %v2985, %v3029
    %s3034 = sld [smem:[#allocation16 + $0x5a]]
    %v3035 = vstv %s3034
    %v3036 = vmul.f32 %v3035, %v2936
    %v3037 = vmul.f32 %v3035, %v2937
    %v3040 = vrot.slane %v3036, 4
    %v3041 = vrot.slane %v3037, 4
    %v3044 = vadd.f32 %v2996, %v3040
    %v3045 = vadd.f32 %v2997, %v3041
    %s3046 = sld [smem:[#allocation16 + $0x5b]]
    %v3047 = vstv %s3046
    %v3048 = vmul.f32 %v3047, %v2936
    %v3049 = vmul.f32 %v3047, %v2937
    %v3052 = vrot.slane %v3048, 4
    %v3053 = vrot.slane %v3049, 4
    %v3056 = vadd.f32 %v3008, %v3052
    %v3057 = vadd.f32 %v3009, %v3053
    %s3058 = sld [smem:[#allocation16 + $0x5c]]
    %v3059 = vstv %s3058
    %v3060 = vmul.f32 %v3059, %v2936
    %v3061 = vmul.f32 %v3059, %v2937
    %v3064 = vrot.slane %v3060, 6
    %v3065 = vrot.slane %v3061, 6
    %v3068 = vadd.f32 %v3020, %v3064
    %v3069 = vadd.f32 %v3021, %v3065
    %s3070 = sld [smem:[#allocation16 + $0x5d]]
    %v3071 = vstv %s3070
    %v3072 = vmul.f32 %v3071, %v2936
    %v3073 = vmul.f32 %v3071, %v2937
    %v3076 = vrot.slane %v3072, 6
    %v3077 = vrot.slane %v3073, 6
    %v3080 = vadd.f32 %v3032, %v3076
    %v3081 = vadd.f32 %v3033, %v3077
    %s3082 = sld [smem:[#allocation16 + $0x5e]]
    %v3083 = vstv %s3082
    %v3084 = vmul.f32 %v3083, %v2936
    %v3085 = vmul.f32 %v3083, %v2937
    %v3088 = vrot.slane %v3084, 6
    %v3089 = vrot.slane %v3085, 6
    %v3092 = vadd.f32 %v3044, %v3088
    %v3093 = vadd.f32 %v3045, %v3089
    %s3094 = sld [smem:[#allocation16 + $0x5f]]
    %v3095 = vstv %s3094
    %v3096 = vmul.f32 %v3095, %v2936
    %v3097 = vmul.f32 %v3095, %v2937
    %v3100 = vrot.slane %v3096, 6
    %v3101 = vrot.slane %v3097, 6
    %v3104 = vadd.f32 %v3056, %v3100
    %v3105 = vadd.f32 %v3057, %v3101
    %3106 = vrot.lane.b32.xlu0 %v2054, 113
    %v3107 = vpop.permute.xlu0 %3106
    %3108 = vrot.lane.b32.xlu0 %v2055, 113
    %v3109 = vpop.permute.xlu0 %3108
    %v3110 = vsel %vm1260, %v3107, %v3109
    %v3111 = vsel %vm1260, %v3109, %v3107
    %v3112 = vmul.f32 %v3110, %v1266
    %v3113 = vmul.f32 %v3111, %v1270
    %s3114 = sld [smem:[#allocation16 + $0x60]]
    %v3115 = vstv %s3114
    %v3116 = vmul.f32 %v3115, %v3112
    %v3117 = vmul.f32 %v3115, %v3113
    %v3118 = vadd.f32 %v3068, %v3116
    %v3119 = vadd.f32 %v3069, %v3117
    %s3120 = sld [smem:[#allocation16 + $0x61]]
    %v3121 = vstv %s3120
    %v3122 = vmul.f32 %v3121, %v3112
    %v3123 = vmul.f32 %v3121, %v3113
    %v3124 = vadd.f32 %v3080, %v3122
    %v3125 = vadd.f32 %v3081, %v3123
    %s3126 = sld [smem:[#allocation16 + $0x62]]
    %v3127 = vstv %s3126
    %v3128 = vmul.f32 %v3127, %v3112
    %v3129 = vmul.f32 %v3127, %v3113
    %v3130 = vadd.f32 %v3092, %v3128
    %v3131 = vadd.f32 %v3093, %v3129
    %s3132 = sld [smem:[#allocation16 + $0x63]]
    %v3133 = vstv %s3132
    %v3134 = vmul.f32 %v3133, %v3112
    %v3135 = vmul.f32 %v3133, %v3113
    %v3136 = vadd.f32 %v3104, %v3134
    %v3137 = vadd.f32 %v3105, %v3135
    %s3138 = sld [smem:[#allocation16 + $0x64]]
    %v3139 = vstv %s3138
    %v3140 = vmul.f32 %v3139, %v3112
    %v3141 = vmul.f32 %v3139, %v3113
    %v3144 = vrot.slane %v3140, 2
    %v3145 = vrot.slane %v3141, 2
    %v3148 = vadd.f32 %v3118, %v3144
    %v3149 = vadd.f32 %v3119, %v3145
    %s3150 = sld [smem:[#allocation16 + $0x65]]
    %v3151 = vstv %s3150
    %v3152 = vmul.f32 %v3151, %v3112
    %v3153 = vmul.f32 %v3151, %v3113
    %v3156 = vrot.slane %v3152, 2
    %v3157 = vrot.slane %v3153, 2
    %v3160 = vadd.f32 %v3124, %v3156
    %v3161 = vadd.f32 %v3125, %v3157
    %s3162 = sld [smem:[#allocation16 + $0x66]]
    %v3163 = vstv %s3162
    %v3164 = vmul.f32 %v3163, %v3112
    %v3165 = vmul.f32 %v3163, %v3113
    %v3168 = vrot.slane %v3164, 2
    %v3169 = vrot.slane %v3165, 2
    %v3172 = vadd.f32 %v3130, %v3168
    %v3173 = vadd.f32 %v3131, %v3169
    %s3174 = sld [smem:[#allocation16 + $0x67]]
    %v3175 = vstv %s3174
    %v3176 = vmul.f32 %v3175, %v3112
    %v3177 = vmul.f32 %v3175, %v3113
    %v3180 = vrot.slane %v3176, 2
    %v3181 = vrot.slane %v3177, 2
    %v3184 = vadd.f32 %v3136, %v3180
    %v3185 = vadd.f32 %v3137, %v3181
    %s3186 = sld [smem:[#allocation16 + $0x68]]
    %v3187 = vstv %s3186
    %v3188 = vmul.f32 %v3187, %v3112
    %v3189 = vmul.f32 %v3187, %v3113
    %v3192 = vrot.slane %v3188, 4
    %v3193 = vrot.slane %v3189, 4
    %v3196 = vadd.f32 %v3148, %v3192
    %v3197 = vadd.f32 %v3149, %v3193
    %s3198 = sld [smem:[#allocation16 + $0x69]]
    %v3199 = vstv %s3198
    %v3200 = vmul.f32 %v3199, %v3112
    %v3201 = vmul.f32 %v3199, %v3113
    %v3204 = vrot.slane %v3200, 4
    %v3205 = vrot.slane %v3201, 4
    %v3208 = vadd.f32 %v3160, %v3204
    %v3209 = vadd.f32 %v3161, %v3205
    %s3210 = sld [smem:[#allocation16 + $0x6a]]
    %v3211 = vstv %s3210
    %v3212 = vmul.f32 %v3211, %v3112
    %v3213 = vmul.f32 %v3211, %v3113
    %v3216 = vrot.slane %v3212, 4
    %v3217 = vrot.slane %v3213, 4
    %v3220 = vadd.f32 %v3172, %v3216
    %v3221 = vadd.f32 %v3173, %v3217
    %s3222 = sld [smem:[#allocation16 + $0x6b]]
    %v3223 = vstv %s3222
    %v3224 = vmul.f32 %v3223, %v3112
    %v3225 = vmul.f32 %v3223, %v3113
    %v3228 = vrot.slane %v3224, 4
    %v3229 = vrot.slane %v3225, 4
    %v3232 = vadd.f32 %v3184, %v3228
    %v3233 = vadd.f32 %v3185, %v3229
    %s3234 = sld [smem:[#allocation16 + $0x6c]]
    %v3235 = vstv %s3234
    %v3236 = vmul.f32 %v3235, %v3112
    %v3237 = vmul.f32 %v3235, %v3113
    %v3240 = vrot.slane %v3236, 6
    %v3241 = vrot.slane %v3237, 6
    %v3244 = vadd.f32 %v3196, %v3240
    %v3245 = vadd.f32 %v3197, %v3241
    %s3246 = sld [smem:[#allocation16 + $0x6d]]
    %v3247 = vstv %s3246
    %v3248 = vmul.f32 %v3247, %v3112
    %v3249 = vmul.f32 %v3247, %v3113
    %v3252 = vrot.slane %v3248, 6
    %v3253 = vrot.slane %v3249, 6
    %v3256 = vadd.f32 %v3208, %v3252
    %v3257 = vadd.f32 %v3209, %v3253
    %s3258 = sld [smem:[#allocation16 + $0x6e]]
    %v3259 = vstv %s3258
    %v3260 = vmul.f32 %v3259, %v3112
    %v3261 = vmul.f32 %v3259, %v3113
    %v3264 = vrot.slane %v3260, 6
    %v3265 = vrot.slane %v3261, 6
    %v3268 = vadd.f32 %v3220, %v3264
    %v3269 = vadd.f32 %v3221, %v3265
    %s3270 = sld [smem:[#allocation16 + $0x6f]]
    %v3271 = vstv %s3270
    %v3272 = vmul.f32 %v3271, %v3112
    %v3273 = vmul.f32 %v3271, %v3113
    %v3276 = vrot.slane %v3272, 6
    %v3277 = vrot.slane %v3273, 6
    %v3280 = vadd.f32 %v3232, %v3276
    %v3281 = vadd.f32 %v3233, %v3277
    %3282 = vrot.lane.b32.xlu0 %v2054, 112
    %v3283 = vpop.permute.xlu0 %3282
    %3284 = vrot.lane.b32.xlu0 %v2055, 112
    %v3285 = vpop.permute.xlu0 %3284
    %v3286 = vsel %vm1445, %v3283, %v3285
    %v3287 = vsel %vm1445, %v3285, %v3283
    %v3288 = vmul.f32 %v3286, %v1451
    %v3289 = vmul.f32 %v3287, %v1455
    %s3290 = sld [smem:[#allocation16 + $0x70]]
    %v3291 = vstv %s3290
    %v3292 = vmul.f32 %v3291, %v3288
    %v3293 = vmul.f32 %v3291, %v3289
    %v3294 = vadd.f32 %v3244, %v3292
    %v3295 = vadd.f32 %v3245, %v3293
    %s3296 = sld [smem:[#allocation16 + $0x71]]
    %v3297 = vstv %s3296
    %v3298 = vmul.f32 %v3297, %v3288
    %v3299 = vmul.f32 %v3297, %v3289
    %v3300 = vadd.f32 %v3256, %v3298
    %v3301 = vadd.f32 %v3257, %v3299
    %s3302 = sld [smem:[#allocation16 + $0x72]]
    %v3303 = vstv %s3302
    %v3304 = vmul.f32 %v3303, %v3288
    %v3305 = vmul.f32 %v3303, %v3289
    %v3306 = vadd.f32 %v3268, %v3304
    %v3307 = vadd.f32 %v3269, %v3305
    %s3308 = sld [smem:[#allocation16 + $0x73]]
    %v3309 = vstv %s3308
    %v3310 = vmul.f32 %v3309, %v3288
    %v3311 = vmul.f32 %v3309, %v3289
    %v3312 = vadd.f32 %v3280, %v3310
    %v3313 = vadd.f32 %v3281, %v3311
    %s3314 = sld [smem:[#allocation16 + $0x74]]
    %v3315 = vstv %s3314
    %v3316 = vmul.f32 %v3315, %v3288
    %v3317 = vmul.f32 %v3315, %v3289
    %v3320 = vrot.slane %v3316, 2
    %v3321 = vrot.slane %v3317, 2
    %v3324 = vadd.f32 %v3294, %v3320
    %v3325 = vadd.f32 %v3295, %v3321
    %s3326 = sld [smem:[#allocation16 + $0x75]]
    %v3327 = vstv %s3326
    %v3328 = vmul.f32 %v3327, %v3288
    %v3329 = vmul.f32 %v3327, %v3289
    %v3332 = vrot.slane %v3328, 2
    %v3333 = vrot.slane %v3329, 2
    %v3336 = vadd.f32 %v3300, %v3332
    %v3337 = vadd.f32 %v3301, %v3333
    %s3338 = sld [smem:[#allocation16 + $0x76]]
    %v3339 = vstv %s3338
    %v3340 = vmul.f32 %v3339, %v3288
    %v3341 = vmul.f32 %v3339, %v3289
    %v3344 = vrot.slane %v3340, 2
    %v3345 = vrot.slane %v3341, 2
    %v3348 = vadd.f32 %v3306, %v3344
    %v3349 = vadd.f32 %v3307, %v3345
    %s3350 = sld [smem:[#allocation16 + $0x77]]
    %v3351 = vstv %s3350
    %v3352 = vmul.f32 %v3351, %v3288
    %v3353 = vmul.f32 %v3351, %v3289
    %v3356 = vrot.slane %v3352, 2
    %v3357 = vrot.slane %v3353, 2
    %v3360 = vadd.f32 %v3312, %v3356
    %v3361 = vadd.f32 %v3313, %v3357
    %s3362 = sld [smem:[#allocation16 + $0x78]]
    %v3363 = vstv %s3362
    %v3364 = vmul.f32 %v3363, %v3288
    %v3365 = vmul.f32 %v3363, %v3289
    %v3368 = vrot.slane %v3364, 4
    %v3369 = vrot.slane %v3365, 4
    %v3372 = vadd.f32 %v3324, %v3368
    %v3373 = vadd.f32 %v3325, %v3369
    %s3374 = sld [smem:[#allocation16 + $0x79]]
    %v3375 = vstv %s3374
    %v3376 = vmul.f32 %v3375, %v3288
    %v3377 = vmul.f32 %v3375, %v3289
    %v3380 = vrot.slane %v3376, 4
    %v3381 = vrot.slane %v3377, 4
    %v3384 = vadd.f32 %v3336, %v3380
    %v3385 = vadd.f32 %v3337, %v3381
    %s3386 = sld [smem:[#allocation16 + $0x7a]]
    %v3387 = vstv %s3386
    %v3388 = vmul.f32 %v3387, %v3288
    %v3389 = vmul.f32 %v3387, %v3289
    %v3392 = vrot.slane %v3388, 4
    %v3393 = vrot.slane %v3389, 4
    %v3396 = vadd.f32 %v3348, %v3392
    %v3397 = vadd.f32 %v3349, %v3393
    %s3398 = sld [smem:[#allocation16 + $0x7b]]
    %v3399 = vstv %s3398
    %v3400 = vmul.f32 %v3399, %v3288
    %v3401 = vmul.f32 %v3399, %v3289
    %v3404 = vrot.slane %v3400, 4
    %v3405 = vrot.slane %v3401, 4
    %v3408 = vadd.f32 %v3360, %v3404
    %v3409 = vadd.f32 %v3361, %v3405
    %s3410 = sld [smem:[#allocation16 + $0x7c]]
    %v3411 = vstv %s3410
    %v3412 = vmul.f32 %v3411, %v3288
    %v3413 = vmul.f32 %v3411, %v3289
    %v3416 = vrot.slane %v3412, 6
    %v3417 = vrot.slane %v3413, 6
    %v3420 = vadd.f32 %v3372, %v3416
    %v3421 = vadd.f32 %v3373, %v3417
    %s3422 = sld [smem:[#allocation16 + $0x7d]]
    %v3423 = vstv %s3422
    %v3424 = vmul.f32 %v3423, %v3288
    %v3425 = vmul.f32 %v3423, %v3289
    %v3428 = vrot.slane %v3424, 6
    %v3429 = vrot.slane %v3425, 6
    %v3432 = vadd.f32 %v3384, %v3428
    %v3433 = vadd.f32 %v3385, %v3429
    %s3434 = sld [smem:[#allocation16 + $0x7e]]
    %v3435 = vstv %s3434
    %v3436 = vmul.f32 %v3435, %v3288
    %v3437 = vmul.f32 %v3435, %v3289
    %v3440 = vrot.slane %v3436, 6
    %v3441 = vrot.slane %v3437, 6
    %v3444 = vadd.f32 %v3396, %v3440
    %v3445 = vadd.f32 %v3397, %v3441
    %s3446 = sld [smem:[#allocation16 + $0x7f]]
    %v3447 = vstv %s3446
    %v3448 = vmul.f32 %v3447, %v3288
    %v3449 = vmul.f32 %v3447, %v3289
    %v3452 = vrot.slane %v3448, 6
    %v3453 = vrot.slane %v3449, 6
    %v3456 = vadd.f32 %v3408, %v3452
    %v3457 = vadd.f32 %v3409, %v3453
    %3458 = vrot.lane.b32.xlu0 %v2054, 111
    %v3459 = vpop.permute.xlu0 %3458
    %3460 = vrot.lane.b32.xlu0 %v2055, 111
    %v3461 = vpop.permute.xlu0 %3460
    %v3462 = vsel %vm1630, %v3459, %v3461
    %v3463 = vsel %vm1630, %v3461, %v3459
    %v3464 = vmul.f32 %v3462, %v1636
    %v3465 = vmul.f32 %v3463, %v1640
    %s3466 = sld [smem:[#allocation16 + $0x80]]
    %v3467 = vstv %s3466
    %v3468 = vmul.f32 %v3467, %v3464
    %v3469 = vmul.f32 %v3467, %v3465
    %v3470 = vadd.f32 %v3420, %v3468
    %v3471 = vadd.f32 %v3421, %v3469
    %s3472 = sld [smem:[#allocation16 + $0x81]]
    %v3473 = vstv %s3472
    %v3474 = vmul.f32 %v3473, %v3464
    %v3475 = vmul.f32 %v3473, %v3465
    %v3476 = vadd.f32 %v3432, %v3474
    %v3477 = vadd.f32 %v3433, %v3475
    %s3478 = sld [smem:[#allocation16 + $0x82]]
    %v3479 = vstv %s3478
    %v3480 = vmul.f32 %v3479, %v3464
    %v3481 = vmul.f32 %v3479, %v3465
    %v3482 = vadd.f32 %v3444, %v3480
    %v3483 = vadd.f32 %v3445, %v3481
    %s3484 = sld [smem:[#allocation16 + $0x83]]
    %v3485 = vstv %s3484
    %v3486 = vmul.f32 %v3485, %v3464
    %v3487 = vmul.f32 %v3485, %v3465
    %v3488 = vadd.f32 %v3456, %v3486
    %v3489 = vadd.f32 %v3457, %v3487
    %s3490 = sld [smem:[#allocation16 + $0x84]]
    %v3491 = vstv %s3490
    %v3492 = vmul.f32 %v3491, %v3464
    %v3493 = vmul.f32 %v3491, %v3465
    %v3496 = vrot.slane %v3492, 2
    %v3497 = vrot.slane %v3493, 2
    %v3500 = vadd.f32 %v3470, %v3496
    %v3501 = vadd.f32 %v3471, %v3497
    %s3502 = sld [smem:[#allocation16 + $0x85]]
    %v3503 = vstv %s3502
    %v3504 = vmul.f32 %v3503, %v3464
    %v3505 = vmul.f32 %v3503, %v3465
    %v3508 = vrot.slane %v3504, 2
    %v3509 = vrot.slane %v3505, 2
    %v3512 = vadd.f32 %v3476, %v3508
    %v3513 = vadd.f32 %v3477, %v3509
    %s3514 = sld [smem:[#allocation16 + $0x86]]
    %v3515 = vstv %s3514
    %v3516 = vmul.f32 %v3515, %v3464
    %v3517 = vmul.f32 %v3515, %v3465
    %v3520 = vrot.slane %v3516, 2
    %v3521 = vrot.slane %v3517, 2
    %v3524 = vadd.f32 %v3482, %v3520
    %v3525 = vadd.f32 %v3483, %v3521
    %s3526 = sld [smem:[#allocation16 + $0x87]]
    %v3527 = vstv %s3526
    %v3528 = vmul.f32 %v3527, %v3464
    %v3529 = vmul.f32 %v3527, %v3465
    %v3532 = vrot.slane %v3528, 2
    %v3533 = vrot.slane %v3529, 2
    %v3536 = vadd.f32 %v3488, %v3532
    %v3537 = vadd.f32 %v3489, %v3533
    %s3538 = sld [smem:[#allocation16 + $0x88]]
    %v3539 = vstv %s3538
    %v3540 = vmul.f32 %v3539, %v3464
    %v3541 = vmul.f32 %v3539, %v3465
    %v3544 = vrot.slane %v3540, 4
    %v3545 = vrot.slane %v3541, 4
    %v3548 = vadd.f32 %v3500, %v3544
    %v3549 = vadd.f32 %v3501, %v3545
    %s3550 = sld [smem:[#allocation16 + $0x89]]
    %v3551 = vstv %s3550
    %v3552 = vmul.f32 %v3551, %v3464
    %v3553 = vmul.f32 %v3551, %v3465
    %v3556 = vrot.slane %v3552, 4
    %v3557 = vrot.slane %v3553, 4
    %v3560 = vadd.f32 %v3512, %v3556
    %v3561 = vadd.f32 %v3513, %v3557
    %s3562 = sld [smem:[#allocation16 + $0x8a]]
    %v3563 = vstv %s3562
    %v3564 = vmul.f32 %v3563, %v3464
    %v3565 = vmul.f32 %v3563, %v3465
    %v3568 = vrot.slane %v3564, 4
    %v3569 = vrot.slane %v3565, 4
    %v3572 = vadd.f32 %v3524, %v3568
    %v3573 = vadd.f32 %v3525, %v3569
    %s3574 = sld [smem:[#allocation16 + $0x8b]]
    %v3575 = vstv %s3574
    %v3576 = vmul.f32 %v3575, %v3464
    %v3577 = vmul.f32 %v3575, %v3465
    %v3580 = vrot.slane %v3576, 4
    %v3581 = vrot.slane %v3577, 4
    %v3584 = vadd.f32 %v3536, %v3580
    %v3585 = vadd.f32 %v3537, %v3581
    %s3586 = sld [smem:[#allocation16 + $0x8c]]
    %v3587 = vstv %s3586
    %v3588 = vmul.f32 %v3587, %v3464
    %v3589 = vmul.f32 %v3587, %v3465
    %v3592 = vrot.slane %v3588, 6
    %v3593 = vrot.slane %v3589, 6
    %v3596 = vadd.f32 %v3548, %v3592
    %v3597 = vadd.f32 %v3549, %v3593
    %s3598 = sld [smem:[#allocation16 + $0x8d]]
    %v3599 = vstv %s3598
    %v3600 = vmul.f32 %v3599, %v3464
    %v3601 = vmul.f32 %v3599, %v3465
    %v3604 = vrot.slane %v3600, 6
    %v3605 = vrot.slane %v3601, 6
    %v3608 = vadd.f32 %v3560, %v3604
    %v3609 = vadd.f32 %v3561, %v3605
    %s3610 = sld [smem:[#allocation16 + $0x8e]]
    %v3611 = vstv %s3610
    %v3612 = vmul.f32 %v3611, %v3464
    %v3613 = vmul.f32 %v3611, %v3465
    %v3616 = vrot.slane %v3612, 6
    %v3617 = vrot.slane %v3613, 6
    %v3620 = vadd.f32 %v3572, %v3616
    %v3621 = vadd.f32 %v3573, %v3617
    %s3622 = sld [smem:[#allocation16 + $0x8f]]
    %v3623 = vstv %s3622
    %v3624 = vmul.f32 %v3623, %v3464
    %v3625 = vmul.f32 %v3623, %v3465
    %v3628 = vrot.slane %v3624, 6
    %v3629 = vrot.slane %v3625, 6
    %v3632 = vadd.f32 %v3584, %v3628
    %v3633 = vadd.f32 %v3585, %v3629
    %s3634 = sld [smem:[#allocation17]]
    %v3635 = vstv %s3634
    %v3636 = vadd.f32 %v3596, %v3635
    %v3637 = vadd.f32 %v3597, %v3635
    %s3638 = sld [smem:[#allocation17 + $0x1]]
    %v3639 = vstv %s3638
    %v3640 = vadd.f32 %v3608, %v3639
    %v3641 = vadd.f32 %v3609, %v3639
    %s3642 = sld [smem:[#allocation17 + $0x2]]
    %v3643 = vstv %s3642
    %v3644 = vadd.f32 %v3620, %v3643
    %v3645 = vadd.f32 %v3621, %v3643
    %s3646 = sld [smem:[#allocation17 + $0x3]]
    %v3647 = vstv %s3646
    %v3648 = vadd.f32 %v3632, %v3647
    %v3649 = vadd.f32 %v3633, %v3647
    %s3650 = sld [smem:[#allocation3]]
    %v3651 = vstv %s3650
    %v3652 = vadd.f32 %v3651, 0.0
    %s3653 = sld [smem:[#allocation19]]
    %v3654 = vstv %s3653
    %v3655 = vmul.f32 %v3654, %v3636
    %v3656 = vmul.f32 %v3654, %v3637
    %v3657 = vadd.f32 %v3652, %v3655
    %v3658 = vadd.f32 %v3652, %v3656
    %s3659 = sld [smem:[#allocation19 + $0x1]]
    %v3660 = vstv %s3659
    %v3661 = vmul.f32 %v3660, %v3640
    %v3662 = vmul.f32 %v3660, %v3641
    %v3663 = vadd.f32 %v3657, %v3661
    %v3664 = vadd.f32 %v3658, %v3662
    %s3665 = sld [smem:[#allocation19 + $0x2]]
    %v3666 = vstv %s3665
    %v3667 = vmul.f32 %v3666, %v3644
    %v3668 = vmul.f32 %v3666, %v3645
    %v3669 = vadd.f32 %v3663, %v3667
    %v3670 = vadd.f32 %v3664, %v3668
    %s3671 = sld [smem:[#allocation19 + $0x3]]
    %v3672 = vstv %s3671
    %v3673 = vmul.f32 %v3672, %v3648
    %v3674 = vmul.f32 %v3672, %v3649
    %v3675 = vadd.f32 %v3669, %v3673
    %v3676 = vadd.f32 %v3670, %v3674
    %v3677 = vxor.u32 %v3675, 2147483648
    %v3678 = vxor.u32 %v3676, 2147483648
    %v3679 = vmul.f32 %v3677, 1.442695
    %v3680 = vpow.pop %v3679
    %v3681 = vmul.f32 %v3678, 1.442695
    %v3682 = vpow.pop %v3681
    %v3683 = vadd.f32 %v3680, 1.0
    %v3684 = vadd.f32 %v3682, 1.0
    %v3685 = vrcp.pop %v3683
    %v3686 = vmul.f32 1.0, %v3685
    %v3687 = vrcp.pop %v3684
    %v3688 = vmul.f32 1.0, %v3687
    %v3689 = vmul.f32 %v3636, %v3686
    %v3690 = vmul.f32 %v3637, %v3688
    %v3691 = vadd.f32 %v145, %v3689
    %v3692 = vadd.f32 %v146, %v3690
    %3693 = vst [vmem:[#allocation20] sm:$0x3] %v3691
    %3694 = vst [vmem:[#allocation20 + $0x8] sm:$0x3] %v3692
    %v3695 = vmul.f32 %v3640, %v3686
    %v3696 = vmul.f32 %v3641, %v3688
    %v3699 = vrot.slane %v3695, 6
    %v3700 = vrot.slane %v3696, 6
    %v3703 = vadd.f32 %v145, %v3699
    %v3704 = vadd.f32 %v146, %v3700
    %3705 = vst [vmem:[#allocation20] sm:$0xc] %v3703
    %3706 = vst [vmem:[#allocation20 + $0x8] sm:$0xc] %v3704
    %v3707 = vmul.f32 %v3644, %v3686
    %v3708 = vmul.f32 %v3645, %v3688
    %v3711 = vrot.slane %v3707, 4
    %v3712 = vrot.slane %v3708, 4
    %v3715 = vadd.f32 %v145, %v3711
    %v3716 = vadd.f32 %v146, %v3712
    %3717 = vst [vmem:[#allocation20] sm:$0x30] %v3715
    %3718 = vst [vmem:[#allocation20 + $0x8] sm:$0x30] %v3716
    %v3719 = vmul.f32 %v3648, %v3686
    %v3720 = vmul.f32 %v3649, %v3688
    %v3723 = vrot.slane %v3719, 2
    %v3724 = vrot.slane %v3720, 2
    %v3727 = vadd.f32 %v145, %v3723
    %v3728 = vadd.f32 %v146, %v3724
    %3729 = vst [vmem:[#allocation20] sm:$0xc0] %v3727
    %3730 = vst [vmem:[#allocation20 + $0x8] sm:$0xc0] %v3728
    // Predicated region
    $region78: #{tpu_custom_call.1} parent=1 // pred_check
      _
    $region79: #{tpu_custom_call.1} parent=1 // pred_check_branch
      %3732 = sbr.rel (0) target = $region81
    $region80: #{tpu_custom_call.1} parent=1 // pred_region
      %s3734 = ssub.s32 256, 256
      %3735 = vsyncadd [#allocation6], %s3734
      %s3737 = sshll.u32 [#allocation20], 4
      %s3738 = int_to_ptr.vmem [resolvable:$true] %s3737
      %3740 = dma.vmem_to_hbm [thread:$0]  %s3738, 256, %s10, [#allocation6]
    $region81: #{tpu_custom_call.1} parent=1 // pred_fallthru
      _
    // Predicated region
    $region82: #{tpu_custom_call.1} parent=1 // pred_check
      _
    $region83: #{tpu_custom_call.1} parent=1 // pred_check_branch
      %3742 = sbr.rel (0) target = $region85
    $region84: #{tpu_custom_call.1} parent=1 // pred_region
      %3743 = dma.done [#allocation6], 256
    $region85: #{tpu_custom_call.1} parent=1 // pred_fallthru
      _
    %3744 = vsyncpa [#allocation5], 1
    %3745 = vsyncpa [#allocation9], 1
    %3746 = vsyncpa [#allocation6], 1
    %3747 = vsyncpa [#allocation7], 1
    %3748 = vsyncpa [#allocation12], 1
    %3749 = vsyncpa [#allocation15], 1
    %3750 = vsyncpa [#allocation18], 1

</llo_original>
